<compile_context>
chip_gen: v7x
topology: tpu7x:2x2x1
jax: 0.10.0
libtpu: 0.0.40
codegen_flags: <defaults>
</compile_context>

<pallas_src>
import jax
import jax.numpy as jnp
from jax.experimental import pallas as pl
from jax.experimental.pallas import tpu as pltpu

EPS = 1e-5


# ------------------------------ Pallas kernel ------------------------------ #

def _bottleneck_kernel(x_ref, w1_ref, bn1_ref, w2_ref, bn2_ref, w3_ref, bn3_ref,
                       o_ref, h1_ref):
    """Fused Bottleneck forward for one block of images.

    x_ref  : (B, H, W, Cp)      bf16  input (channels zero-padded to Cp)
    w1_ref : (Cp, Pp)           bf16  1x1 conv1 weights
    bn1_ref: (2, Pp)            f32   row 0 = bn1 scale, row 1 = bn1 shift
    w2_ref : (3, 3*Pp, Pp)      bf16  3x3 conv2, dx-stacked: [dy][dx*Pp+cin, cout]
    bn2_ref: (2, Pp)            f32
    w3_ref : (Pp, Cp)           bf16  1x1 conv3 weights
    bn3_ref: (2, Cp)            f32
    o_ref  : (B, H, W, Cp)      bf16  output
    h1_ref : (B, H+2, W, 3*Pp)  bf16  scratch: stage-1 activation with its
                                      column-shifted copies lane-stacked and a
                                      1-row dy halo (rows 0 and H+1 are zero).
    """
    b, h, w, cp = x_ref.shape
    pp = w1_ref.shape[1]
    rows = b * h * w

    # ---- Stage 1: 1x1 conv + BN + ReLU (BN scale/shift applied in f32) ----
    x_bf = x_ref[...].reshape(rows, cp)                       # bf16
    y1 = jnp.dot(x_bf, w1_ref[...], preferred_element_type=jnp.float32)
    y1 = jnp.maximum(y1 * bn1_ref[0:1, :] + bn1_ref[1:2, :], 0.0)
    y1b = y1.astype(jnp.bfloat16).reshape(b, h, w, pp)        # cast ONCE to bf16

    # Store into the dx-stacked halo scratch:
    #   lanes [Pp:2Pp]   <- column x      (aligned full-width store)
    #   lanes [0:Pp]     <- column x-1    (zero col 0, +1-shifted store)
    #   lanes [2Pp:3Pp]  <- column x+1    (-1-shifted store, zero col W-1)
    zcol = jnp.zeros((b, h, 1, pp), jnp.bfloat16)
    zrow = jnp.zeros((b, 1, w, 3 * pp), jnp.bfloat16)
    h1_ref[:, 0:1, :, :] = zrow                               # dy = -1 halo row
    h1_ref[:, h + 1:h + 2, :, :] = zrow                       # dy = +1 halo row
    h1_ref[:, 1:h + 1, :, pp:2 * pp] = y1b
    h1_ref[:, 1:h + 1, 0:1, 0:pp] = zcol
    h1_ref[:, 1:h + 1, 1:w, 0:pp] = y1b[:, :, 0:w - 1, :]
    h1_ref[:, 1:h + 1, 0:w - 1, 2 * pp:3 * pp] = y1b[:, :, 1:w, :]
    h1_ref[:, 1:h + 1, w - 1:w, 2 * pp:3 * pp] = zcol

    # ---- Stage 2: 3x3 conv (pad=1) as 3 matmuls with K = 3*Pp (dx stacked) ----
    # dy slices are along the non-sublane row axis -> aligned, lane-dense loads.
    acc = jnp.dot(h1_ref[:, 0:h, :, :].reshape(rows, 3 * pp), w2_ref[0],
                  preferred_element_type=jnp.float32)
    acc += jnp.dot(h1_ref[:, 1:h + 1, :, :].reshape(rows, 3 * pp), w2_ref[1],
                   preferred_element_type=jnp.float32)
    acc += jnp.dot(h1_ref[:, 2:h + 2, :, :].reshape(rows, 3 * pp), w2_ref[2],
                   preferred_element_type=jnp.float32)
    y2 = jnp.maximum(acc * bn2_ref[0:1, :] + bn2_ref[1:2, :], 0.0)
    y2 = y2.astype(jnp.bfloat16)

    # ---- Stage 3: 1x1 conv + BN + residual add + ReLU ----
    y3 = jnp.dot(y2, w3_ref[...], preferred_element_type=jnp.float32)
    y3 = y3 * bn3_ref[0:1, :] + bn3_ref[1:2, :]
    y3 = y3 + x_ref[...].reshape(rows, cp).astype(jnp.float32)   # residual (re-read x)
    y3 = jnp.maximum(y3, 0.0)
    o_ref[...] = y3.reshape(b, h, w, cp).astype(o_ref.dtype)


# ------------------------------- host wrapper ------------------------------ #

def _round_up(x, m):
    return (x + m - 1) // m * m


def _pad_axis(a, axis, target):
    pad = target - a.shape[axis]
    if pad == 0:
        return a
    widths = [(0, 0)] * a.ndim
    widths[axis] = (0, pad)
    return jnp.pad(a, widths)


def _fold_bn(gamma, beta, mean, var, eps=EPS):
    scale = gamma / jnp.sqrt(var + eps)
    return scale, beta - mean * scale


def _pick_batch_block(n, hw):
    """Images per grid step: >=256 matmul rows to fill the MXU, while keeping
    >=2 grid steps when possible so both v7x TensorCores get work."""
    target = max(1, -(-256 // hw))
    best = 1
    for cand in range(1, n + 1):
        if n % cand == 0 and cand <= target and n // cand >= min(2, n):
            best = cand
    return best


def bottleneck_forward(x_nchw, p, b_blk=None):
    """Forward pass equivalent to torch Bottleneck (stride=1, downsample=None)."""
    n, cin, h, w = x_nchw.shape
    planes = p["w1"].shape[0]
    c3 = planes * 4
    assert c3 == cin, "residual add requires planes*4 == inplanes when downsample=None"

    # Lane-dense channel padding (no-op for real ResNet channel counts >= 128).
    cp = _round_up(cin, 128)        # input == output channels (residual)
    pp = _round_up(planes, 128)     # bottleneck width

    # Per-channel BN scale/shift, applied in f32 inside the kernel epilogues.
    s1, sh1 = _fold_bn(p["g1"], p["b1"], p["m1"], p["v1"])
    s2, sh2 = _fold_bn(p["g2"], p["b2"], p["m2"], p["v2"])
    s3, sh3 = _fold_bn(p["g3"], p["b3"], p["m3"], p["v3"])
    bn1 = _pad_axis(jnp.stack([s1, sh1]), 1, pp).astype(jnp.float32)   # (2, Pp)
    bn2 = _pad_axis(jnp.stack([s2, sh2]), 1, pp).astype(jnp.float32)   # (2, Pp)
    bn3 = _pad_axis(jnp.stack([s3, sh3]), 1, cp).astype(jnp.float32)   # (2, Cp)

    # Conv weights in matmul form, raw bf16 (BN scale NOT folded in).
    w1 = p["w1"][:, :, 0, 0].T                                  # (Cin, P)
    w3 = p["w3"][:, :, 0, 0].T                                  # (P, C3)
    w2 = jnp.transpose(p["w2"], (2, 3, 1, 0))                   # (kh, kw, cin, cout)

    w1p = _pad_axis(_pad_axis(w1, 0, cp), 1, pp).astype(jnp.bfloat16)   # (Cp, Pp)
    w3p = _pad_axis(_pad_axis(w3, 0, pp), 1, cp).astype(jnp.bfloat16)   # (Pp, Cp)
    w2p = _pad_axis(_pad_axis(w2, 2, pp), 3, pp)                        # (3, 3, Pp, Pp)
    w2p = w2p.reshape(3, 3 * pp, pp).astype(jnp.bfloat16)      # [dy][dx*Pp+cin, cout]

    # NCHW -> NHWC in bf16 (halves transpose + kernel DMA traffic), zero-pad
    # channels.  Padded lanes stay exactly zero through every stage (zero
    # weights / scale / shift / residual + ReLU), so slicing them off is exact.
    x_nhwc = jnp.transpose(x_nchw.astype(jnp.bfloat16), (0, 2, 3, 1))
    x_p = _pad_axis(x_nhwc, 3, cp)

    if b_blk is None:
        b_blk = _pick_batch_block(n, h * w)
    assert n % b_blk == 0
    grid = (n // b_blk,)

    out_p = pl.pallas_call(
        _bottleneck_kernel,
        out_shape=jax.ShapeDtypeStruct((n, h, w, cp), jnp.bfloat16),
        grid=grid,
        in_specs=[
            pl.BlockSpec((b_blk, h, w, cp), lambda i: (i, 0, 0, 0)),  # x (bf16)
            pl.BlockSpec((cp, pp), lambda i: (0, 0)),                 # w1
            pl.BlockSpec((2, pp), lambda i: (0, 0)),                  # bn1 scale/shift
            pl.BlockSpec((3, 3 * pp, pp), lambda i: (0, 0, 0)),       # w2 (dx-stacked)
            pl.BlockSpec((2, pp), lambda i: (0, 0)),                  # bn2
            pl.BlockSpec((pp, cp), lambda i: (0, 0)),                 # w3
            pl.BlockSpec((2, cp), lambda i: (0, 0)),                  # bn3
        ],
        out_specs=pl.BlockSpec((b_blk, h, w, cp), lambda i: (i, 0, 0, 0)),
        scratch_shapes=[pltpu.VMEM((b_blk, h + 2, w, 3 * pp), jnp.bfloat16)],
        compiler_params=pltpu.CompilerParams(
            dimension_semantics=("parallel",),        # batch steps across TCs (v7x)
            vmem_limit_bytes=32 * 1024 * 1024,        # explicit; > v5e's 16 MiB default
        ),
    )(x_p, w1p, bn1, w2p, bn2, w3p, bn3)

    out = jnp.transpose(out_p[..., :c3], (0, 3, 1, 2))          # back to NCHW
    return out.astype(jnp.float32)


# ------------------------------ reference impl ----------------------------- #

def bottleneck_reference(x_nchw, p):
    dn = ("NCHW", "OIHW", "NCHW")

    def conv(x, w, pad=0):
        return jax.lax.conv_general_dilated(
            x, w, (1, 1), [(pad, pad), (pad, pad)], dimension_numbers=dn,
            precision=jax.lax.Precision.HIGHEST)

    def bn(x, g, b, mu, var):
        rs = lambda a: a.reshape(1, -1, 1, 1)
        return (x - rs(mu)) / jnp.sqrt(rs(var) + EPS) * rs(g) + rs(b)

    out = jax.nn.relu(bn(conv(x_nchw, p["w1"]), p["g1"], p["b1"], p["m1"], p["v1"]))
    out = jax.nn.relu(bn(conv(out, p["w2"], pad=1), p["g2"], p["b2"], p["m2"], p["v2"]))
    out = bn(conv(out, p["w3"]), p["g3"], p["b3"], p["m3"], p["v3"])
    return jax.nn.relu(out + x_nchw)


# ----------------------------------- main ----------------------------------- #

if __name__ == "__main__":
    inplanes, planes = 16, 4          # inplanes == planes * expansion -> clean residual
    N, H, W = 2, 16, 16

    key = jax.random.PRNGKey(0)
    ks = jax.random.split(key, 16)

    def bn_params(k, c):
        k1, k2, k3, k4 = jax.random.split(k, 4)
        return dict(
            g=jax.random.uniform(k1, (c,), jnp.float32, 0.5, 1.5),
            b=jax.random.normal(k2, (c,), jnp.float32) * 0.1,
            m=jax.random.normal(k3, (c,), jnp.float32) * 0.1,
            v=jax.random.uniform(k4, (c,), jnp.float32, 0.5, 1.5),
        )

    bn1 = bn_params(ks[3], planes)
    bn2 = bn_params(ks[4], planes)
    bn3 = bn_params(ks[5], planes * 4)

    params = {
        "w1": jax.random.normal(ks[0], (planes, inplanes, 1, 1), jnp.float32)
              / jnp.sqrt(float(inplanes)),
        "w2": jax.random.normal(ks[1], (planes, planes, 3, 3), jnp.float32)
              / jnp.sqrt(float(9 * planes)),
        "w3": jax.random.normal(ks[2], (planes * 4, planes, 1, 1), jnp.float32)
              / jnp.sqrt(float(planes)),
        "g1": bn1["g"], "b1": bn1["b"], "m1": bn1["m"], "v1": bn1["v"],
        "g2": bn2["g"], "b2": bn2["b"], "m2": bn2["m"], "v2": bn2["v"],
        "g3": bn3["g"], "b3": bn3["b"], "m3": bn3["m"], "v3": bn3["v"],
    }

    x = jax.random.normal(ks[6], (N, inplanes, H, W), jnp.float32)

    out = jax.block_until_ready(bottleneck_forward(x, params))
    ref = jax.block_until_ready(bottleneck_reference(x, params))

    assert out.shape == (N, inplanes, H, W), out.shape
    # bf16 I/O + bf16 MXU inputs with f32 accumulation / f32 BN-residual
    # epilogues: errors compound to ~1% of the activation scale.
    scale = float(jnp.max(jnp.abs(ref)))
    err = float(jnp.max(jnp.abs(out - ref)))
    assert err <= 2e-2 * scale + 1e-3, (err, scale)

    print("KERNEL_OK")
</pallas_src>

<mosaic_0001>
module attributes {stable_mosaic.version = 11 : i64} {
  func.func @_bottleneck_kernel(%arg0: i32, %arg1: memref<1x16x16x128xbf16, #tpu.memory_space<vmem>>, %arg2: memref<128x128xbf16, #tpu.memory_space<vmem>>, %arg3: memref<2x128xf32, #tpu.memory_space<vmem>>, %arg4: memref<3x384x128xbf16, #tpu.memory_space<vmem>>, %arg5: memref<2x128xf32, #tpu.memory_space<vmem>>, %arg6: memref<128x128xbf16, #tpu.memory_space<vmem>>, %arg7: memref<2x128xf32, #tpu.memory_space<vmem>>, %arg8: memref<1x16x16x128xbf16, #tpu.memory_space<vmem>>, %arg9: memref<1x18x16x384xbf16, #tpu.memory_space<vmem>>) attributes {dimension_semantics = [#tpu.dimension_semantics<parallel>], iteration_bounds = array<i64: 2>, scalar_prefetch = 0 : i64, scratch_operands = 1 : i64, tpu.core_type = #tpu.core_type<tc>, window_params = [{transform_indices = @transform_0, window_bounds = array<i64: 1, 16, 16, 128>}, {pipeline_mode = #tpu.pipeline_mode<synchronous>, transform_indices = @transform_1, window_bounds = array<i64: 128, 128>}, {pipeline_mode = #tpu.pipeline_mode<synchronous>, transform_indices = @transform_2, window_bounds = array<i64: 2, 128>}, {pipeline_mode = #tpu.pipeline_mode<synchronous>, transform_indices = @transform_3, window_bounds = array<i64: 3, 384, 128>}, {pipeline_mode = #tpu.pipeline_mode<synchronous>, transform_indices = @transform_4, window_bounds = array<i64: 2, 128>}, {pipeline_mode = #tpu.pipeline_mode<synchronous>, transform_indices = @transform_5, window_bounds = array<i64: 128, 128>}, {pipeline_mode = #tpu.pipeline_mode<synchronous>, transform_indices = @transform_6, window_bounds = array<i64: 2, 128>}, {transform_indices = @transform_7, window_bounds = array<i64: 1, 16, 16, 128>}]} {
    %c0 = arith.constant 0 : index
    %c0_0 = arith.constant 0 : index
    %c0_1 = arith.constant 0 : index
    %c0_2 = arith.constant 0 : index
    %0 = vector.load %arg1[%c0, %c0_0, %c0_1, %c0_2] : memref<1x16x16x128xbf16, #tpu.memory_space<vmem>>, vector<1x16x16x128xbf16>
    %1 = vector.shape_cast %0 : vector<1x16x16x128xbf16> to vector<256x128xbf16>
    %c0_3 = arith.constant 0 : index
    %c0_4 = arith.constant 0 : index
    %2 = vector.load %arg2[%c0_3, %c0_4] : memref<128x128xbf16, #tpu.memory_space<vmem>>, vector<128x128xbf16>
    %cst = arith.constant dense<0.000000e+00> : vector<256x128xf32>
    %3 = tpu.matmul %1, %2, %cst {dimension_numbers = #tpu.dot_dimension_numbers<[1], [0], [0], [1], [0, 0, 1, 1], [], []>} : vector<256x128xbf16>, vector<128x128xbf16>, vector<256x128xf32> -> vector<256x128xf32>
    %c0_5 = arith.constant 0 : index
    %c0_6 = arith.constant 0 : index
    %4 = vector.load %arg3[%c0_5, %c0_6] : memref<2x128xf32, #tpu.memory_space<vmem>>, vector<1x128xf32>
    %5 = vector.broadcast %4 : vector<1x128xf32> to vector<256x128xf32>
    %6 = arith.mulf %3, %5 : vector<256x128xf32>
    %c1 = arith.constant 1 : index
    %c0_7 = arith.constant 0 : index
    %7 = vector.load %arg3[%c1, %c0_7] : memref<2x128xf32, #tpu.memory_space<vmem>>, vector<1x128xf32>
    %8 = vector.broadcast %7 : vector<1x128xf32> to vector<256x128xf32>
    %9 = arith.addf %6, %8 : vector<256x128xf32>
    %cst_8 = arith.constant 0.000000e+00 : f32
    %10 = vector.broadcast %cst_8 : f32 to vector<256x128xf32>
    %11 = arith.maximumf %9, %10 : vector<256x128xf32>
    %12 = arith.truncf %11 : vector<256x128xf32> to vector<256x128xbf16>
    %13 = vector.shape_cast %12 : vector<256x128xbf16> to vector<1x16x16x128xbf16>
    %cst_9 = arith.constant 0.000000e+00 : bf16
    %14 = vector.broadcast %cst_9 : bf16 to vector<1x16x1x128xbf16>
    %cst_10 = arith.constant 0.000000e+00 : bf16
    %15 = vector.broadcast %cst_10 : bf16 to vector<1x1x16x384xbf16>
    %c0_11 = arith.constant 0 : index
    %c0_12 = arith.constant 0 : index
    %c0_13 = arith.constant 0 : index
    %c0_14 = arith.constant 0 : index
    %16 = vector.load %arg9[%c0_11, %c0_12, %c0_13, %c0_14] : memref<1x18x16x384xbf16, #tpu.memory_space<vmem>>, vector<1x1x16x384xbf16>
    tpu.vector_store %arg9[%c0_11, %c0_12, %c0_13, %c0_14], %15 {strides = array<i32>} : memref<1x18x16x384xbf16, #tpu.memory_space<vmem>>, vector<1x1x16x384xbf16>,
    %c0_15 = arith.constant 0 : index
    %c17 = arith.constant 17 : index
    %c0_16 = arith.constant 0 : index
    %c0_17 = arith.constant 0 : index
    %17 = vector.load %arg9[%c0_15, %c17, %c0_16, %c0_17] : memref<1x18x16x384xbf16, #tpu.memory_space<vmem>>, vector<1x1x16x384xbf16>
    tpu.vector_store %arg9[%c0_15, %c17, %c0_16, %c0_17], %15 {strides = array<i32>} : memref<1x18x16x384xbf16, #tpu.memory_space<vmem>>, vector<1x1x16x384xbf16>,
    %c0_18 = arith.constant 0 : index
    %c1_19 = arith.constant 1 : index
    %c0_20 = arith.constant 0 : index
    %c128 = arith.constant 128 : index
    %18 = vector.load %arg9[%c0_18, %c1_19, %c0_20, %c128] : memref<1x18x16x384xbf16, #tpu.memory_space<vmem>>, vector<1x16x16x128xbf16>
    tpu.vector_store %arg9[%c0_18, %c1_19, %c0_20, %c128], %13 {strides = array<i32>} : memref<1x18x16x384xbf16, #tpu.memory_space<vmem>>, vector<1x16x16x128xbf16>,
    %c0_21 = arith.constant 0 : index
    %c1_22 = arith.constant 1 : index
    %c0_23 = arith.constant 0 : index
    %c0_24 = arith.constant 0 : index
    %19 = vector.load %arg9[%c0_21, %c1_22, %c0_23, %c0_24] : memref<1x18x16x384xbf16, #tpu.memory_space<vmem>>, vector<1x16x1x128xbf16>
    tpu.vector_store %arg9[%c0_21, %c1_22, %c0_23, %c0_24], %14 {strides = array<i32>} : memref<1x18x16x384xbf16, #tpu.memory_space<vmem>>, vector<1x16x1x128xbf16>,
    %20 = vector.extract_strided_slice %13 {offsets = [0, 0, 0, 0], sizes = [1, 16, 15, 128], strides = [1, 1, 1, 1]} : vector<1x16x16x128xbf16> to vector<1x16x15x128xbf16>
    %c0_25 = arith.constant 0 : index
    %c1_26 = arith.constant 1 : index
    %c1_27 = arith.constant 1 : index
    %c0_28 = arith.constant 0 : index
    %21 = vector.load %arg9[%c0_25, %c1_26, %c1_27, %c0_28] : memref<1x18x16x384xbf16, #tpu.memory_space<vmem>>, vector<1x16x15x128xbf16>
    tpu.vector_store %arg9[%c0_25, %c1_26, %c1_27, %c0_28], %20 {strides = array<i32>} : memref<1x18x16x384xbf16, #tpu.memory_space<vmem>>, vector<1x16x15x128xbf16>,
    %22 = vector.extract_strided_slice %13 {offsets = [0, 0, 1, 0], sizes = [1, 16, 15, 128], strides = [1, 1, 1, 1]} : vector<1x16x16x128xbf16> to vector<1x16x15x128xbf16>
    %c0_29 = arith.constant 0 : index
    %c1_30 = arith.constant 1 : index
    %c0_31 = arith.constant 0 : index
    %c256 = arith.constant 256 : index
    %23 = vector.load %arg9[%c0_29, %c1_30, %c0_31, %c256] : memref<1x18x16x384xbf16, #tpu.memory_space<vmem>>, vector<1x16x15x128xbf16>
    tpu.vector_store %arg9[%c0_29, %c1_30, %c0_31, %c256], %22 {strides = array<i32>} : memref<1x18x16x384xbf16, #tpu.memory_space<vmem>>, vector<1x16x15x128xbf16>,
    %c0_32 = arith.constant 0 : index
    %c1_33 = arith.constant 1 : index
    %c15 = arith.constant 15 : index
    %c256_34 = arith.constant 256 : index
    %24 = vector.load %arg9[%c0_32, %c1_33, %c15, %c256_34] : memref<1x18x16x384xbf16, #tpu.memory_space<vmem>>, vector<1x16x1x128xbf16>
    tpu.vector_store %arg9[%c0_32, %c1_33, %c15, %c256_34], %14 {strides = array<i32>} : memref<1x18x16x384xbf16, #tpu.memory_space<vmem>>, vector<1x16x1x128xbf16>,
    %c0_35 = arith.constant 0 : index
    %c0_36 = arith.constant 0 : index
    %c0_37 = arith.constant 0 : index
    %c0_38 = arith.constant 0 : index
    %25 = vector.load %arg9[%c0_35, %c0_36, %c0_37, %c0_38] : memref<1x18x16x384xbf16, #tpu.memory_space<vmem>>, vector<1x16x16x384xbf16>
    %26 = vector.shape_cast %25 : vector<1x16x16x384xbf16> to vector<256x384xbf16>
    %c0_39 = arith.constant 0 : index
    %c0_40 = arith.constant 0 : index
    %c0_41 = arith.constant 0 : index
    %27 = vector.load %arg4[%c0_39, %c0_40, %c0_41] : memref<3x384x128xbf16, #tpu.memory_space<vmem>>, vector<1x384x128xbf16>
    %28 = vector.shape_cast %27 : vector<1x384x128xbf16> to vector<384x128xbf16>
    %cst_42 = arith.constant dense<0.000000e+00> : vector<256x128xf32>
    %29 = tpu.matmul %26, %28, %cst_42 {dimension_numbers = #tpu.dot_dimension_numbers<[1], [0], [0], [1], [0, 0, 1, 1], [], []>} : vector<256x384xbf16>, vector<384x128xbf16>, vector<256x128xf32> -> vector<256x128xf32>
    %c0_43 = arith.constant 0 : index
    %c1_44 = arith.constant 1 : index
    %c0_45 = arith.constant 0 : index
    %c0_46 = arith.constant 0 : index
    %30 = vector.load %arg9[%c0_43, %c1_44, %c0_45, %c0_46] : memref<1x18x16x384xbf16, #tpu.memory_space<vmem>>, vector<1x16x16x384xbf16>
    %31 = vector.shape_cast %30 : vector<1x16x16x384xbf16> to vector<256x384xbf16>
    %c1_47 = arith.constant 1 : index
    %c0_48 = arith.constant 0 : index
    %c0_49 = arith.constant 0 : index
    %32 = vector.load %arg4[%c1_47, %c0_48, %c0_49] : memref<3x384x128xbf16, #tpu.memory_space<vmem>>, vector<1x384x128xbf16>
    %33 = vector.shape_cast %32 : vector<1x384x128xbf16> to vector<384x128xbf16>
    %cst_50 = arith.constant dense<0.000000e+00> : vector<256x128xf32>
    %34 = tpu.matmul %31, %33, %cst_50 {dimension_numbers = #tpu.dot_dimension_numbers<[1], [0], [0], [1], [0, 0, 1, 1], [], []>} : vector<256x384xbf16>, vector<384x128xbf16>, vector<256x128xf32> -> vector<256x128xf32>
    %35 = arith.addf %29, %34 : vector<256x128xf32>
    %c0_51 = arith.constant 0 : index
    %c2 = arith.constant 2 : index
    %c0_52 = arith.constant 0 : index
    %c0_53 = arith.constant 0 : index
    %36 = vector.load %arg9[%c0_51, %c2, %c0_52, %c0_53] : memref<1x18x16x384xbf16, #tpu.memory_space<vmem>>, vector<1x16x16x384xbf16>
    %37 = vector.shape_cast %36 : vector<1x16x16x384xbf16> to vector<256x384xbf16>
    %c2_54 = arith.constant 2 : index
    %c0_55 = arith.constant 0 : index
    %c0_56 = arith.constant 0 : index
    %38 = vector.load %arg4[%c2_54, %c0_55, %c0_56] : memref<3x384x128xbf16, #tpu.memory_space<vmem>>, vector<1x384x128xbf16>
    %39 = vector.shape_cast %38 : vector<1x384x128xbf16> to vector<384x128xbf16>
    %cst_57 = arith.constant dense<0.000000e+00> : vector<256x128xf32>
    %40 = tpu.matmul %37, %39, %cst_57 {dimension_numbers = #tpu.dot_dimension_numbers<[1], [0], [0], [1], [0, 0, 1, 1], [], []>} : vector<256x384xbf16>, vector<384x128xbf16>, vector<256x128xf32> -> vector<256x128xf32>
    %41 = arith.addf %35, %40 : vector<256x128xf32>
    %c0_58 = arith.constant 0 : index
    %c0_59 = arith.constant 0 : index
    %42 = vector.load %arg5[%c0_58, %c0_59] : memref<2x128xf32, #tpu.memory_space<vmem>>, vector<1x128xf32>
    %43 = vector.broadcast %42 : vector<1x128xf32> to vector<256x128xf32>
    %44 = arith.mulf %41, %43 : vector<256x128xf32>
    %c1_60 = arith.constant 1 : index
    %c0_61 = arith.constant 0 : index
    %45 = vector.load %arg5[%c1_60, %c0_61] : memref<2x128xf32, #tpu.memory_space<vmem>>, vector<1x128xf32>
    %46 = vector.broadcast %45 : vector<1x128xf32> to vector<256x128xf32>
    %47 = arith.addf %44, %46 : vector<256x128xf32>
    %cst_62 = arith.constant 0.000000e+00 : f32
    %48 = vector.broadcast %cst_62 : f32 to vector<256x128xf32>
    %49 = arith.maximumf %47, %48 : vector<256x128xf32>
    %50 = arith.truncf %49 : vector<256x128xf32> to vector<256x128xbf16>
    %c0_63 = arith.constant 0 : index
    %c0_64 = arith.constant 0 : index
    %51 = vector.load %arg6[%c0_63, %c0_64] : memref<128x128xbf16, #tpu.memory_space<vmem>>, vector<128x128xbf16>
    %cst_65 = arith.constant dense<0.000000e+00> : vector<256x128xf32>
    %52 = tpu.matmul %50, %51, %cst_65 {dimension_numbers = #tpu.dot_dimension_numbers<[1], [0], [0], [1], [0, 0, 1, 1], [], []>} : vector<256x128xbf16>, vector<128x128xbf16>, vector<256x128xf32> -> vector<256x128xf32>
    %c0_66 = arith.constant 0 : index
    %c0_67 = arith.constant 0 : index
    %53 = vector.load %arg7[%c0_66, %c0_67] : memref<2x128xf32, #tpu.memory_space<vmem>>, vector<1x128xf32>
    %54 = vector.broadcast %53 : vector<1x128xf32> to vector<256x128xf32>
    %55 = arith.mulf %52, %54 : vector<256x128xf32>
    %c1_68 = arith.constant 1 : index
    %c0_69 = arith.constant 0 : index
    %56 = vector.load %arg7[%c1_68, %c0_69] : memref<2x128xf32, #tpu.memory_space<vmem>>, vector<1x128xf32>
    %57 = vector.broadcast %56 : vector<1x128xf32> to vector<256x128xf32>
    %58 = arith.addf %55, %57 : vector<256x128xf32>
    %c0_70 = arith.constant 0 : index
    %c0_71 = arith.constant 0 : index
    %c0_72 = arith.constant 0 : index
    %c0_73 = arith.constant 0 : index
    %59 = vector.load %arg1[%c0_70, %c0_71, %c0_72, %c0_73] : memref<1x16x16x128xbf16, #tpu.memory_space<vmem>>, vector<1x16x16x128xbf16>
    %60 = vector.shape_cast %59 : vector<1x16x16x128xbf16> to vector<256x128xbf16>
    %61 = arith.extf %60 : vector<256x128xbf16> to vector<256x128xf32>
    %62 = arith.addf %58, %61 : vector<256x128xf32>
    %cst_74 = arith.constant 0.000000e+00 : f32
    %63 = vector.broadcast %cst_74 : f32 to vector<256x128xf32>
    %64 = arith.maximumf %62, %63 : vector<256x128xf32>
    %65 = vector.shape_cast %64 : vector<256x128xf32> to vector<1x16x16x128xf32>
    %66 = arith.truncf %65 : vector<1x16x16x128xf32> to vector<1x16x16x128xbf16>
    %c0_75 = arith.constant 0 : index
    %c0_76 = arith.constant 0 : index
    %c0_77 = arith.constant 0 : index
    %c0_78 = arith.constant 0 : index
    %67 = vector.load %arg8[%c0_75, %c0_76, %c0_77, %c0_78] : memref<1x16x16x128xbf16, #tpu.memory_space<vmem>>, vector<1x16x16x128xbf16>
    tpu.vector_store %arg8[%c0_75, %c0_76, %c0_77, %c0_78], %66 {strides = array<i32>} : memref<1x16x16x128xbf16, #tpu.memory_space<vmem>>, vector<1x16x16x128xbf16>,
    return
  }
  func.func @transform_0(%arg0: i32) -> (i32, i32, i32, i32) {
    %c0_i32 = arith.constant 0 : i32
    %c0_i32_0 = arith.constant 0 : i32
    %c0_i32_1 = arith.constant 0 : i32
    %c0_i32_2 = arith.constant 0 : i32
    return %arg0, %c0_i32, %c0_i32_0, %c0_i32_1 : i32, i32, i32, i32
  }
  func.func @transform_1(%arg0: i32) -> (i32, i32) {
    %c0_i32 = arith.constant 0 : i32
    %c0_i32_0 = arith.constant 0 : i32
    %c0_i32_1 = arith.constant 0 : i32
    return %c0_i32, %c0_i32_0 : i32, i32
  }
  func.func @transform_2(%arg0: i32) -> (i32, i32) {
    %c0_i32 = arith.constant 0 : i32
    %c0_i32_0 = arith.constant 0 : i32
    %c0_i32_1 = arith.constant 0 : i32
    return %c0_i32, %c0_i32_0 : i32, i32
  }
  func.func @transform_3(%arg0: i32) -> (i32, i32, i32) {
    %c0_i32 = arith.constant 0 : i32
    %c0_i32_0 = arith.constant 0 : i32
    %c0_i32_1 = arith.constant 0 : i32
    %c0_i32_2 = arith.constant 0 : i32
    return %c0_i32, %c0_i32_0, %c0_i32_1 : i32, i32, i32
  }
  func.func @transform_4(%arg0: i32) -> (i32, i32) {
    %c0_i32 = arith.constant 0 : i32
    %c0_i32_0 = arith.constant 0 : i32
    %c0_i32_1 = arith.constant 0 : i32
    return %c0_i32, %c0_i32_0 : i32, i32
  }
  func.func @transform_5(%arg0: i32) -> (i32, i32) {
    %c0_i32 = arith.constant 0 : i32
    %c0_i32_0 = arith.constant 0 : i32
    %c0_i32_1 = arith.constant 0 : i32
    return %c0_i32, %c0_i32_0 : i32, i32
  }
  func.func @transform_6(%arg0: i32) -> (i32, i32) {
    %c0_i32 = arith.constant 0 : i32
    %c0_i32_0 = arith.constant 0 : i32
    %c0_i32_1 = arith.constant 0 : i32
    return %c0_i32, %c0_i32_0 : i32, i32
  }
  func.func @transform_7(%arg0: i32) -> (i32, i32, i32, i32) {
    %c0_i32 = arith.constant 0 : i32
    %c0_i32_0 = arith.constant 0 : i32
    %c0_i32_1 = arith.constant 0 : i32
    %c0_i32_2 = arith.constant 0 : i32
    return %arg0, %c0_i32, %c0_i32_0, %c0_i32_1 : i32, i32, i32, i32
  }
}

</mosaic_0001>

<llo_original>
// kernel: tpu_custom_call.1
$region0: #{tpu_custom_call.1}
  #allocation0 [shape = 'u32[]', space=smem, size = 0x4, offset = 0x4, fixed_abs, tag = 'smem constant byte address 0x4 - core index']
  #allocation1 [shape = 'u32[144,128]{1,0:T(1,128)}', space=vmem, size = 0x12000, scoped, tag = 'internal scratch']
  #allocation2 [shape = 'bf16[1,18,16,384]{3,2,1,0:T(16,128)(2,1)}', space=vmem, size = 0x36000, scoped, tag = 'scratch operand']
  %s0 = inlined_call_operand.hbm [shape: bf16[2,16,16,128], index: 0, kind: input, shape index: {}]
  %s1 = inlined_call_operand.hbm [shape: bf16[128,128], index: 1, kind: input, shape index: {}]
  %s2 = inlined_call_operand.vmem [shape: f32[2,128], index: 2, kind: input, shape index: {}]
  %s3 = inlined_call_operand.hbm [shape: bf16[3,384,128], index: 3, kind: input, shape index: {}]
  %s4 = inlined_call_operand.vmem [shape: f32[2,128], index: 4, kind: input, shape index: {}]
  %s5 = inlined_call_operand.hbm [shape: bf16[128,128], index: 5, kind: input, shape index: {}]
  %s6 = inlined_call_operand.vmem [shape: f32[2,128], index: 6, kind: input, shape index: {}]
  %s7 = inlined_call_operand.hbm [shape: bf16[2,16,16,128], index: 7, kind: output, shape index: {}]
  %s8 = sld [smem:[#allocation0]]
  $region77: #{tpu_custom_call.1} parent=0
    _
  %s10 = ssub.s32 1, %s8
  %s11 = scalar_select 0, %s10, %s8
  $region1: #{tpu_custom_call.1} parent=0
    #allocation3 [shape = 'u8[131072]{0}', space=vmem, size = 0x20000, scoped, tag = 'input window, operand 0']
    #allocation4 [shape = 's32[2]{0}', space=sflag, size = 0x8, scoped, tag = 'scoped memory for tpu_custom_call.1']
    #allocation5 [shape = 's32[2]{0}', space=sflag, size = 0x8, scoped, tag = 'scoped memory for tpu_custom_call.1']
    #allocation6 [shape = 'u8[32768]{0}', space=vmem, size = 0x8000, scoped, tag = 'input window, operand 1, single buffered']
    #allocation7 [shape = 's32[1]{0}', space=sflag, size = 0x4, scoped, tag = 'scoped memory for tpu_custom_call.1']
    #allocation8 [shape = 'u8[294912]{0}', space=vmem, size = 0x48000, scoped, tag = 'input window, operand 3, single buffered']
    #allocation9 [shape = 'u8[32768]{0}', space=vmem, size = 0x8000, scoped, tag = 'input window, operand 5, single buffered']
    #allocation10 [shape = 's32[1]{0}', space=sflag, size = 0x4, scoped, tag = 'scoped memory for tpu_custom_call.1']
    #allocation11 [shape = 'u8[131072]{0}', space=vmem, size = 0x20000, scoped, tag = 'output window, operand 0']
    %12 = vsyncpa [#allocation4], 0
    %s13 = scalar_lea.sflag [#allocation4], 1
    %14 = vsyncpa %s13, 0
    %15 = vsyncpa [#allocation7], 0
    %16 = vsyncpa [#allocation10], 0
    %17 = vsyncpa [#allocation5], 0
    %s18 = scalar_lea.sflag [#allocation5], 1
    %19 = vsyncpa %s18, 0
    loop: start=0, step=1, limit=4
    $region2: #{tpu_custom_call.1} parent=1 // loop_pre_header
      _
    $region3: #{tpu_custom_call.1} parent=1 // loop_header
      %s21 = sphi 0, %s25
      %p22 = scmp.ge.s32.totalorder %s21, 4
      %s31 = sphi 0, %s33
      %s34 = sphi 0, %s31
      %s35 = sphi 0, %s34
      %s51 = sphi 0, %s35
      %s55 = sphi 0, %s55
      %s57 = sphi 0, %s55
      %s58 = sphi 0, %s57
      %s72 = sphi 0, %s58
      %s76 = sphi 0, %s76
      %s78 = sphi 0, %s76
      %s79 = sphi 0, %s78
      %s93 = sphi 0, %s79
      %s97 = sphi 0, %s97
      %s99 = sphi 0, %s97
      %s100 = sphi 0, %s99
      %s114 = sphi 0, %s100
      %s118 = sphi 0, %s118
      %s120 = sphi 0, %s118
      %s121 = sphi 0, %s120
      %s135 = sphi 0, %s121
      %s139 = sphi 0, %s139
      %s141 = sphi 0, %s139
      %s142 = sphi 0, %s141
      %s156 = sphi 0, %s142
      %s160 = sphi 0, %s160
      %s162 = sphi 0, %s160
      %s163 = sphi 0, %s162
      %s177 = sphi 0, %s163
      %s183 = sphi 0, %s185
      %s186 = sphi 0, %s183
      %s187 = sphi 0, %s186
      %s203 = sphi 0, %s187
    $region4: #{tpu_custom_call.1} parent=1 // loop_header_branch
      %24 = sbr.rel (%p22) target = $region8
    $region5: #{tpu_custom_call.1} parent=1 // loop_body
      %s26 = ssub.s32 %s21, 1
      %s27 = ssub.s32 %s21, 2
      %s28 = sadd.s32 %s21, 1
      %s29 = ssub.s32 %s21, %s28
      %p30 = scmp.eq.s32.totalorder %s29, 0
      %s32 = sadd.s32 %s31, 1
      %s33 = scalar_select %p30, %s31, %s32
      %p36 = pneg %p30
      %p37 = scmp.eq.s32.totalorder %s21, 1
      %p38 = por %p36, %p37
      %p39 = scmp.ne.s32.totalorder %s31, %s34
      %p40 = scmp.eq.s32.totalorder %s21, 0
      %p41 = por %p39, %p40
      %p42 = scmp.ne.s32.totalorder %s31, %s34
      %p43 = scmp.eq.s32.totalorder %s26, 1
      %p44 = por %p42, %p43
      %p45 = scmp.ne.s32.totalorder %s34, %s35
      %p46 = scmp.eq.s32.totalorder %s26, 0
      %p47 = por %p45, %p46
      %p48 = scmp.ne.s32.totalorder %s34, %s35
      %p49 = scmp.eq.s32.totalorder %s27, 1
      %p50 = por %p48, %p49
      %p52 = scmp.ne.s32.totalorder %s35, %s51
      %p53 = scmp.eq.s32.totalorder %s27, 0
      %p54 = por %p52, %p53
      %s56 = sadd.s32 %s55, 1
      %p59 = scmp.eq.s32.totalorder %s21, 1
      %p60 = scmp.ne.s32.totalorder %s55, %s57
      %p61 = scmp.eq.s32.totalorder %s21, 0
      %p62 = por %p60, %p61
      %p63 = scmp.ne.s32.totalorder %s55, %s57
      %p64 = scmp.eq.s32.totalorder %s26, 1
      %p65 = por %p63, %p64
      %p66 = scmp.ne.s32.totalorder %s57, %s58
      %p67 = scmp.eq.s32.totalorder %s26, 0
      %p68 = por %p66, %p67
      %p69 = scmp.ne.s32.totalorder %s57, %s58
      %p70 = scmp.eq.s32.totalorder %s27, 1
      %p71 = por %p69, %p70
      %p73 = scmp.ne.s32.totalorder %s58, %s72
      %p74 = scmp.eq.s32.totalorder %s27, 0
      %p75 = por %p73, %p74
      %s77 = sadd.s32 %s76, 1
      %p80 = scmp.eq.s32.totalorder %s21, 1
      %p81 = scmp.ne.s32.totalorder %s76, %s78
      %p82 = scmp.eq.s32.totalorder %s21, 0
      %p83 = por %p81, %p82
      %p84 = scmp.ne.s32.totalorder %s76, %s78
      %p85 = scmp.eq.s32.totalorder %s26, 1
      %p86 = por %p84, %p85
      %p87 = scmp.ne.s32.totalorder %s78, %s79
      %p88 = scmp.eq.s32.totalorder %s26, 0
      %p89 = por %p87, %p88
      %p90 = scmp.ne.s32.totalorder %s78, %s79
      %p91 = scmp.eq.s32.totalorder %s27, 1
      %p92 = por %p90, %p91
      %p94 = scmp.ne.s32.totalorder %s79, %s93
      %p95 = scmp.eq.s32.totalorder %s27, 0
      %p96 = por %p94, %p95
      %s98 = sadd.s32 %s97, 1
      %p101 = scmp.eq.s32.totalorder %s21, 1
      %p102 = scmp.ne.s32.totalorder %s97, %s99
      %p103 = scmp.eq.s32.totalorder %s21, 0
      %p104 = por %p102, %p103
      %p105 = scmp.ne.s32.totalorder %s97, %s99
      %p106 = scmp.eq.s32.totalorder %s26, 1
      %p107 = por %p105, %p106
      %p108 = scmp.ne.s32.totalorder %s99, %s100
      %p109 = scmp.eq.s32.totalorder %s26, 0
      %p110 = por %p108, %p109
      %p111 = scmp.ne.s32.totalorder %s99, %s100
      %p112 = scmp.eq.s32.totalorder %s27, 1
      %p113 = por %p111, %p112
      %p115 = scmp.ne.s32.totalorder %s100, %s114
      %p116 = scmp.eq.s32.totalorder %s27, 0
      %p117 = por %p115, %p116
      %s119 = sadd.s32 %s118, 1
      %p122 = scmp.eq.s32.totalorder %s21, 1
      %p123 = scmp.ne.s32.totalorder %s118, %s120
      %p124 = scmp.eq.s32.totalorder %s21, 0
      %p125 = por %p123, %p124
      %p126 = scmp.ne.s32.totalorder %s118, %s120
      %p127 = scmp.eq.s32.totalorder %s26, 1
      %p128 = por %p126, %p127
      %p129 = scmp.ne.s32.totalorder %s120, %s121
      %p130 = scmp.eq.s32.totalorder %s26, 0
      %p131 = por %p129, %p130
      %p132 = scmp.ne.s32.totalorder %s120, %s121
      %p133 = scmp.eq.s32.totalorder %s27, 1
      %p134 = por %p132, %p133
      %p136 = scmp.ne.s32.totalorder %s121, %s135
      %p137 = scmp.eq.s32.totalorder %s27, 0
      %p138 = por %p136, %p137
      %s140 = sadd.s32 %s139, 1
      %p143 = scmp.eq.s32.totalorder %s21, 1
      %p144 = scmp.ne.s32.totalorder %s139, %s141
      %p145 = scmp.eq.s32.totalorder %s21, 0
      %p146 = por %p144, %p145
      %p147 = scmp.ne.s32.totalorder %s139, %s141
      %p148 = scmp.eq.s32.totalorder %s26, 1
      %p149 = por %p147, %p148
      %p150 = scmp.ne.s32.totalorder %s141, %s142
      %p151 = scmp.eq.s32.totalorder %s26, 0
      %p152 = por %p150, %p151
      %p153 = scmp.ne.s32.totalorder %s141, %s142
      %p154 = scmp.eq.s32.totalorder %s27, 1
      %p155 = por %p153, %p154
      %p157 = scmp.ne.s32.totalorder %s142, %s156
      %p158 = scmp.eq.s32.totalorder %s27, 0
      %p159 = por %p157, %p158
      %s161 = sadd.s32 %s160, 1
      %p164 = scmp.eq.s32.totalorder %s21, 1
      %p165 = scmp.ne.s32.totalorder %s160, %s162
      %p166 = scmp.eq.s32.totalorder %s21, 0
      %p167 = por %p165, %p166
      %p168 = scmp.ne.s32.totalorder %s160, %s162
      %p169 = scmp.eq.s32.totalorder %s26, 1
      %p170 = por %p168, %p169
      %p171 = scmp.ne.s32.totalorder %s162, %s163
      %p172 = scmp.eq.s32.totalorder %s26, 0
      %p173 = por %p171, %p172
      %p174 = scmp.ne.s32.totalorder %s162, %s163
      %p175 = scmp.eq.s32.totalorder %s27, 1
      %p176 = por %p174, %p175
      %p178 = scmp.ne.s32.totalorder %s163, %s177
      %p179 = scmp.eq.s32.totalorder %s27, 0
      %p180 = por %p178, %p179
      %s181 = ssub.s32 %s21, %s28
      %p182 = scmp.eq.s32.totalorder %s181, 0
      %s184 = sadd.s32 %s183, 1
      %s185 = scalar_select %p182, %s183, %s184
      %p188 = pneg %p182
      %p189 = scmp.eq.s32.totalorder %s21, 1
      %p190 = por %p188, %p189
      %p191 = scmp.ne.s32.totalorder %s183, %s186
      %p192 = scmp.eq.s32.totalorder %s21, 0
      %p193 = por %p191, %p192
      %p194 = scmp.ne.s32.totalorder %s183, %s186
      %p195 = scmp.eq.s32.totalorder %s26, 1
      %p196 = por %p194, %p195
      %p197 = scmp.ne.s32.totalorder %s186, %s187
      %p198 = scmp.eq.s32.totalorder %s26, 0
      %p199 = por %p197, %p198
      %p200 = scmp.ne.s32.totalorder %s186, %s187
      %p201 = scmp.eq.s32.totalorder %s27, 1
      %p202 = por %p200, %p201
      %p204 = scmp.ne.s32.totalorder %s187, %s203
      %p205 = scmp.eq.s32.totalorder %s27, 0
      %p206 = por %p204, %p205
      %p207 = scmp.le.s32.totalorder 1, %s21
      %p208 = scmp.lt.s32.totalorder %s21, 3
      %p209 = pnand %p207, %p208
      %p210 = pneg %p209
      // Predicated region
      $region9: #{tpu_custom_call.1} parent=5 // pred_check
        _
      $region10: #{tpu_custom_call.1} parent=5 // pred_check_branch
        %212 = sbr.rel (%p209) target = $region12
      $region11: #{tpu_custom_call.1} parent=5 // pred_region
        %s213 = ssub.s32 %s21, 1
        // Predicated region
        $region13: #{tpu_custom_call.1} parent=11 // pred_check
          %p214 = pneg %p68
        $region14: #{tpu_custom_call.1} parent=11 // pred_check_branch
          %216 = sbr.rel (%p214) target = $region16
        $region15: #{tpu_custom_call.1} parent=11 // pred_region
          %s218 = ssub.s32 1024, 1024
          %219 = vsyncadd [#allocation7], %s218
          %s220 = sshll.u32 [#allocation6], 4
          %s221 = int_to_ptr.vmem [resolvable:$true] %s220
          %226 = dma.hbm_to_vmem [thread:$0]  %s1, 1024, %s221, [#allocation7], 64, 64, 4
        $region16: #{tpu_custom_call.1} parent=11 // pred_fallthru
          _
        // Predicated region
        $region17: #{tpu_custom_call.1} parent=11 // pred_check
          %p227 = pneg %p89
        $region18: #{tpu_custom_call.1} parent=11 // pred_check_branch
          %229 = sbr.rel (%p227) target = $region20
        $region19: #{tpu_custom_call.1} parent=11 // pred_region
          _
        $region20: #{tpu_custom_call.1} parent=11 // pred_fallthru
          _
        // Predicated region
        $region21: #{tpu_custom_call.1} parent=11 // pred_check
          %p230 = pneg %p110
        $region22: #{tpu_custom_call.1} parent=11 // pred_check_branch
          %232 = sbr.rel (%p230) target = $region24
        $region23: #{tpu_custom_call.1} parent=11 // pred_region
          %s234 = ssub.s32 9216, 9216
          %235 = vsyncadd [#allocation7], %s234
          %s236 = sshll.u32 [#allocation8], 4
          %s237 = int_to_ptr.vmem [resolvable:$true] %s236
          %242 = dma.hbm_to_vmem [thread:$0]  %s3, 9216, %s237, [#allocation7], 64, 64, 4
        $region24: #{tpu_custom_call.1} parent=11 // pred_fallthru
          _
        // Predicated region
        $region25: #{tpu_custom_call.1} parent=11 // pred_check
          %p243 = pneg %p131
        $region26: #{tpu_custom_call.1} parent=11 // pred_check_branch
          %245 = sbr.rel (%p243) target = $region28
        $region27: #{tpu_custom_call.1} parent=11 // pred_region
          _
        $region28: #{tpu_custom_call.1} parent=11 // pred_fallthru
          _
        // Predicated region
        $region29: #{tpu_custom_call.1} parent=11 // pred_check
          %p246 = pneg %p152
        $region30: #{tpu_custom_call.1} parent=11 // pred_check_branch
          %248 = sbr.rel (%p246) target = $region32
        $region31: #{tpu_custom_call.1} parent=11 // pred_region
          %s250 = ssub.s32 1024, 1024
          %251 = vsyncadd [#allocation10], %s250
          %s252 = sshll.u32 [#allocation9], 4
          %s253 = int_to_ptr.vmem [resolvable:$true] %s252
          %258 = dma.hbm_to_vmem [thread:$0]  %s5, 1024, %s253, [#allocation10], 64, 64, 4
        $region32: #{tpu_custom_call.1} parent=11 // pred_fallthru
          _
        // Predicated region
        $region33: #{tpu_custom_call.1} parent=11 // pred_check
          %p259 = pneg %p173
        $region34: #{tpu_custom_call.1} parent=11 // pred_check_branch
          %261 = sbr.rel (%p259) target = $region36
        $region35: #{tpu_custom_call.1} parent=11 // pred_region
          _
        $region36: #{tpu_custom_call.1} parent=11 // pred_fallthru
          _
      $region12: #{tpu_custom_call.1} parent=5 // pred_fallthru
        _
      %p262 = scmp.lt.s32.totalorder %s21, 2
      // Predicated region
      $region37: #{tpu_custom_call.1} parent=5 // pred_check
        %p263 = pneg %p262
      $region38: #{tpu_custom_call.1} parent=5 // pred_check_branch
        %265 = sbr.rel (%p263) target = $region40
      $region39: #{tpu_custom_call.1} parent=5 // pred_region
        // Predicated region
        $region41: #{tpu_custom_call.1} parent=39 // pred_check
          %p266 = pneg %p41
        $region42: #{tpu_custom_call.1} parent=39 // pred_check_branch
          %268 = sbr.rel (%p266) target = $region44
        $region43: #{tpu_custom_call.1} parent=39 // pred_region
          %s269 = sand.u32 %s31, 1
          %s270 = scalar_lea.sflag [#allocation4], %s269
          %s271 = sand.u32 %s31, 1
          %s272 = smul.addr %s271, 128
          %s273 = scalar_lea.vmem [#allocation3], %s272
          %s275 = ssub.s32 2048, 2048
          %276 = vsyncadd %s270, %s275
          %s277 = smul.addr %s21, 32
          %s278 = smul.addr %s277, 64
          %s279 = scalar_lea.hbm %s0, %s278
          %s280 = sshll.u32 %s273, 4
          %s281 = int_to_ptr.vmem [resolvable:$true] %s280
          %286 = dma.hbm_to_vmem [thread:$0]  %s279, 2048, %s281, %s270, 64, 64, 4
        $region44: #{tpu_custom_call.1} parent=39 // pred_fallthru
          _
      $region40: #{tpu_custom_call.1} parent=5 // pred_fallthru
        _
      %p287 = scmp.le.s32.totalorder 1, %s21
      %p288 = scmp.lt.s32.totalorder %s21, 3
      %p289 = pnand %p287, %p288
      %p290 = pneg %p289
      // Predicated region
      $region45: #{tpu_custom_call.1} parent=5 // pred_check
        _
      $region46: #{tpu_custom_call.1} parent=5 // pred_check_branch
        %292 = sbr.rel (%p289) target = $region48
      $region47: #{tpu_custom_call.1} parent=5 // pred_region
        %s293 = ssub.s32 %s21, 1
        %s294 = sand.u32 %s34, 1
        %s295 = scalar_lea.sflag [#allocation4], %s294
        %s296 = sand.u32 %s34, 1
        %s297 = smul.addr %s296, 128
        %s298 = scalar_lea.vmem [#allocation3], %s297
        // Predicated region
        $region49: #{tpu_custom_call.1} parent=47 // pred_check
          %p299 = pneg %p47
        $region50: #{tpu_custom_call.1} parent=47 // pred_check_branch
          %301 = sbr.rel (%p299) target = $region52
        $region51: #{tpu_custom_call.1} parent=47 // pred_region
          %302 = dma.done %s295, 2048
        $region52: #{tpu_custom_call.1} parent=47 // pred_fallthru
          _
        // Predicated region
        $region53: #{tpu_custom_call.1} parent=47 // pred_check
          %p303 = pneg %p68
        $region54: #{tpu_custom_call.1} parent=47 // pred_check_branch
          %305 = sbr.rel (%p303) target = $region56
        $region55: #{tpu_custom_call.1} parent=47 // pred_region
          %306 = dma.done [#allocation7], 1024
        $region56: #{tpu_custom_call.1} parent=47 // pred_fallthru
          _
        // Predicated region
        $region57: #{tpu_custom_call.1} parent=47 // pred_check
          %p307 = pneg %p110
        $region58: #{tpu_custom_call.1} parent=47 // pred_check_branch
          %309 = sbr.rel (%p307) target = $region60
        $region59: #{tpu_custom_call.1} parent=47 // pred_region
          %310 = dma.done [#allocation7], 9216
        $region60: #{tpu_custom_call.1} parent=47 // pred_fallthru
          _
        // Predicated region
        $region61: #{tpu_custom_call.1} parent=47 // pred_check
          %p311 = pneg %p152
        $region62: #{tpu_custom_call.1} parent=47 // pred_check_branch
          %313 = sbr.rel (%p311) target = $region64
        $region63: #{tpu_custom_call.1} parent=47 // pred_region
          %314 = dma.done [#allocation10], 1024
        $region64: #{tpu_custom_call.1} parent=47 // pred_fallthru
          _
        %s315 = sand.u32 %s34, 1
        %s316 = scalar_lea.sflag [#allocation4], %s315
        %s317 = sand.u32 %s34, 1
        %s318 = smul.addr %s317, 128
        %s319 = scalar_lea.vmem [#allocation3], %s318
        %p320 = pneg %p47
        %p321 = pneg %p44
        %p322 = pneg %p68
        %p323 = pneg %p65
        %p324 = pneg %p89
        %p325 = pneg %p86
        %p326 = pneg %p110
        %p327 = pneg %p107
        %p328 = pneg %p131
        %p329 = pneg %p128
        %p330 = pneg %p152
        %p331 = pneg %p149
        %p332 = pneg %p173
        %p333 = pneg %p170
        %p334 = pneg %p199
        %p335 = pneg %p196
        %s336 = sand.u32 %s186, 1
        %s337 = scalar_lea.sflag [#allocation5], %s336
        %s338 = sand.u32 %s186, 1
        %s339 = smul.addr %s338, 128
        %s340 = scalar_lea.vmem [#allocation11], %s339
        %v342 = vld [vmem:[%s298] sm:$0xf]
        %v343 = vld [vmem:[%s298 + $0x4] sm:$0xf]
        %v344 = vld [vmem:[%s298 + $0x8] sm:$0xf]
        %v345 = vld [vmem:[%s298 + $0xc] sm:$0xf]
        %v346 = vld [vmem:[%s298 + $0x10] sm:$0xf]
        %v347 = vld [vmem:[%s298 + $0x14] sm:$0xf]
        %v348 = vld [vmem:[%s298 + $0x18] sm:$0xf]
        %v349 = vld [vmem:[%s298 + $0x1c] sm:$0xf]
        %v350 = vld [vmem:[%s298 + $0x20] sm:$0xf]
        %v351 = vld [vmem:[%s298 + $0x24] sm:$0xf]
        %v352 = vld [vmem:[%s298 + $0x28] sm:$0xf]
        %v353 = vld [vmem:[%s298 + $0x2c] sm:$0xf]
        %v354 = vld [vmem:[%s298 + $0x30] sm:$0xf]
        %v355 = vld [vmem:[%s298 + $0x34] sm:$0xf]
        %v356 = vld [vmem:[%s298 + $0x38] sm:$0xf]
        %v357 = vld [vmem:[%s298 + $0x3c] sm:$0xf]
        %v358 = vld [vmem:[%s298 + $0x40] sm:$0xf]
        %v359 = vld [vmem:[%s298 + $0x44] sm:$0xf]
        %v360 = vld [vmem:[%s298 + $0x48] sm:$0xf]
        %v361 = vld [vmem:[%s298 + $0x4c] sm:$0xf]
        %v362 = vld [vmem:[%s298 + $0x50] sm:$0xf]
        %v363 = vld [vmem:[%s298 + $0x54] sm:$0xf]
        %v364 = vld [vmem:[%s298 + $0x58] sm:$0xf]
        %v365 = vld [vmem:[%s298 + $0x5c] sm:$0xf]
        %v366 = vld [vmem:[%s298 + $0x60] sm:$0xf]
        %v367 = vld [vmem:[%s298 + $0x64] sm:$0xf]
        %v368 = vld [vmem:[%s298 + $0x68] sm:$0xf]
        %v369 = vld [vmem:[%s298 + $0x6c] sm:$0xf]
        %v370 = vld [vmem:[%s298 + $0x70] sm:$0xf]
        %v371 = vld [vmem:[%s298 + $0x74] sm:$0xf]
        %v372 = vld [vmem:[%s298 + $0x78] sm:$0xf]
        %v373 = vld [vmem:[%s298 + $0x7c] sm:$0xf]
        %v374 = vld [vmem:[#allocation6] sm:$0xf]
        %v375 = vld [vmem:[#allocation6 + $0x4] sm:$0xf]
        %v376 = vld [vmem:[#allocation6 + $0x8] sm:$0xf]
        %v377 = vld [vmem:[#allocation6 + $0xc] sm:$0xf]
        %v378 = vld [vmem:[#allocation6 + $0x10] sm:$0xf]
        %v379 = vld [vmem:[#allocation6 + $0x14] sm:$0xf]
        %v380 = vld [vmem:[#allocation6 + $0x18] sm:$0xf]
        %v381 = vld [vmem:[#allocation6 + $0x1c] sm:$0xf]
        %v382 = vld [vmem:[#allocation6 + $0x20] sm:$0xf]
        %v383 = vld [vmem:[#allocation6 + $0x24] sm:$0xf]
        %v384 = vld [vmem:[#allocation6 + $0x28] sm:$0xf]
        %v385 = vld [vmem:[#allocation6 + $0x2c] sm:$0xf]
        %v386 = vld [vmem:[#allocation6 + $0x30] sm:$0xf]
        %v387 = vld [vmem:[#allocation6 + $0x34] sm:$0xf]
        %v388 = vld [vmem:[#allocation6 + $0x38] sm:$0xf]
        %v389 = vld [vmem:[#allocation6 + $0x3c] sm:$0xf]
        %v422 = vunpack.c.l.b16 %v342
        %v423 = vunpack.c.l.b16 %v343
        %v424 = vunpack.c.l.b16 %v344
        %v425 = vunpack.c.l.b16 %v345
        %v426 = vunpack.c.l.b16 %v346
        %v427 = vunpack.c.l.b16 %v347
        %v428 = vunpack.c.l.b16 %v348
        %v429 = vunpack.c.l.b16 %v349
        %v430 = vunpack.c.l.b16 %v350
        %v431 = vunpack.c.l.b16 %v351
        %v432 = vunpack.c.l.b16 %v352
        %v433 = vunpack.c.l.b16 %v353
        %v434 = vunpack.c.l.b16 %v354
        %v435 = vunpack.c.l.b16 %v355
        %v436 = vunpack.c.l.b16 %v356
        %v437 = vunpack.c.l.b16 %v357
        %v438 = vunpack.c.l.b16 %v358
        %v439 = vunpack.c.l.b16 %v359
        %v440 = vunpack.c.l.b16 %v360
        %v441 = vunpack.c.l.b16 %v361
        %v442 = vunpack.c.l.b16 %v362
        %v443 = vunpack.c.l.b16 %v363
        %v444 = vunpack.c.l.b16 %v364
        %v445 = vunpack.c.l.b16 %v365
        %v446 = vunpack.c.l.b16 %v366
        %v447 = vunpack.c.l.b16 %v367
        %v448 = vunpack.c.l.b16 %v368
        %v449 = vunpack.c.l.b16 %v369
        %v450 = vunpack.c.l.b16 %v370
        %v451 = vunpack.c.l.b16 %v371
        %v452 = vunpack.c.l.b16 %v372
        %v453 = vunpack.c.l.b16 %v373
        %v454 = vpack.c.b16 %v423, %v422
        %v455 = vpack.c.b16 %v425, %v424
        %v456 = vpack.c.b16 %v427, %v426
        %v457 = vpack.c.b16 %v429, %v428
        %v458 = vpack.c.b16 %v431, %v430
        %v459 = vpack.c.b16 %v433, %v432
        %v460 = vpack.c.b16 %v435, %v434
        %v461 = vpack.c.b16 %v437, %v436
        %v462 = vpack.c.b16 %v439, %v438
        %v463 = vpack.c.b16 %v441, %v440
        %v464 = vpack.c.b16 %v443, %v442
        %v465 = vpack.c.b16 %v445, %v444
        %v466 = vpack.c.b16 %v447, %v446
        %v467 = vpack.c.b16 %v449, %v448
        %v468 = vpack.c.b16 %v451, %v450
        %v469 = vpack.c.b16 %v453, %v452
        %v502 = vunpack.c.l.b16 %v374
        %v503 = vunpack.c.l.b16 %v375
        %v504 = vunpack.c.l.b16 %v376
        %v505 = vunpack.c.l.b16 %v377
        %v506 = vunpack.c.l.b16 %v378
        %v507 = vunpack.c.l.b16 %v379
        %v508 = vunpack.c.l.b16 %v380
        %v509 = vunpack.c.l.b16 %v381
        %v510 = vunpack.c.l.b16 %v382
        %v511 = vunpack.c.l.b16 %v383
        %v512 = vunpack.c.l.b16 %v384
        %v513 = vunpack.c.l.b16 %v385
        %v514 = vunpack.c.l.b16 %v386
        %v515 = vunpack.c.l.b16 %v387
        %v516 = vunpack.c.l.b16 %v388
        %v517 = vunpack.c.l.b16 %v389
        %v518 = vpack.c.b16 %v503, %v502
        %v519 = vpack.c.b16 %v505, %v504
        %v520 = vpack.c.b16 %v507, %v506
        %v521 = vpack.c.b16 %v509, %v508
        %v522 = vpack.c.b16 %v511, %v510
        %v523 = vpack.c.b16 %v513, %v512
        %v524 = vpack.c.b16 %v515, %v514
        %v525 = vpack.c.b16 %v517, %v516
        %534 = vmatprep.subr.bf16.mxu0 0
        %535 = vmatpush1.bf16.msra.mxu0 %v518
        %536 = vmatprep.subr.bf16.mxu0 0
        %537 = vmatpush1.bf16.msra.mxu0 %v519
        %538 = vmatprep.subr.bf16.mxu0 0
        %539 = vmatpush1.bf16.msra.mxu0 %v520
        %540 = vmatprep.subr.bf16.mxu0 0
        %541 = vmatpush1.bf16.msra.mxu0 %v521
        %542 = vmatprep.subr.bf16.mxu0 0
        %543 = vmatpush1.bf16.msra.mxu0 %v522
        %544 = vmatprep.subr.bf16.mxu0 0
        %545 = vmatpush1.bf16.msra.mxu0 %v523
        %546 = vmatprep.subr.bf16.mxu0 0
        %547 = vmatpush1.bf16.msra.mxu0 %v524
        %548 = vmatprep.subr.bf16.mxu0 0
        %549 = vmatpush1.bf16.msra.mxu0 %v525
        %550 = vmatprep.subr.bf16.mxu0 0
        %551 = vmatpush1.bf16.msra.mxu0 0
        %552 = vmatprep.subr.bf16.mxu0 0
        %553 = vmatpush1.bf16.msra.mxu0 0
        %554 = vmatprep.subr.bf16.mxu0 0
        %555 = vmatpush1.bf16.msra.mxu0 0
        %556 = vmatprep.subr.bf16.mxu0 0
        %557 = vmatpush1.bf16.msra.mxu0 0
        %558 = vmatprep.subr.bf16.mxu0 0
        %559 = vmatpush1.bf16.msra.mxu0 0
        %560 = vmatprep.subr.bf16.mxu0 0
        %561 = vmatpush1.bf16.msra.mxu0 0
        %562 = vmatprep.subr.bf16.mxu0 0
        %563 = vmatpush1.bf16.msra.mxu0 0
        %564 = vmatprep.subr.bf16.mxu0 0
        %565 = vmatpush1.bf16.msra.mxu0 0
        %566 = vmatprep.mubr.bf16.mxu0 0
        %567 = vmatmul.mubr.bf16.gmra.mrb[0].mxu0 %v454
        %v568 = vpop.f32.mrb[0].mxu0
        %v569 = vadd.f32 0.0, %v568
        %v570 = vpop.f32.mrb[0].mxu0
        %v571 = vpop.f32.mrb[0].mxu0
        %v572 = vadd.f32 0.0, %v571
        %v573 = vpop.f32.mrb[0].mxu0
        %574 = vmatprep.mubr.bf16.mxu0 0
        %575 = vmatmul.mubr.bf16.gmra.mrb[0].mxu0 %v455
        %v576 = vpop.f32.mrb[0].mxu0
        %v577 = vadd.f32 0.0, %v576
        %v578 = vpop.f32.mrb[0].mxu0
        %v579 = vpop.f32.mrb[0].mxu0
        %v580 = vadd.f32 0.0, %v579
        %v581 = vpop.f32.mrb[0].mxu0
        %582 = vmatprep.mubr.bf16.mxu0 0
        %583 = vmatmul.mubr.bf16.gmra.mrb[0].mxu0 %v456
        %v584 = vpop.f32.mrb[0].mxu0
        %v585 = vadd.f32 0.0, %v584
        %v586 = vpop.f32.mrb[0].mxu0
        %v587 = vpop.f32.mrb[0].mxu0
        %v588 = vadd.f32 0.0, %v587
        %v589 = vpop.f32.mrb[0].mxu0
        %590 = vmatprep.mubr.bf16.mxu0 0
        %591 = vmatmul.mubr.bf16.gmra.mrb[0].mxu0 %v457
        %v592 = vpop.f32.mrb[0].mxu0
        %v593 = vadd.f32 0.0, %v592
        %v594 = vpop.f32.mrb[0].mxu0
        %v595 = vpop.f32.mrb[0].mxu0
        %v596 = vadd.f32 0.0, %v595
        %v597 = vpop.f32.mrb[0].mxu0
        %598 = vmatprep.mubr.bf16.mxu0 0
        %599 = vmatmul.mubr.bf16.gmra.mrb[0].mxu0 %v458
        %v600 = vpop.f32.mrb[0].mxu0
        %v601 = vadd.f32 0.0, %v600
        %v602 = vpop.f32.mrb[0].mxu0
        %v603 = vpop.f32.mrb[0].mxu0
        %v604 = vadd.f32 0.0, %v603
        %v605 = vpop.f32.mrb[0].mxu0
        %606 = vmatprep.mubr.bf16.mxu0 0
        %607 = vmatmul.mubr.bf16.gmra.mrb[0].mxu0 %v459
        %v608 = vpop.f32.mrb[0].mxu0
        %v609 = vadd.f32 0.0, %v608
        %v610 = vpop.f32.mrb[0].mxu0
        %v611 = vpop.f32.mrb[0].mxu0
        %v612 = vadd.f32 0.0, %v611
        %v613 = vpop.f32.mrb[0].mxu0
        %614 = vmatprep.mubr.bf16.mxu0 0
        %615 = vmatmul.mubr.bf16.gmra.mrb[0].mxu0 %v460
        %v616 = vpop.f32.mrb[0].mxu0
        %v617 = vadd.f32 0.0, %v616
        %v618 = vpop.f32.mrb[0].mxu0
        %v619 = vpop.f32.mrb[0].mxu0
        %v620 = vadd.f32 0.0, %v619
        %v621 = vpop.f32.mrb[0].mxu0
        %622 = vmatprep.mubr.bf16.mxu0 0
        %623 = vmatmul.mubr.bf16.gmra.mrb[0].mxu0 %v461
        %v624 = vpop.f32.mrb[0].mxu0
        %v625 = vadd.f32 0.0, %v624
        %v626 = vpop.f32.mrb[0].mxu0
        %v627 = vpop.f32.mrb[0].mxu0
        %v628 = vadd.f32 0.0, %v627
        %v629 = vpop.f32.mrb[0].mxu0
        %630 = vmatprep.mubr.bf16.mxu0 0
        %631 = vmatmul.mubr.bf16.gmra.mrb[0].mxu0 %v462
        %v632 = vpop.f32.mrb[0].mxu0
        %v633 = vadd.f32 0.0, %v632
        %v634 = vpop.f32.mrb[0].mxu0
        %v635 = vpop.f32.mrb[0].mxu0
        %v636 = vadd.f32 0.0, %v635
        %v637 = vpop.f32.mrb[0].mxu0
        %638 = vmatprep.mubr.bf16.mxu0 0
        %639 = vmatmul.mubr.bf16.gmra.mrb[0].mxu0 %v463
        %v640 = vpop.f32.mrb[0].mxu0
        %v641 = vadd.f32 0.0, %v640
        %v642 = vpop.f32.mrb[0].mxu0
        %v643 = vpop.f32.mrb[0].mxu0
        %v644 = vadd.f32 0.0, %v643
        %v645 = vpop.f32.mrb[0].mxu0
        %646 = vmatprep.mubr.bf16.mxu0 0
        %647 = vmatmul.mubr.bf16.gmra.mrb[0].mxu0 %v464
        %v648 = vpop.f32.mrb[0].mxu0
        %v649 = vadd.f32 0.0, %v648
        %v650 = vpop.f32.mrb[0].mxu0
        %v651 = vpop.f32.mrb[0].mxu0
        %v652 = vadd.f32 0.0, %v651
        %v653 = vpop.f32.mrb[0].mxu0
        %654 = vmatprep.mubr.bf16.mxu0 0
        %655 = vmatmul.mubr.bf16.gmra.mrb[0].mxu0 %v465
        %v656 = vpop.f32.mrb[0].mxu0
        %v657 = vadd.f32 0.0, %v656
        %v658 = vpop.f32.mrb[0].mxu0
        %v659 = vpop.f32.mrb[0].mxu0
        %v660 = vadd.f32 0.0, %v659
        %v661 = vpop.f32.mrb[0].mxu0
        %662 = vmatprep.mubr.bf16.mxu0 0
        %663 = vmatmul.mubr.bf16.gmra.mrb[0].mxu0 %v466
        %v664 = vpop.f32.mrb[0].mxu0
        %v665 = vadd.f32 0.0, %v664
        %v666 = vpop.f32.mrb[0].mxu0
        %v667 = vpop.f32.mrb[0].mxu0
        %v668 = vadd.f32 0.0, %v667
        %v669 = vpop.f32.mrb[0].mxu0
        %670 = vmatprep.mubr.bf16.mxu0 0
        %671 = vmatmul.mubr.bf16.gmra.mrb[0].mxu0 %v467
        %v672 = vpop.f32.mrb[0].mxu0
        %v673 = vadd.f32 0.0, %v672
        %v674 = vpop.f32.mrb[0].mxu0
        %v675 = vpop.f32.mrb[0].mxu0
        %v676 = vadd.f32 0.0, %v675
        %v677 = vpop.f32.mrb[0].mxu0
        %678 = vmatprep.mubr.bf16.mxu0 0
        %679 = vmatmul.mubr.bf16.gmra.mrb[0].mxu0 %v468
        %v680 = vpop.f32.mrb[0].mxu0
        %v681 = vadd.f32 0.0, %v680
        %v682 = vpop.f32.mrb[0].mxu0
        %v683 = vpop.f32.mrb[0].mxu0
        %v684 = vadd.f32 0.0, %v683
        %v685 = vpop.f32.mrb[0].mxu0
        %686 = vmatprep.mubr.bf16.mxu0 0
        %687 = vmatmul.mubr.bf16.gmra.mrb[0].mxu0 %v469
        %v688 = vpop.f32.mrb[0].mxu0
        %v689 = vadd.f32 0.0, %v688
        %v690 = vpop.f32.mrb[0].mxu0
        %v691 = vpop.f32.mrb[0].mxu0
        %v692 = vadd.f32 0.0, %v691
        %v693 = vpop.f32.mrb[0].mxu0
        %694 = vdwg.mxu0
        %v695 = vld [vmem:[%s2] sm:$0x1]
        %v696 = vlaneseq
        %v697 = vshrl.u32 %v696, 7
        %v698 = vsub.s32 0, %v697
        %v699 = vrot.slane %v695, %v698
        %v700 = vmul.f32 %v569, %v699
        %v701 = vmul.f32 %v572, %v699
        %v702 = vmul.f32 %v577, %v699
        %v703 = vmul.f32 %v580, %v699
        %v704 = vmul.f32 %v585, %v699
        %v705 = vmul.f32 %v588, %v699
        %v706 = vmul.f32 %v593, %v699
        %v707 = vmul.f32 %v596, %v699
        %v708 = vmul.f32 %v601, %v699
        %v709 = vmul.f32 %v604, %v699
        %v710 = vmul.f32 %v609, %v699
        %v711 = vmul.f32 %v612, %v699
        %v712 = vmul.f32 %v617, %v699
        %v713 = vmul.f32 %v620, %v699
        %v714 = vmul.f32 %v625, %v699
        %v715 = vmul.f32 %v628, %v699
        %v716 = vmul.f32 %v633, %v699
        %v717 = vmul.f32 %v636, %v699
        %v718 = vmul.f32 %v641, %v699
        %v719 = vmul.f32 %v644, %v699
        %v720 = vmul.f32 %v649, %v699
        %v721 = vmul.f32 %v652, %v699
        %v722 = vmul.f32 %v657, %v699
        %v723 = vmul.f32 %v660, %v699
        %v724 = vmul.f32 %v665, %v699
        %v725 = vmul.f32 %v668, %v699
        %v726 = vmul.f32 %v673, %v699
        %v727 = vmul.f32 %v676, %v699
        %v728 = vmul.f32 %v681, %v699
        %v729 = vmul.f32 %v684, %v699
        %v730 = vmul.f32 %v689, %v699
        %v731 = vmul.f32 %v692, %v699
        %v732 = vld [vmem:[%s2 + $0x1] sm:$0x1]
        %v733 = vlaneseq
        %v734 = vshrl.u32 %v733, 7
        %v735 = vsub.s32 0, %v734
        %v736 = vrot.slane %v732, %v735
        %v737 = vadd.f32 %v700, %v736
        %v738 = vadd.f32 %v701, %v736
        %v739 = vadd.f32 %v702, %v736
        %v740 = vadd.f32 %v703, %v736
        %v741 = vadd.f32 %v704, %v736
        %v742 = vadd.f32 %v705, %v736
        %v743 = vadd.f32 %v706, %v736
        %v744 = vadd.f32 %v707, %v736
        %v745 = vadd.f32 %v708, %v736
        %v746 = vadd.f32 %v709, %v736
        %v747 = vadd.f32 %v710, %v736
        %v748 = vadd.f32 %v711, %v736
        %v749 = vadd.f32 %v712, %v736
        %v750 = vadd.f32 %v713, %v736
        %v751 = vadd.f32 %v714, %v736
        %v752 = vadd.f32 %v715, %v736
        %v753 = vadd.f32 %v716, %v736
        %v754 = vadd.f32 %v717, %v736
        %v755 = vadd.f32 %v718, %v736
        %v756 = vadd.f32 %v719, %v736
        %v757 = vadd.f32 %v720, %v736
        %v758 = vadd.f32 %v721, %v736
        %v759 = vadd.f32 %v722, %v736
        %v760 = vadd.f32 %v723, %v736
        %v761 = vadd.f32 %v724, %v736
        %v762 = vadd.f32 %v725, %v736
        %v763 = vadd.f32 %v726, %v736
        %v764 = vadd.f32 %v727, %v736
        %v765 = vadd.f32 %v728, %v736
        %v766 = vadd.f32 %v729, %v736
        %v767 = vadd.f32 %v730, %v736
        %v768 = vadd.f32 %v731, %v736
        %v769 = vmax.f32 %v737, 0.0
        %v770 = vmax.f32 %v738, 0.0
        %v771 = vmax.f32 %v739, 0.0
        %v772 = vmax.f32 %v740, 0.0
        %v773 = vmax.f32 %v741, 0.0
        %v774 = vmax.f32 %v742, 0.0
        %v775 = vmax.f32 %v743, 0.0
        %v776 = vmax.f32 %v744, 0.0
        %v777 = vmax.f32 %v745, 0.0
        %v778 = vmax.f32 %v746, 0.0
        %v779 = vmax.f32 %v747, 0.0
        %v780 = vmax.f32 %v748, 0.0
        %v781 = vmax.f32 %v749, 0.0
        %v782 = vmax.f32 %v750, 0.0
        %v783 = vmax.f32 %v751, 0.0
        %v784 = vmax.f32 %v752, 0.0
        %v785 = vmax.f32 %v753, 0.0
        %v786 = vmax.f32 %v754, 0.0
        %v787 = vmax.f32 %v755, 0.0
        %v788 = vmax.f32 %v756, 0.0
        %v789 = vmax.f32 %v757, 0.0
        %v790 = vmax.f32 %v758, 0.0
        %v791 = vmax.f32 %v759, 0.0
        %v792 = vmax.f32 %v760, 0.0
        %v793 = vmax.f32 %v761, 0.0
        %v794 = vmax.f32 %v762, 0.0
        %v795 = vmax.f32 %v763, 0.0
        %v796 = vmax.f32 %v764, 0.0
        %v797 = vmax.f32 %v765, 0.0
        %v798 = vmax.f32 %v766, 0.0
        %v799 = vmax.f32 %v767, 0.0
        %v800 = vmax.f32 %v768, 0.0
        %v801 = vpack.c.bf16 %v770, %v769
        %v802 = vpack.c.bf16 %v772, %v771
        %v803 = vpack.c.bf16 %v774, %v773
        %v804 = vpack.c.bf16 %v776, %v775
        %v805 = vpack.c.bf16 %v778, %v777
        %v806 = vpack.c.bf16 %v780, %v779
        %v807 = vpack.c.bf16 %v782, %v781
        %v808 = vpack.c.bf16 %v784, %v783
        %v809 = vpack.c.bf16 %v786, %v785
        %v810 = vpack.c.bf16 %v788, %v787
        %v811 = vpack.c.bf16 %v790, %v789
        %v812 = vpack.c.bf16 %v792, %v791
        %v813 = vpack.c.bf16 %v794, %v793
        %v814 = vpack.c.bf16 %v796, %v795
        %v815 = vpack.c.bf16 %v798, %v797
        %v816 = vpack.c.bf16 %v800, %v799
        %817 = vst [vmem:[#allocation2] sm:$0xff] 0
        %818 = vst [vmem:[#allocation2 + $0x8] sm:$0xff] 0
        %819 = vst [vmem:[#allocation2 + $0x10] sm:$0xff] 0
        %s820 = scalar_lea.vmem [#allocation2], 408
        %821 = vst [vmem:[%s820] sm:$0xff] 0
        %822 = vst [vmem:[%s820 + $0x8] sm:$0xff] 0
        %823 = vst [vmem:[%s820 + $0x10] sm:$0xff] 0
        %s824 = scalar_lea.vmem [#allocation2], 24
        %825 = vst [vmem:[%s824 + $0x8] sm:$0xff] %v801
        %826 = vst [vmem:[%s824 + $0x20] sm:$0xff] %v802
        %827 = vst [vmem:[%s824 + $0x38] sm:$0xff] %v803
        %828 = vst [vmem:[%s824 + $0x50] sm:$0xff] %v804
        %829 = vst [vmem:[%s824 + $0x68] sm:$0xff] %v805
        %830 = vst [vmem:[%s824 + $0x80] sm:$0xff] %v806
        %831 = vst [vmem:[%s824 + $0x98] sm:$0xff] %v807
        %832 = vst [vmem:[%s824 + $0xb0] sm:$0xff] %v808
        %833 = vst [vmem:[%s824 + $0xc8] sm:$0xff] %v809
        %834 = vst [vmem:[%s824 + $0xe0] sm:$0xff] %v810
        %835 = vst [vmem:[%s824 + $0xf8] sm:$0xff] %v811
        %836 = vst [vmem:[%s824 + $0x110] sm:$0xff] %v812
        %837 = vst [vmem:[%s824 + $0x128] sm:$0xff] %v813
        %838 = vst [vmem:[%s824 + $0x140] sm:$0xff] %v814
        %839 = vst [vmem:[%s824 + $0x158] sm:$0xff] %v815
        %840 = vst [vmem:[%s824 + $0x170] sm:$0xff] %v816
        %vm841 = vcmask 1040384
        %vm842 = vsmask.f32 256
        %vm843 = vmand %vm841, %vm842
        %v844 = vld [vmem:[%s824] sm:$0x1]
        %v845 = vsel %vm843, 0, %v844
        %846 = vst [vmem:[%s824] sm:$0x1] %v845
        %v847 = vld [vmem:[%s824 + $0x18] sm:$0x1]
        %v848 = vsel %vm843, 0, %v847
        %849 = vst [vmem:[%s824 + $0x18] sm:$0x1] %v848
        %v850 = vld [vmem:[%s824 + $0x30] sm:$0x1]
        %v851 = vsel %vm843, 0, %v850
        %852 = vst [vmem:[%s824 + $0x30] sm:$0x1] %v851
        %v853 = vld [vmem:[%s824 + $0x48] sm:$0x1]
        %v854 = vsel %vm843, 0, %v853
        %855 = vst [vmem:[%s824 + $0x48] sm:$0x1] %v854
        %v856 = vld [vmem:[%s824 + $0x60] sm:$0x1]
        %v857 = vsel %vm843, 0, %v856
        %858 = vst [vmem:[%s824 + $0x60] sm:$0x1] %v857
        %v859 = vld [vmem:[%s824 + $0x78] sm:$0x1]
        %v860 = vsel %vm843, 0, %v859
        %861 = vst [vmem:[%s824 + $0x78] sm:$0x1] %v860
        %v862 = vld [vmem:[%s824 + $0x90] sm:$0x1]
        %v863 = vsel %vm843, 0, %v862
        %864 = vst [vmem:[%s824 + $0x90] sm:$0x1] %v863
        %v865 = vld [vmem:[%s824 + $0xa8] sm:$0x1]
        %v866 = vsel %vm843, 0, %v865
        %867 = vst [vmem:[%s824 + $0xa8] sm:$0x1] %v866
        %v868 = vld [vmem:[%s824 + $0xc0] sm:$0x1]
        %v869 = vsel %vm843, 0, %v868
        %870 = vst [vmem:[%s824 + $0xc0] sm:$0x1] %v869
        %v871 = vld [vmem:[%s824 + $0xd8] sm:$0x1]
        %v872 = vsel %vm843, 0, %v871
        %873 = vst [vmem:[%s824 + $0xd8] sm:$0x1] %v872
        %v874 = vld [vmem:[%s824 + $0xf0] sm:$0x1]
        %v875 = vsel %vm843, 0, %v874
        %876 = vst [vmem:[%s824 + $0xf0] sm:$0x1] %v875
        %v877 = vld [vmem:[%s824 + $0x108] sm:$0x1]
        %v878 = vsel %vm843, 0, %v877
        %879 = vst [vmem:[%s824 + $0x108] sm:$0x1] %v878
        %v880 = vld [vmem:[%s824 + $0x120] sm:$0x1]
        %v881 = vsel %vm843, 0, %v880
        %882 = vst [vmem:[%s824 + $0x120] sm:$0x1] %v881
        %v883 = vld [vmem:[%s824 + $0x138] sm:$0x1]
        %v884 = vsel %vm843, 0, %v883
        %885 = vst [vmem:[%s824 + $0x138] sm:$0x1] %v884
        %v886 = vld [vmem:[%s824 + $0x150] sm:$0x1]
        %v887 = vsel %vm843, 0, %v886
        %888 = vst [vmem:[%s824 + $0x150] sm:$0x1] %v887
        %v889 = vld [vmem:[%s824 + $0x168] sm:$0x1]
        %v890 = vsel %vm843, 0, %v889
        %891 = vst [vmem:[%s824 + $0x168] sm:$0x1] %v890
        %v893 = vshrl.u32 %v801, 16
        %v895 = vrot.slane %v893, 7
        %v896 = vshll.u32 %v801, 16
        %v898 = vor.u32 %v895, %v896
        %v900 = vshrl.u32 %v802, 16
        %v902 = vrot.slane %v900, 7
        %v903 = vshll.u32 %v802, 16
        %v905 = vor.u32 %v902, %v903
        %v907 = vshrl.u32 %v803, 16
        %v909 = vrot.slane %v907, 7
        %v910 = vshll.u32 %v803, 16
        %v912 = vor.u32 %v909, %v910
        %v914 = vshrl.u32 %v804, 16
        %v916 = vrot.slane %v914, 7
        %v917 = vshll.u32 %v804, 16
        %v919 = vor.u32 %v916, %v917
        %v921 = vshrl.u32 %v805, 16
        %v923 = vrot.slane %v921, 7
        %v924 = vshll.u32 %v805, 16
        %v926 = vor.u32 %v923, %v924
        %v928 = vshrl.u32 %v806, 16
        %v930 = vrot.slane %v928, 7
        %v931 = vshll.u32 %v806, 16
        %v933 = vor.u32 %v930, %v931
        %v935 = vshrl.u32 %v807, 16
        %v937 = vrot.slane %v935, 7
        %v938 = vshll.u32 %v807, 16
        %v940 = vor.u32 %v937, %v938
        %v942 = vshrl.u32 %v808, 16
        %v944 = vrot.slane %v942, 7
        %v945 = vshll.u32 %v808, 16
        %v947 = vor.u32 %v944, %v945
        %v949 = vshrl.u32 %v809, 16
        %v951 = vrot.slane %v949, 7
        %v952 = vshll.u32 %v809, 16
        %v954 = vor.u32 %v951, %v952
        %v956 = vshrl.u32 %v810, 16
        %v958 = vrot.slane %v956, 7
        %v959 = vshll.u32 %v810, 16
        %v961 = vor.u32 %v958, %v959
        %v963 = vshrl.u32 %v811, 16
        %v965 = vrot.slane %v963, 7
        %v966 = vshll.u32 %v811, 16
        %v968 = vor.u32 %v965, %v966
        %v970 = vshrl.u32 %v812, 16
        %v972 = vrot.slane %v970, 7
        %v973 = vshll.u32 %v812, 16
        %v975 = vor.u32 %v972, %v973
        %v977 = vshrl.u32 %v813, 16
        %v979 = vrot.slane %v977, 7
        %v980 = vshll.u32 %v813, 16
        %v982 = vor.u32 %v979, %v980
        %v984 = vshrl.u32 %v814, 16
        %v986 = vrot.slane %v984, 7
        %v987 = vshll.u32 %v814, 16
        %v989 = vor.u32 %v986, %v987
        %v991 = vshrl.u32 %v815, 16
        %v993 = vrot.slane %v991, 7
        %v994 = vshll.u32 %v815, 16
        %v996 = vor.u32 %v993, %v994
        %v998 = vshrl.u32 %v816, 16
        %v1000 = vrot.slane %v998, 7
        %v1001 = vshll.u32 %v816, 16
        %v1003 = vor.u32 %v1000, %v1001
        %vm1020 = vcmask 1047552
        %vm1021 = vsmask.f32 7938
        %vm1022 = vmand %vm1020, %vm1021
        %v1023 = vld [vmem:[%s824] sm:$0xff]
        %v1024 = vsel %vm1022, %v898, %v1023
        %1025 = vst [vmem:[%s824] sm:$0xff] %v1024
        %v1026 = vld [vmem:[%s824 + $0x18] sm:$0xff]
        %v1027 = vsel %vm1022, %v905, %v1026
        %1028 = vst [vmem:[%s824 + $0x18] sm:$0xff] %v1027
        %v1029 = vld [vmem:[%s824 + $0x30] sm:$0xff]
        %v1030 = vsel %vm1022, %v912, %v1029
        %1031 = vst [vmem:[%s824 + $0x30] sm:$0xff] %v1030
        %v1032 = vld [vmem:[%s824 + $0x48] sm:$0xff]
        %v1033 = vsel %vm1022, %v919, %v1032
        %1034 = vst [vmem:[%s824 + $0x48] sm:$0xff] %v1033
        %v1035 = vld [vmem:[%s824 + $0x60] sm:$0xff]
        %v1036 = vsel %vm1022, %v926, %v1035
        %1037 = vst [vmem:[%s824 + $0x60] sm:$0xff] %v1036
        %v1038 = vld [vmem:[%s824 + $0x78] sm:$0xff]
        %v1039 = vsel %vm1022, %v933, %v1038
        %1040 = vst [vmem:[%s824 + $0x78] sm:$0xff] %v1039
        %v1041 = vld [vmem:[%s824 + $0x90] sm:$0xff]
        %v1042 = vsel %vm1022, %v940, %v1041
        %1043 = vst [vmem:[%s824 + $0x90] sm:$0xff] %v1042
        %v1044 = vld [vmem:[%s824 + $0xa8] sm:$0xff]
        %v1045 = vsel %vm1022, %v947, %v1044
        %1046 = vst [vmem:[%s824 + $0xa8] sm:$0xff] %v1045
        %v1047 = vld [vmem:[%s824 + $0xc0] sm:$0xff]
        %v1048 = vsel %vm1022, %v954, %v1047
        %1049 = vst [vmem:[%s824 + $0xc0] sm:$0xff] %v1048
        %v1050 = vld [vmem:[%s824 + $0xd8] sm:$0xff]
        %v1051 = vsel %vm1022, %v961, %v1050
        %1052 = vst [vmem:[%s824 + $0xd8] sm:$0xff] %v1051
        %v1053 = vld [vmem:[%s824 + $0xf0] sm:$0xff]
        %v1054 = vsel %vm1022, %v968, %v1053
        %1055 = vst [vmem:[%s824 + $0xf0] sm:$0xff] %v1054
        %v1056 = vld [vmem:[%s824 + $0x108] sm:$0xff]
        %v1057 = vsel %vm1022, %v975, %v1056
        %1058 = vst [vmem:[%s824 + $0x108] sm:$0xff] %v1057
        %v1059 = vld [vmem:[%s824 + $0x120] sm:$0xff]
        %v1060 = vsel %vm1022, %v982, %v1059
        %1061 = vst [vmem:[%s824 + $0x120] sm:$0xff] %v1060
        %v1062 = vld [vmem:[%s824 + $0x138] sm:$0xff]
        %v1063 = vsel %vm1022, %v989, %v1062
        %1064 = vst [vmem:[%s824 + $0x138] sm:$0xff] %v1063
        %v1065 = vld [vmem:[%s824 + $0x150] sm:$0xff]
        %v1066 = vsel %vm1022, %v996, %v1065
        %1067 = vst [vmem:[%s824 + $0x150] sm:$0xff] %v1066
        %v1068 = vld [vmem:[%s824 + $0x168] sm:$0xff]
        %v1069 = vsel %vm1022, %v1003, %v1068
        %1070 = vst [vmem:[%s824 + $0x168] sm:$0xff] %v1069
        %v1071 = vrot.slane %v896, 1
        %v1072 = vor.u32 %v893, %v1071
        %v1073 = vrot.slane %v903, 1
        %v1074 = vor.u32 %v900, %v1073
        %v1075 = vrot.slane %v910, 1
        %v1076 = vor.u32 %v907, %v1075
        %v1077 = vrot.slane %v917, 1
        %v1078 = vor.u32 %v914, %v1077
        %v1079 = vrot.slane %v924, 1
        %v1080 = vor.u32 %v921, %v1079
        %v1081 = vrot.slane %v931, 1
        %v1082 = vor.u32 %v928, %v1081
        %v1083 = vrot.slane %v938, 1
        %v1084 = vor.u32 %v935, %v1083
        %v1085 = vrot.slane %v945, 1
        %v1086 = vor.u32 %v942, %v1085
        %v1087 = vrot.slane %v952, 1
        %v1088 = vor.u32 %v949, %v1087
        %v1089 = vrot.slane %v959, 1
        %v1090 = vor.u32 %v956, %v1089
        %v1091 = vrot.slane %v966, 1
        %v1092 = vor.u32 %v963, %v1091
        %v1093 = vrot.slane %v973, 1
        %v1094 = vor.u32 %v970, %v1093
        %v1095 = vrot.slane %v980, 1
        %v1096 = vor.u32 %v977, %v1095
        %v1097 = vrot.slane %v987, 1
        %v1098 = vor.u32 %v984, %v1097
        %v1099 = vrot.slane %v994, 1
        %v1100 = vor.u32 %v991, %v1099
        %v1101 = vrot.slane %v1001, 1
        %v1102 = vor.u32 %v998, %v1101
        %vm1119 = vsmask.f32 7424
        %vm1120 = vmand %vm1020, %vm1119
        %v1121 = vld [vmem:[%s824 + $0x10] sm:$0xff]
        %v1122 = vsel %vm1120, %v1072, %v1121
        %1123 = vst [vmem:[%s824 + $0x10] sm:$0xff] %v1122
        %v1124 = vld [vmem:[%s824 + $0x28] sm:$0xff]
        %v1125 = vsel %vm1120, %v1074, %v1124
        %1126 = vst [vmem:[%s824 + $0x28] sm:$0xff] %v1125
        %v1127 = vld [vmem:[%s824 + $0x40] sm:$0xff]
        %v1128 = vsel %vm1120, %v1076, %v1127
        %1129 = vst [vmem:[%s824 + $0x40] sm:$0xff] %v1128
        %v1130 = vld [vmem:[%s824 + $0x58] sm:$0xff]
        %v1131 = vsel %vm1120, %v1078, %v1130
        %1132 = vst [vmem:[%s824 + $0x58] sm:$0xff] %v1131
        %v1133 = vld [vmem:[%s824 + $0x70] sm:$0xff]
        %v1134 = vsel %vm1120, %v1080, %v1133
        %1135 = vst [vmem:[%s824 + $0x70] sm:$0xff] %v1134
        %v1136 = vld [vmem:[%s824 + $0x88] sm:$0xff]
        %v1137 = vsel %vm1120, %v1082, %v1136
        %1138 = vst [vmem:[%s824 + $0x88] sm:$0xff] %v1137
        %v1139 = vld [vmem:[%s824 + $0xa0] sm:$0xff]
        %v1140 = vsel %vm1120, %v1084, %v1139
        %1141 = vst [vmem:[%s824 + $0xa0] sm:$0xff] %v1140
        %v1142 = vld [vmem:[%s824 + $0xb8] sm:$0xff]
        %v1143 = vsel %vm1120, %v1086, %v1142
        %1144 = vst [vmem:[%s824 + $0xb8] sm:$0xff] %v1143
        %v1145 = vld [vmem:[%s824 + $0xd0] sm:$0xff]
        %v1146 = vsel %vm1120, %v1088, %v1145
        %1147 = vst [vmem:[%s824 + $0xd0] sm:$0xff] %v1146
        %v1148 = vld [vmem:[%s824 + $0xe8] sm:$0xff]
        %v1149 = vsel %vm1120, %v1090, %v1148
        %1150 = vst [vmem:[%s824 + $0xe8] sm:$0xff] %v1149
        %v1151 = vld [vmem:[%s824 + $0x100] sm:$0xff]
        %v1152 = vsel %vm1120, %v1092, %v1151
        %1153 = vst [vmem:[%s824 + $0x100] sm:$0xff] %v1152
        %v1154 = vld [vmem:[%s824 + $0x118] sm:$0xff]
        %v1155 = vsel %vm1120, %v1094, %v1154
        %1156 = vst [vmem:[%s824 + $0x118] sm:$0xff] %v1155
        %v1157 = vld [vmem:[%s824 + $0x130] sm:$0xff]
        %v1158 = vsel %vm1120, %v1096, %v1157
        %1159 = vst [vmem:[%s824 + $0x130] sm:$0xff] %v1158
        %v1160 = vld [vmem:[%s824 + $0x148] sm:$0xff]
        %v1161 = vsel %vm1120, %v1098, %v1160
        %1162 = vst [vmem:[%s824 + $0x148] sm:$0xff] %v1161
        %v1163 = vld [vmem:[%s824 + $0x160] sm:$0xff]
        %v1164 = vsel %vm1120, %v1100, %v1163
        %1165 = vst [vmem:[%s824 + $0x160] sm:$0xff] %v1164
        %v1166 = vld [vmem:[%s824 + $0x178] sm:$0xff]
        %v1167 = vsel %vm1120, %v1102, %v1166
        %1168 = vst [vmem:[%s824 + $0x178] sm:$0xff] %v1167
        %vm1169 = vcmask 1047559
        %vm1170 = vsmask.f32 7966
        %vm1171 = vmand %vm1169, %vm1170
        %v1172 = vld [vmem:[%s824 + $0x10] sm:$0x80]
        %v1173 = vsel %vm1171, 0, %v1172
        %1174 = vst [vmem:[%s824 + $0x10] sm:$0x80] %v1173
        %v1175 = vld [vmem:[%s824 + $0x28] sm:$0x80]
        %v1176 = vsel %vm1171, 0, %v1175
        %1177 = vst [vmem:[%s824 + $0x28] sm:$0x80] %v1176
        %v1178 = vld [vmem:[%s824 + $0x40] sm:$0x80]
        %v1179 = vsel %vm1171, 0, %v1178
        %1180 = vst [vmem:[%s824 + $0x40] sm:$0x80] %v1179
        %v1181 = vld [vmem:[%s824 + $0x58] sm:$0x80]
        %v1182 = vsel %vm1171, 0, %v1181
        %1183 = vst [vmem:[%s824 + $0x58] sm:$0x80] %v1182
        %v1184 = vld [vmem:[%s824 + $0x70] sm:$0x80]
        %v1185 = vsel %vm1171, 0, %v1184
        %1186 = vst [vmem:[%s824 + $0x70] sm:$0x80] %v1185
        %v1187 = vld [vmem:[%s824 + $0x88] sm:$0x80]
        %v1188 = vsel %vm1171, 0, %v1187
        %1189 = vst [vmem:[%s824 + $0x88] sm:$0x80] %v1188
        %v1190 = vld [vmem:[%s824 + $0xa0] sm:$0x80]
        %v1191 = vsel %vm1171, 0, %v1190
        %1192 = vst [vmem:[%s824 + $0xa0] sm:$0x80] %v1191
        %v1193 = vld [vmem:[%s824 + $0xb8] sm:$0x80]
        %v1194 = vsel %vm1171, 0, %v1193
        %1195 = vst [vmem:[%s824 + $0xb8] sm:$0x80] %v1194
        %v1196 = vld [vmem:[%s824 + $0xd0] sm:$0x80]
        %v1197 = vsel %vm1171, 0, %v1196
        %1198 = vst [vmem:[%s824 + $0xd0] sm:$0x80] %v1197
        %v1199 = vld [vmem:[%s824 + $0xe8] sm:$0x80]
        %v1200 = vsel %vm1171, 0, %v1199
        %1201 = vst [vmem:[%s824 + $0xe8] sm:$0x80] %v1200
        %v1202 = vld [vmem:[%s824 + $0x100] sm:$0x80]
        %v1203 = vsel %vm1171, 0, %v1202
        %1204 = vst [vmem:[%s824 + $0x100] sm:$0x80] %v1203
        %v1205 = vld [vmem:[%s824 + $0x118] sm:$0x80]
        %v1206 = vsel %vm1171, 0, %v1205
        %1207 = vst [vmem:[%s824 + $0x118] sm:$0x80] %v1206
        %v1208 = vld [vmem:[%s824 + $0x130] sm:$0x80]
        %v1209 = vsel %vm1171, 0, %v1208
        %1210 = vst [vmem:[%s824 + $0x130] sm:$0x80] %v1209
        %v1211 = vld [vmem:[%s824 + $0x148] sm:$0x80]
        %v1212 = vsel %vm1171, 0, %v1211
        %1213 = vst [vmem:[%s824 + $0x148] sm:$0x80] %v1212
        %v1214 = vld [vmem:[%s824 + $0x160] sm:$0x80]
        %v1215 = vsel %vm1171, 0, %v1214
        %1216 = vst [vmem:[%s824 + $0x160] sm:$0x80] %v1215
        %v1217 = vld [vmem:[%s824 + $0x178] sm:$0x80]
        %v1218 = vsel %vm1171, 0, %v1217
        %1219 = vst [vmem:[%s824 + $0x178] sm:$0x80] %v1218
        %v1220 = vld [vmem:[#allocation2] sm:$0xff]
        %v1221 = vld [vmem:[#allocation2 + $0x8] sm:$0xff]
        %v1222 = vld [vmem:[#allocation2 + $0x10] sm:$0xff]
        %v1223 = vld [vmem:[#allocation2 + $0x18] sm:$0xff]
        %v1224 = vld [vmem:[#allocation2 + $0x20] sm:$0xff]
        %v1225 = vld [vmem:[#allocation2 + $0x28] sm:$0xff]
        %v1226 = vld [vmem:[#allocation2 + $0x30] sm:$0xff]
        %v1227 = vld [vmem:[#allocation2 + $0x38] sm:$0xff]
        %v1228 = vld [vmem:[#allocation2 + $0x40] sm:$0xff]
        %v1229 = vld [vmem:[#allocation2 + $0x48] sm:$0xff]
        %v1230 = vld [vmem:[#allocation2 + $0x50] sm:$0xff]
        %v1231 = vld [vmem:[#allocation2 + $0x58] sm:$0xff]
        %v1232 = vld [vmem:[#allocation2 + $0x60] sm:$0xff]
        %v1233 = vld [vmem:[#allocation2 + $0x68] sm:$0xff]
        %v1234 = vld [vmem:[#allocation2 + $0x70] sm:$0xff]
        %v1235 = vld [vmem:[#allocation2 + $0x78] sm:$0xff]
        %v1236 = vld [vmem:[#allocation2 + $0x80] sm:$0xff]
        %v1237 = vld [vmem:[#allocation2 + $0x88] sm:$0xff]
        %v1238 = vld [vmem:[#allocation2 + $0x90] sm:$0xff]
        %v1239 = vld [vmem:[#allocation2 + $0x98] sm:$0xff]
        %v1240 = vld [vmem:[#allocation2 + $0xa0] sm:$0xff]
        %v1241 = vld [vmem:[#allocation2 + $0xa8] sm:$0xff]
        %v1242 = vld [vmem:[#allocation2 + $0xb0] sm:$0xff]
        %v1243 = vld [vmem:[#allocation2 + $0xb8] sm:$0xff]
        %v1244 = vld [vmem:[#allocation2 + $0xc0] sm:$0xff]
        %v1245 = vld [vmem:[#allocation2 + $0xc8] sm:$0xff]
        %v1246 = vld [vmem:[#allocation2 + $0xd0] sm:$0xff]
        %v1247 = vld [vmem:[#allocation2 + $0xd8] sm:$0xff]
        %v1248 = vld [vmem:[#allocation2 + $0xe0] sm:$0xff]
        %v1249 = vld [vmem:[#allocation2 + $0xe8] sm:$0xff]
        %v1250 = vld [vmem:[#allocation2 + $0xf0] sm:$0xff]
        %v1251 = vld [vmem:[#allocation2 + $0xf8] sm:$0xff]
        %v1252 = vld [vmem:[#allocation2 + $0x100] sm:$0xff]
        %v1253 = vld [vmem:[#allocation2 + $0x108] sm:$0xff]
        %v1254 = vld [vmem:[#allocation2 + $0x110] sm:$0xff]
        %v1255 = vld [vmem:[#allocation2 + $0x118] sm:$0xff]
        %v1256 = vld [vmem:[#allocation2 + $0x120] sm:$0xff]
        %v1257 = vld [vmem:[#allocation2 + $0x128] sm:$0xff]
        %v1258 = vld [vmem:[#allocation2 + $0x130] sm:$0xff]
        %v1259 = vld [vmem:[#allocation2 + $0x138] sm:$0xff]
        %v1260 = vld [vmem:[#allocation2 + $0x140] sm:$0xff]
        %v1261 = vld [vmem:[#allocation2 + $0x148] sm:$0xff]
        %v1262 = vld [vmem:[#allocation2 + $0x150] sm:$0xff]
        %v1263 = vld [vmem:[#allocation2 + $0x158] sm:$0xff]
        %v1264 = vld [vmem:[#allocation2 + $0x160] sm:$0xff]
        %v1265 = vld [vmem:[#allocation2 + $0x168] sm:$0xff]
        %v1266 = vld [vmem:[#allocation2 + $0x170] sm:$0xff]
        %v1267 = vld [vmem:[#allocation2 + $0x178] sm:$0xff]
        %v1268 = vld [vmem:[#allocation8] sm:$0xf]
        %v1269 = vld [vmem:[#allocation8 + $0x4] sm:$0xf]
        %v1270 = vld [vmem:[#allocation8 + $0x8] sm:$0xf]
        %v1271 = vld [vmem:[#allocation8 + $0xc] sm:$0xf]
        %v1272 = vld [vmem:[#allocation8 + $0x10] sm:$0xf]
        %v1273 = vld [vmem:[#allocation8 + $0x14] sm:$0xf]
        %v1274 = vld [vmem:[#allocation8 + $0x18] sm:$0xf]
        %v1275 = vld [vmem:[#allocation8 + $0x1c] sm:$0xf]
        %v1276 = vld [vmem:[#allocation8 + $0x20] sm:$0xf]
        %v1277 = vld [vmem:[#allocation8 + $0x24] sm:$0xf]
        %v1278 = vld [vmem:[#allocation8 + $0x28] sm:$0xf]
        %v1279 = vld [vmem:[#allocation8 + $0x2c] sm:$0xf]
        %v1280 = vld [vmem:[#allocation8 + $0x30] sm:$0xf]
        %v1281 = vld [vmem:[#allocation8 + $0x34] sm:$0xf]
        %v1282 = vld [vmem:[#allocation8 + $0x38] sm:$0xf]
        %v1283 = vld [vmem:[#allocation8 + $0x3c] sm:$0xf]
        %v1284 = vld [vmem:[#allocation8 + $0x40] sm:$0xf]
        %v1285 = vld [vmem:[#allocation8 + $0x44] sm:$0xf]
        %v1286 = vld [vmem:[#allocation8 + $0x48] sm:$0xf]
        %v1287 = vld [vmem:[#allocation8 + $0x4c] sm:$0xf]
        %v1288 = vld [vmem:[#allocation8 + $0x50] sm:$0xf]
        %v1289 = vld [vmem:[#allocation8 + $0x54] sm:$0xf]
        %v1290 = vld [vmem:[#allocation8 + $0x58] sm:$0xf]
        %v1291 = vld [vmem:[#allocation8 + $0x5c] sm:$0xf]
        %v1292 = vld [vmem:[#allocation8 + $0x60] sm:$0xf]
        %v1293 = vld [vmem:[#allocation8 + $0x64] sm:$0xf]
        %v1294 = vld [vmem:[#allocation8 + $0x68] sm:$0xf]
        %v1295 = vld [vmem:[#allocation8 + $0x6c] sm:$0xf]
        %v1296 = vld [vmem:[#allocation8 + $0x70] sm:$0xf]
        %v1297 = vld [vmem:[#allocation8 + $0x74] sm:$0xf]
        %v1298 = vld [vmem:[#allocation8 + $0x78] sm:$0xf]
        %v1299 = vld [vmem:[#allocation8 + $0x7c] sm:$0xf]
        %v1300 = vld [vmem:[#allocation8 + $0x80] sm:$0xf]
        %v1301 = vld [vmem:[#allocation8 + $0x84] sm:$0xf]
        %v1302 = vld [vmem:[#allocation8 + $0x88] sm:$0xf]
        %v1303 = vld [vmem:[#allocation8 + $0x8c] sm:$0xf]
        %v1304 = vld [vmem:[#allocation8 + $0x90] sm:$0xf]
        %v1305 = vld [vmem:[#allocation8 + $0x94] sm:$0xf]
        %v1306 = vld [vmem:[#allocation8 + $0x98] sm:$0xf]
        %v1307 = vld [vmem:[#allocation8 + $0x9c] sm:$0xf]
        %v1308 = vld [vmem:[#allocation8 + $0xa0] sm:$0xf]
        %v1309 = vld [vmem:[#allocation8 + $0xa4] sm:$0xf]
        %v1310 = vld [vmem:[#allocation8 + $0xa8] sm:$0xf]
        %v1311 = vld [vmem:[#allocation8 + $0xac] sm:$0xf]
        %v1312 = vld [vmem:[#allocation8 + $0xb0] sm:$0xf]
        %v1313 = vld [vmem:[#allocation8 + $0xb4] sm:$0xf]
        %v1314 = vld [vmem:[#allocation8 + $0xb8] sm:$0xf]
        %v1315 = vld [vmem:[#allocation8 + $0xbc] sm:$0xf]
        %v1316 = vld [vmem:[%s824] sm:$0xff]
        %v1317 = vld [vmem:[%s824 + $0x8] sm:$0xff]
        %v1318 = vld [vmem:[%s824 + $0x10] sm:$0xff]
        %v1319 = vld [vmem:[%s824 + $0x18] sm:$0xff]
        %v1320 = vld [vmem:[%s824 + $0x20] sm:$0xff]
        %v1321 = vld [vmem:[%s824 + $0x28] sm:$0xff]
        %v1322 = vld [vmem:[%s824 + $0x30] sm:$0xff]
        %v1323 = vld [vmem:[%s824 + $0x38] sm:$0xff]
        %v1324 = vld [vmem:[%s824 + $0x40] sm:$0xff]
        %v1325 = vld [vmem:[%s824 + $0x48] sm:$0xff]
        %v1326 = vld [vmem:[%s824 + $0x50] sm:$0xff]
        %v1327 = vld [vmem:[%s824 + $0x58] sm:$0xff]
        %v1328 = vld [vmem:[%s824 + $0x60] sm:$0xff]
        %v1329 = vld [vmem:[%s824 + $0x68] sm:$0xff]
        %v1330 = vld [vmem:[%s824 + $0x70] sm:$0xff]
        %v1331 = vld [vmem:[%s824 + $0x78] sm:$0xff]
        %v1332 = vld [vmem:[%s824 + $0x80] sm:$0xff]
        %v1333 = vld [vmem:[%s824 + $0x88] sm:$0xff]
        %v1334 = vld [vmem:[%s824 + $0x90] sm:$0xff]
        %v1335 = vld [vmem:[%s824 + $0x98] sm:$0xff]
        %v1336 = vld [vmem:[%s824 + $0xa0] sm:$0xff]
        %v1337 = vld [vmem:[%s824 + $0xa8] sm:$0xff]
        %v1338 = vld [vmem:[%s824 + $0xb0] sm:$0xff]
        %v1339 = vld [vmem:[%s824 + $0xb8] sm:$0xff]
        %v1340 = vld [vmem:[%s824 + $0xc0] sm:$0xff]
        %v1341 = vld [vmem:[%s824 + $0xc8] sm:$0xff]
        %v1342 = vld [vmem:[%s824 + $0xd0] sm:$0xff]
        %v1343 = vld [vmem:[%s824 + $0xd8] sm:$0xff]
        %v1344 = vld [vmem:[%s824 + $0xe0] sm:$0xff]
        %v1345 = vld [vmem:[%s824 + $0xe8] sm:$0xff]
        %v1346 = vld [vmem:[%s824 + $0xf0] sm:$0xff]
        %v1347 = vld [vmem:[%s824 + $0xf8] sm:$0xff]
        %v1348 = vld [vmem:[%s824 + $0x100] sm:$0xff]
        %v1349 = vld [vmem:[%s824 + $0x108] sm:$0xff]
        %v1350 = vld [vmem:[%s824 + $0x110] sm:$0xff]
        %v1351 = vld [vmem:[%s824 + $0x118] sm:$0xff]
        %v1352 = vld [vmem:[%s824 + $0x120] sm:$0xff]
        %v1353 = vld [vmem:[%s824 + $0x128] sm:$0xff]
        %v1354 = vld [vmem:[%s824 + $0x130] sm:$0xff]
        %v1355 = vld [vmem:[%s824 + $0x138] sm:$0xff]
        %v1356 = vld [vmem:[%s824 + $0x140] sm:$0xff]
        %v1357 = vld [vmem:[%s824 + $0x148] sm:$0xff]
        %v1358 = vld [vmem:[%s824 + $0x150] sm:$0xff]
        %v1359 = vld [vmem:[%s824 + $0x158] sm:$0xff]
        %v1360 = vld [vmem:[%s824 + $0x160] sm:$0xff]
        %v1361 = vld [vmem:[%s824 + $0x168] sm:$0xff]
        %v1362 = vld [vmem:[%s824 + $0x170] sm:$0xff]
        %v1363 = vld [vmem:[%s824 + $0x178] sm:$0xff]
        %s1364 = scalar_lea.vmem [#allocation8], 192
        %v1365 = vld [vmem:[%s1364] sm:$0xf]
        %v1366 = vld [vmem:[%s1364 + $0x4] sm:$0xf]
        %v1367 = vld [vmem:[%s1364 + $0x8] sm:$0xf]
        %v1368 = vld [vmem:[%s1364 + $0xc] sm:$0xf]
        %v1369 = vld [vmem:[%s1364 + $0x10] sm:$0xf]
        %v1370 = vld [vmem:[%s1364 + $0x14] sm:$0xf]
        %v1371 = vld [vmem:[%s1364 + $0x18] sm:$0xf]
        %v1372 = vld [vmem:[%s1364 + $0x1c] sm:$0xf]
        %v1373 = vld [vmem:[%s1364 + $0x20] sm:$0xf]
        %v1374 = vld [vmem:[%s1364 + $0x24] sm:$0xf]
        %v1375 = vld [vmem:[%s1364 + $0x28] sm:$0xf]
        %v1376 = vld [vmem:[%s1364 + $0x2c] sm:$0xf]
        %v1377 = vld [vmem:[%s1364 + $0x30] sm:$0xf]
        %v1378 = vld [vmem:[%s1364 + $0x34] sm:$0xf]
        %v1379 = vld [vmem:[%s1364 + $0x38] sm:$0xf]
        %v1380 = vld [vmem:[%s1364 + $0x3c] sm:$0xf]
        %v1381 = vld [vmem:[%s1364 + $0x40] sm:$0xf]
        %v1382 = vld [vmem:[%s1364 + $0x44] sm:$0xf]
        %v1383 = vld [vmem:[%s1364 + $0x48] sm:$0xf]
        %v1384 = vld [vmem:[%s1364 + $0x4c] sm:$0xf]
        %v1385 = vld [vmem:[%s1364 + $0x50] sm:$0xf]
        %v1386 = vld [vmem:[%s1364 + $0x54] sm:$0xf]
        %v1387 = vld [vmem:[%s1364 + $0x58] sm:$0xf]
        %v1388 = vld [vmem:[%s1364 + $0x5c] sm:$0xf]
        %v1389 = vld [vmem:[%s1364 + $0x60] sm:$0xf]
        %v1390 = vld [vmem:[%s1364 + $0x64] sm:$0xf]
        %v1391 = vld [vmem:[%s1364 + $0x68] sm:$0xf]
        %v1392 = vld [vmem:[%s1364 + $0x6c] sm:$0xf]
        %v1393 = vld [vmem:[%s1364 + $0x70] sm:$0xf]
        %v1394 = vld [vmem:[%s1364 + $0x74] sm:$0xf]
        %v1395 = vld [vmem:[%s1364 + $0x78] sm:$0xf]
        %v1396 = vld [vmem:[%s1364 + $0x7c] sm:$0xf]
        %v1397 = vld [vmem:[%s1364 + $0x80] sm:$0xf]
        %v1398 = vld [vmem:[%s1364 + $0x84] sm:$0xf]
        %v1399 = vld [vmem:[%s1364 + $0x88] sm:$0xf]
        %v1400 = vld [vmem:[%s1364 + $0x8c] sm:$0xf]
        %v1401 = vld [vmem:[%s1364 + $0x90] sm:$0xf]
        %v1402 = vld [vmem:[%s1364 + $0x94] sm:$0xf]
        %v1403 = vld [vmem:[%s1364 + $0x98] sm:$0xf]
        %v1404 = vld [vmem:[%s1364 + $0x9c] sm:$0xf]
        %v1405 = vld [vmem:[%s1364 + $0xa0] sm:$0xf]
        %v1406 = vld [vmem:[%s1364 + $0xa4] sm:$0xf]
        %v1407 = vld [vmem:[%s1364 + $0xa8] sm:$0xf]
        %v1408 = vld [vmem:[%s1364 + $0xac] sm:$0xf]
        %v1409 = vld [vmem:[%s1364 + $0xb0] sm:$0xf]
        %v1410 = vld [vmem:[%s1364 + $0xb4] sm:$0xf]
        %v1411 = vld [vmem:[%s1364 + $0xb8] sm:$0xf]
        %v1412 = vld [vmem:[%s1364 + $0xbc] sm:$0xf]
        %v1461 = vunpack.c.l.b16 %v1365
        %v1462 = vunpack.c.l.b16 %v1366
        %v1463 = vunpack.c.l.b16 %v1367
        %v1464 = vunpack.c.l.b16 %v1368
        %v1465 = vunpack.c.l.b16 %v1369
        %v1466 = vunpack.c.l.b16 %v1370
        %v1467 = vunpack.c.l.b16 %v1371
        %v1468 = vunpack.c.l.b16 %v1372
        %v1469 = vunpack.c.l.b16 %v1373
        %v1470 = vunpack.c.l.b16 %v1374
        %v1471 = vunpack.c.l.b16 %v1375
        %v1472 = vunpack.c.l.b16 %v1376
        %v1473 = vunpack.c.l.b16 %v1377
        %v1474 = vunpack.c.l.b16 %v1378
        %v1475 = vunpack.c.l.b16 %v1379
        %v1476 = vunpack.c.l.b16 %v1380
        %v1477 = vunpack.c.l.b16 %v1381
        %v1478 = vunpack.c.l.b16 %v1382
        %v1479 = vunpack.c.l.b16 %v1383
        %v1480 = vunpack.c.l.b16 %v1384
        %v1481 = vunpack.c.l.b16 %v1385
        %v1482 = vunpack.c.l.b16 %v1386
        %v1483 = vunpack.c.l.b16 %v1387
        %v1484 = vunpack.c.l.b16 %v1388
        %v1485 = vunpack.c.l.b16 %v1389
        %v1486 = vunpack.c.l.b16 %v1390
        %v1487 = vunpack.c.l.b16 %v1391
        %v1488 = vunpack.c.l.b16 %v1392
        %v1489 = vunpack.c.l.b16 %v1393
        %v1490 = vunpack.c.l.b16 %v1394
        %v1491 = vunpack.c.l.b16 %v1395
        %v1492 = vunpack.c.l.b16 %v1396
        %v1493 = vunpack.c.l.b16 %v1397
        %v1494 = vunpack.c.l.b16 %v1398
        %v1495 = vunpack.c.l.b16 %v1399
        %v1496 = vunpack.c.l.b16 %v1400
        %v1497 = vunpack.c.l.b16 %v1401
        %v1498 = vunpack.c.l.b16 %v1402
        %v1499 = vunpack.c.l.b16 %v1403
        %v1500 = vunpack.c.l.b16 %v1404
        %v1501 = vunpack.c.l.b16 %v1405
        %v1502 = vunpack.c.l.b16 %v1406
        %v1503 = vunpack.c.l.b16 %v1407
        %v1504 = vunpack.c.l.b16 %v1408
        %v1505 = vunpack.c.l.b16 %v1409
        %v1506 = vunpack.c.l.b16 %v1410
        %v1507 = vunpack.c.l.b16 %v1411
        %v1508 = vunpack.c.l.b16 %v1412
        %v1509 = vpack.c.b16 %v1462, %v1461
        %v1510 = vpack.c.b16 %v1464, %v1463
        %v1511 = vpack.c.b16 %v1466, %v1465
        %v1512 = vpack.c.b16 %v1468, %v1467
        %v1513 = vpack.c.b16 %v1470, %v1469
        %v1514 = vpack.c.b16 %v1472, %v1471
        %v1515 = vpack.c.b16 %v1474, %v1473
        %v1516 = vpack.c.b16 %v1476, %v1475
        %v1517 = vpack.c.b16 %v1478, %v1477
        %v1518 = vpack.c.b16 %v1480, %v1479
        %v1519 = vpack.c.b16 %v1482, %v1481
        %v1520 = vpack.c.b16 %v1484, %v1483
        %v1521 = vpack.c.b16 %v1486, %v1485
        %v1522 = vpack.c.b16 %v1488, %v1487
        %v1523 = vpack.c.b16 %v1490, %v1489
        %v1524 = vpack.c.b16 %v1492, %v1491
        %v1525 = vpack.c.b16 %v1494, %v1493
        %v1526 = vpack.c.b16 %v1496, %v1495
        %v1527 = vpack.c.b16 %v1498, %v1497
        %v1528 = vpack.c.b16 %v1500, %v1499
        %v1529 = vpack.c.b16 %v1502, %v1501
        %v1530 = vpack.c.b16 %v1504, %v1503
        %v1531 = vpack.c.b16 %v1506, %v1505
        %v1532 = vpack.c.b16 %v1508, %v1507
        %1557 = vmatprep.subr.bf16.mxu0 0
        %1558 = vmatpush1.bf16.msra.mxu0 %v1509
        %1559 = vmatprep.subr.bf16.mxu0 0
        %1560 = vmatpush1.bf16.msra.mxu0 %v1510
        %1561 = vmatprep.subr.bf16.mxu0 0
        %1562 = vmatpush1.bf16.msra.mxu0 %v1511
        %1563 = vmatprep.subr.bf16.mxu0 0
        %1564 = vmatpush1.bf16.msra.mxu0 %v1512
        %1565 = vmatprep.subr.bf16.mxu0 0
        %1566 = vmatpush1.bf16.msra.mxu0 %v1513
        %1567 = vmatprep.subr.bf16.mxu0 0
        %1568 = vmatpush1.bf16.msra.mxu0 %v1514
        %1569 = vmatprep.subr.bf16.mxu0 0
        %1570 = vmatpush1.bf16.msra.mxu0 %v1515
        %1571 = vmatprep.subr.bf16.mxu0 0
        %1572 = vmatpush1.bf16.msra.mxu0 %v1516
        %1573 = vmatprep.subr.bf16.mxu0 0
        %1574 = vmatpush1.bf16.msra.mxu0 %v1517
        %1575 = vmatprep.subr.bf16.mxu0 0
        %1576 = vmatpush1.bf16.msra.mxu0 %v1518
        %1577 = vmatprep.subr.bf16.mxu0 0
        %1578 = vmatpush1.bf16.msra.mxu0 %v1519
        %1579 = vmatprep.subr.bf16.mxu0 0
        %1580 = vmatpush1.bf16.msra.mxu0 %v1520
        %1581 = vmatprep.subr.bf16.mxu0 0
        %1582 = vmatpush1.bf16.msra.mxu0 %v1521
        %1583 = vmatprep.subr.bf16.mxu0 0
        %1584 = vmatpush1.bf16.msra.mxu0 %v1522
        %1585 = vmatprep.subr.bf16.mxu0 0
        %1586 = vmatpush1.bf16.msra.mxu0 %v1523
        %1587 = vmatprep.subr.bf16.mxu0 0
        %1588 = vmatpush1.bf16.msra.mxu0 %v1524
        %1589 = vmatprep.mubr.bf16.mxu0 %v1317
        %1590 = vmatmul.mubr.bf16.gmra.mrb[0].mxu0 %v1316
        %v1591 = vpop.f32.mrb[0].mxu0
        %v1592 = vadd.f32 0.0, %v1591
        %v1593 = vpop.f32.mrb[0].mxu0
        %v1594 = vpop.f32.mrb[0].mxu0
        %v1595 = vadd.f32 0.0, %v1594
        %v1596 = vpop.f32.mrb[0].mxu0
        %1597 = vmatprep.mubr.bf16.mxu0 %v1320
        %1598 = vmatmul.mubr.bf16.gmra.mrb[0].mxu0 %v1319
        %v1599 = vpop.f32.mrb[0].mxu0
        %v1600 = vadd.f32 0.0, %v1599
        %v1601 = vpop.f32.mrb[0].mxu0
        %v1602 = vpop.f32.mrb[0].mxu0
        %v1603 = vadd.f32 0.0, %v1602
        %v1604 = vpop.f32.mrb[0].mxu0
        %1605 = vmatprep.mubr.bf16.mxu0 %v1323
        %1606 = vmatmul.mubr.bf16.gmra.mrb[0].mxu0 %v1322
        %v1607 = vpop.f32.mrb[0].mxu0
        %v1608 = vadd.f32 0.0, %v1607
        %v1609 = vpop.f32.mrb[0].mxu0
        %v1610 = vpop.f32.mrb[0].mxu0
        %v1611 = vadd.f32 0.0, %v1610
        %v1612 = vpop.f32.mrb[0].mxu0
        %1613 = vmatprep.mubr.bf16.mxu0 %v1326
        %1614 = vmatmul.mubr.bf16.gmra.mrb[0].mxu0 %v1325
        %v1615 = vpop.f32.mrb[0].mxu0
        %v1616 = vadd.f32 0.0, %v1615
        %v1617 = vpop.f32.mrb[0].mxu0
        %v1618 = vpop.f32.mrb[0].mxu0
        %v1619 = vadd.f32 0.0, %v1618
        %v1620 = vpop.f32.mrb[0].mxu0
        %1621 = vmatprep.mubr.bf16.mxu0 %v1329
        %1622 = vmatmul.mubr.bf16.gmra.mrb[0].mxu0 %v1328
        %v1623 = vpop.f32.mrb[0].mxu0
        %v1624 = vadd.f32 0.0, %v1623
        %v1625 = vpop.f32.mrb[0].mxu0
        %v1626 = vpop.f32.mrb[0].mxu0
        %v1627 = vadd.f32 0.0, %v1626
        %v1628 = vpop.f32.mrb[0].mxu0
        %1629 = vmatprep.mubr.bf16.mxu0 %v1332
        %1630 = vmatmul.mubr.bf16.gmra.mrb[0].mxu0 %v1331
        %v1631 = vpop.f32.mrb[0].mxu0
        %v1632 = vadd.f32 0.0, %v1631
        %v1633 = vpop.f32.mrb[0].mxu0
        %v1634 = vpop.f32.mrb[0].mxu0
        %v1635 = vadd.f32 0.0, %v1634
        %v1636 = vpop.f32.mrb[0].mxu0
        %1637 = vmatprep.mubr.bf16.mxu0 %v1335
        %1638 = vmatmul.mubr.bf16.gmra.mrb[0].mxu0 %v1334
        %v1639 = vpop.f32.mrb[0].mxu0
        %v1640 = vadd.f32 0.0, %v1639
        %v1641 = vpop.f32.mrb[0].mxu0
        %v1642 = vpop.f32.mrb[0].mxu0
        %v1643 = vadd.f32 0.0, %v1642
        %v1644 = vpop.f32.mrb[0].mxu0
        %1645 = vmatprep.mubr.bf16.mxu0 %v1338
        %1646 = vmatmul.mubr.bf16.gmra.mrb[0].mxu0 %v1337
        %v1647 = vpop.f32.mrb[0].mxu0
        %v1648 = vadd.f32 0.0, %v1647
        %v1649 = vpop.f32.mrb[0].mxu0
        %v1650 = vpop.f32.mrb[0].mxu0
        %v1651 = vadd.f32 0.0, %v1650
        %v1652 = vpop.f32.mrb[0].mxu0
        %1653 = vmatprep.mubr.bf16.mxu0 %v1341
        %1654 = vmatmul.mubr.bf16.gmra.mrb[0].mxu0 %v1340
        %v1655 = vpop.f32.mrb[0].mxu0
        %v1656 = vadd.f32 0.0, %v1655
        %v1657 = vpop.f32.mrb[0].mxu0
        %v1658 = vpop.f32.mrb[0].mxu0
        %v1659 = vadd.f32 0.0, %v1658
        %v1660 = vpop.f32.mrb[0].mxu0
        %1661 = vmatprep.mubr.bf16.mxu0 %v1344
        %1662 = vmatmul.mubr.bf16.gmra.mrb[0].mxu0 %v1343
        %v1663 = vpop.f32.mrb[0].mxu0
        %v1664 = vadd.f32 0.0, %v1663
        %v1665 = vpop.f32.mrb[0].mxu0
        %v1666 = vpop.f32.mrb[0].mxu0
        %v1667 = vadd.f32 0.0, %v1666
        %v1668 = vpop.f32.mrb[0].mxu0
        %1669 = vmatprep.mubr.bf16.mxu0 %v1347
        %1670 = vmatmul.mubr.bf16.gmra.mrb[0].mxu0 %v1346
        %v1671 = vpop.f32.mrb[0].mxu0
        %v1672 = vadd.f32 0.0, %v1671
        %v1673 = vpop.f32.mrb[0].mxu0
        %v1674 = vpop.f32.mrb[0].mxu0
        %v1675 = vadd.f32 0.0, %v1674
        %v1676 = vpop.f32.mrb[0].mxu0
        %1677 = vmatprep.mubr.bf16.mxu0 %v1350
        %1678 = vmatmul.mubr.bf16.gmra.mrb[0].mxu0 %v1349
        %v1679 = vpop.f32.mrb[0].mxu0
        %v1680 = vadd.f32 0.0, %v1679
        %v1681 = vpop.f32.mrb[0].mxu0
        %v1682 = vpop.f32.mrb[0].mxu0
        %v1683 = vadd.f32 0.0, %v1682
        %v1684 = vpop.f32.mrb[0].mxu0
        %1685 = vmatprep.mubr.bf16.mxu0 %v1353
        %1686 = vmatmul.mubr.bf16.gmra.mrb[0].mxu0 %v1352
        %v1687 = vpop.f32.mrb[0].mxu0
        %v1688 = vadd.f32 0.0, %v1687
        %v1689 = vpop.f32.mrb[0].mxu0
        %v1690 = vpop.f32.mrb[0].mxu0
        %v1691 = vadd.f32 0.0, %v1690
        %v1692 = vpop.f32.mrb[0].mxu0
        %1693 = vmatprep.mubr.bf16.mxu0 %v1356
        %1694 = vmatmul.mubr.bf16.gmra.mrb[0].mxu0 %v1355
        %v1695 = vpop.f32.mrb[0].mxu0
        %v1696 = vadd.f32 0.0, %v1695
        %v1697 = vpop.f32.mrb[0].mxu0
        %v1698 = vpop.f32.mrb[0].mxu0
        %v1699 = vadd.f32 0.0, %v1698
        %v1700 = vpop.f32.mrb[0].mxu0
        %1701 = vmatprep.mubr.bf16.mxu0 %v1359
        %1702 = vmatmul.mubr.bf16.gmra.mrb[0].mxu0 %v1358
        %v1703 = vpop.f32.mrb[0].mxu0
        %v1704 = vadd.f32 0.0, %v1703
        %v1705 = vpop.f32.mrb[0].mxu0
        %v1706 = vpop.f32.mrb[0].mxu0
        %v1707 = vadd.f32 0.0, %v1706
        %v1708 = vpop.f32.mrb[0].mxu0
        %1709 = vmatprep.mubr.bf16.mxu0 %v1362
        %1710 = vmatmul.mubr.bf16.gmra.mrb[0].mxu0 %v1361
        %v1711 = vpop.f32.mrb[0].mxu0
        %v1712 = vadd.f32 0.0, %v1711
        %v1713 = vpop.f32.mrb[0].mxu0
        %v1714 = vpop.f32.mrb[0].mxu0
        %v1715 = vadd.f32 0.0, %v1714
        %v1716 = vpop.f32.mrb[0].mxu0
        %1717 = vdwg.mxu0
        %1718 = vmatprep.subr.bf16.mxu0 0
        %1719 = vmatpush1.bf16.msra.mxu0 %v1525
        %1720 = vmatprep.subr.bf16.mxu0 0
        %1721 = vmatpush1.bf16.msra.mxu0 %v1526
        %1722 = vmatprep.subr.bf16.mxu0 0
        %1723 = vmatpush1.bf16.msra.mxu0 %v1527
        %1724 = vmatprep.subr.bf16.mxu0 0
        %1725 = vmatpush1.bf16.msra.mxu0 %v1528
        %1726 = vmatprep.subr.bf16.mxu0 0
        %1727 = vmatpush1.bf16.msra.mxu0 %v1529
        %1728 = vmatprep.subr.bf16.mxu0 0
        %1729 = vmatpush1.bf16.msra.mxu0 %v1530
        %1730 = vmatprep.subr.bf16.mxu0 0
        %1731 = vmatpush1.bf16.msra.mxu0 %v1531
        %1732 = vmatprep.subr.bf16.mxu0 0
        %1733 = vmatpush1.bf16.msra.mxu0 %v1532
        %1734 = vmatprep.subr.bf16.mxu0 0
        %1735 = vmatpush1.bf16.msra.mxu0 0
        %1736 = vmatprep.subr.bf16.mxu0 0
        %1737 = vmatpush1.bf16.msra.mxu0 0
        %1738 = vmatprep.subr.bf16.mxu0 0
        %1739 = vmatpush1.bf16.msra.mxu0 0
        %1740 = vmatprep.subr.bf16.mxu0 0
        %1741 = vmatpush1.bf16.msra.mxu0 0
        %1742 = vmatprep.subr.bf16.mxu0 0
        %1743 = vmatpush1.bf16.msra.mxu0 0
        %1744 = vmatprep.subr.bf16.mxu0 0
        %1745 = vmatpush1.bf16.msra.mxu0 0
        %1746 = vmatprep.subr.bf16.mxu0 0
        %1747 = vmatpush1.bf16.msra.mxu0 0
        %1748 = vmatprep.subr.bf16.mxu0 0
        %1749 = vmatpush1.bf16.msra.mxu0 0
        %1750 = vmatprep.mubr.bf16.mxu0 0
        %1751 = vmatmul.mubr.bf16.gmra.mrb[0].mxu0 %v1318
        %v1752 = vpop.f32.mrb[0].mxu0
        %v1753 = vadd.f32 %v1592, %v1752
        %v1754 = vpop.f32.mrb[0].mxu0
        %v1755 = vpop.f32.mrb[0].mxu0
        %v1756 = vadd.f32 %v1595, %v1755
        %v1757 = vpop.f32.mrb[0].mxu0
        %1758 = vmatprep.mubr.bf16.mxu0 0
        %1759 = vmatmul.mubr.bf16.gmra.mrb[0].mxu0 %v1321
        %v1760 = vpop.f32.mrb[0].mxu0
        %v1761 = vadd.f32 %v1600, %v1760
        %v1762 = vpop.f32.mrb[0].mxu0
        %v1763 = vpop.f32.mrb[0].mxu0
        %v1764 = vadd.f32 %v1603, %v1763
        %v1765 = vpop.f32.mrb[0].mxu0
        %1766 = vmatprep.mubr.bf16.mxu0 0
        %1767 = vmatmul.mubr.bf16.gmra.mrb[0].mxu0 %v1324
        %v1768 = vpop.f32.mrb[0].mxu0
        %v1769 = vadd.f32 %v1608, %v1768
        %v1770 = vpop.f32.mrb[0].mxu0
        %v1771 = vpop.f32.mrb[0].mxu0
        %v1772 = vadd.f32 %v1611, %v1771
        %v1773 = vpop.f32.mrb[0].mxu0
        %1774 = vmatprep.mubr.bf16.mxu0 0
        %1775 = vmatmul.mubr.bf16.gmra.mrb[0].mxu0 %v1327
        %v1776 = vpop.f32.mrb[0].mxu0
        %v1777 = vadd.f32 %v1616, %v1776
        %v1778 = vpop.f32.mrb[0].mxu0
        %v1779 = vpop.f32.mrb[0].mxu0
        %v1780 = vadd.f32 %v1619, %v1779
        %v1781 = vpop.f32.mrb[0].mxu0
        %1782 = vmatprep.mubr.bf16.mxu0 0
        %1783 = vmatmul.mubr.bf16.gmra.mrb[0].mxu0 %v1330
        %v1784 = vpop.f32.mrb[0].mxu0
        %v1785 = vadd.f32 %v1624, %v1784
        %v1786 = vpop.f32.mrb[0].mxu0
        %v1787 = vpop.f32.mrb[0].mxu0
        %v1788 = vadd.f32 %v1627, %v1787
        %v1789 = vpop.f32.mrb[0].mxu0
        %1790 = vmatprep.mubr.bf16.mxu0 0
        %1791 = vmatmul.mubr.bf16.gmra.mrb[0].mxu0 %v1333
        %v1792 = vpop.f32.mrb[0].mxu0
        %v1793 = vadd.f32 %v1632, %v1792
        %v1794 = vpop.f32.mrb[0].mxu0
        %v1795 = vpop.f32.mrb[0].mxu0
        %v1796 = vadd.f32 %v1635, %v1795
        %v1797 = vpop.f32.mrb[0].mxu0
        %1798 = vmatprep.mubr.bf16.mxu0 0
        %1799 = vmatmul.mubr.bf16.gmra.mrb[0].mxu0 %v1336
        %v1800 = vpop.f32.mrb[0].mxu0
        %v1801 = vadd.f32 %v1640, %v1800
        %v1802 = vpop.f32.mrb[0].mxu0
        %v1803 = vpop.f32.mrb[0].mxu0
        %v1804 = vadd.f32 %v1643, %v1803
        %v1805 = vpop.f32.mrb[0].mxu0
        %1806 = vmatprep.mubr.bf16.mxu0 0
        %1807 = vmatmul.mubr.bf16.gmra.mrb[0].mxu0 %v1339
        %v1808 = vpop.f32.mrb[0].mxu0
        %v1809 = vadd.f32 %v1648, %v1808
        %v1810 = vpop.f32.mrb[0].mxu0
        %v1811 = vpop.f32.mrb[0].mxu0
        %v1812 = vadd.f32 %v1651, %v1811
        %v1813 = vpop.f32.mrb[0].mxu0
        %1814 = vmatprep.mubr.bf16.mxu0 0
        %1815 = vmatmul.mubr.bf16.gmra.mrb[0].mxu0 %v1342
        %v1816 = vpop.f32.mrb[0].mxu0
        %v1817 = vadd.f32 %v1656, %v1816
        %v1818 = vpop.f32.mrb[0].mxu0
        %v1819 = vpop.f32.mrb[0].mxu0
        %v1820 = vadd.f32 %v1659, %v1819
        %v1821 = vpop.f32.mrb[0].mxu0
        %1822 = vmatprep.mubr.bf16.mxu0 0
        %1823 = vmatmul.mubr.bf16.gmra.mrb[0].mxu0 %v1345
        %v1824 = vpop.f32.mrb[0].mxu0
        %v1825 = vadd.f32 %v1664, %v1824
        %v1826 = vpop.f32.mrb[0].mxu0
        %v1827 = vpop.f32.mrb[0].mxu0
        %v1828 = vadd.f32 %v1667, %v1827
        %v1829 = vpop.f32.mrb[0].mxu0
        %1830 = vmatprep.mubr.bf16.mxu0 0
        %1831 = vmatmul.mubr.bf16.gmra.mrb[0].mxu0 %v1348
        %v1832 = vpop.f32.mrb[0].mxu0
        %v1833 = vadd.f32 %v1672, %v1832
        %v1834 = vpop.f32.mrb[0].mxu0
        %v1835 = vpop.f32.mrb[0].mxu0
        %v1836 = vadd.f32 %v1675, %v1835
        %v1837 = vpop.f32.mrb[0].mxu0
        %1838 = vmatprep.mubr.bf16.mxu0 0
        %1839 = vmatmul.mubr.bf16.gmra.mrb[0].mxu0 %v1351
        %v1840 = vpop.f32.mrb[0].mxu0
        %v1841 = vadd.f32 %v1680, %v1840
        %v1842 = vpop.f32.mrb[0].mxu0
        %v1843 = vpop.f32.mrb[0].mxu0
        %v1844 = vadd.f32 %v1683, %v1843
        %v1845 = vpop.f32.mrb[0].mxu0
        %1846 = vmatprep.mubr.bf16.mxu0 0
        %1847 = vmatmul.mubr.bf16.gmra.mrb[0].mxu0 %v1354
        %v1848 = vpop.f32.mrb[0].mxu0
        %v1849 = vadd.f32 %v1688, %v1848
        %v1850 = vpop.f32.mrb[0].mxu0
        %v1851 = vpop.f32.mrb[0].mxu0
        %v1852 = vadd.f32 %v1691, %v1851
        %v1853 = vpop.f32.mrb[0].mxu0
        %1854 = vmatprep.mubr.bf16.mxu0 0
        %1855 = vmatmul.mubr.bf16.gmra.mrb[0].mxu0 %v1357
        %v1856 = vpop.f32.mrb[0].mxu0
        %v1857 = vadd.f32 %v1696, %v1856
        %v1858 = vpop.f32.mrb[0].mxu0
        %v1859 = vpop.f32.mrb[0].mxu0
        %v1860 = vadd.f32 %v1699, %v1859
        %v1861 = vpop.f32.mrb[0].mxu0
        %1862 = vmatprep.mubr.bf16.mxu0 0
        %1863 = vmatmul.mubr.bf16.gmra.mrb[0].mxu0 %v1360
        %v1864 = vpop.f32.mrb[0].mxu0
        %v1865 = vadd.f32 %v1704, %v1864
        %v1866 = vpop.f32.mrb[0].mxu0
        %v1867 = vpop.f32.mrb[0].mxu0
        %v1868 = vadd.f32 %v1707, %v1867
        %v1869 = vpop.f32.mrb[0].mxu0
        %1870 = vmatprep.mubr.bf16.mxu0 0
        %1871 = vmatmul.mubr.bf16.gmra.mrb[0].mxu0 %v1363
        %v1872 = vpop.f32.mrb[0].mxu0
        %v1873 = vadd.f32 %v1712, %v1872
        %v1874 = vpop.f32.mrb[0].mxu0
        %v1875 = vpop.f32.mrb[0].mxu0
        %v1876 = vadd.f32 %v1715, %v1875
        %v1877 = vpop.f32.mrb[0].mxu0
        %1878 = vdwg.mxu0
        %v1927 = vunpack.c.l.b16 %v1268
        %v1928 = vunpack.c.l.b16 %v1269
        %v1929 = vunpack.c.l.b16 %v1270
        %v1930 = vunpack.c.l.b16 %v1271
        %v1931 = vunpack.c.l.b16 %v1272
        %v1932 = vunpack.c.l.b16 %v1273
        %v1933 = vunpack.c.l.b16 %v1274
        %v1934 = vunpack.c.l.b16 %v1275
        %v1935 = vunpack.c.l.b16 %v1276
        %v1936 = vunpack.c.l.b16 %v1277
        %v1937 = vunpack.c.l.b16 %v1278
        %v1938 = vunpack.c.l.b16 %v1279
        %v1939 = vunpack.c.l.b16 %v1280
        %v1940 = vunpack.c.l.b16 %v1281
        %v1941 = vunpack.c.l.b16 %v1282
        %v1942 = vunpack.c.l.b16 %v1283
        %v1943 = vunpack.c.l.b16 %v1284
        %v1944 = vunpack.c.l.b16 %v1285
        %v1945 = vunpack.c.l.b16 %v1286
        %v1946 = vunpack.c.l.b16 %v1287
        %v1947 = vunpack.c.l.b16 %v1288
        %v1948 = vunpack.c.l.b16 %v1289
        %v1949 = vunpack.c.l.b16 %v1290
        %v1950 = vunpack.c.l.b16 %v1291
        %v1951 = vunpack.c.l.b16 %v1292
        %v1952 = vunpack.c.l.b16 %v1293
        %v1953 = vunpack.c.l.b16 %v1294
        %v1954 = vunpack.c.l.b16 %v1295
        %v1955 = vunpack.c.l.b16 %v1296
        %v1956 = vunpack.c.l.b16 %v1297
        %v1957 = vunpack.c.l.b16 %v1298
        %v1958 = vunpack.c.l.b16 %v1299
        %v1959 = vunpack.c.l.b16 %v1300
        %v1960 = vunpack.c.l.b16 %v1301
        %v1961 = vunpack.c.l.b16 %v1302
        %v1962 = vunpack.c.l.b16 %v1303
        %v1963 = vunpack.c.l.b16 %v1304
        %v1964 = vunpack.c.l.b16 %v1305
        %v1965 = vunpack.c.l.b16 %v1306
        %v1966 = vunpack.c.l.b16 %v1307
        %v1967 = vunpack.c.l.b16 %v1308
        %v1968 = vunpack.c.l.b16 %v1309
        %v1969 = vunpack.c.l.b16 %v1310
        %v1970 = vunpack.c.l.b16 %v1311
        %v1971 = vunpack.c.l.b16 %v1312
        %v1972 = vunpack.c.l.b16 %v1313
        %v1973 = vunpack.c.l.b16 %v1314
        %v1974 = vunpack.c.l.b16 %v1315
        %v1975 = vpack.c.b16 %v1928, %v1927
        %v1976 = vpack.c.b16 %v1930, %v1929
        %v1977 = vpack.c.b16 %v1932, %v1931
        %v1978 = vpack.c.b16 %v1934, %v1933
        %v1979 = vpack.c.b16 %v1936, %v1935
        %v1980 = vpack.c.b16 %v1938, %v1937
        %v1981 = vpack.c.b16 %v1940, %v1939
        %v1982 = vpack.c.b16 %v1942, %v1941
        %v1983 = vpack.c.b16 %v1944, %v1943
        %v1984 = vpack.c.b16 %v1946, %v1945
        %v1985 = vpack.c.b16 %v1948, %v1947
        %v1986 = vpack.c.b16 %v1950, %v1949
        %v1987 = vpack.c.b16 %v1952, %v1951
        %v1988 = vpack.c.b16 %v1954, %v1953
        %v1989 = vpack.c.b16 %v1956, %v1955
        %v1990 = vpack.c.b16 %v1958, %v1957
        %v1991 = vpack.c.b16 %v1960, %v1959
        %v1992 = vpack.c.b16 %v1962, %v1961
        %v1993 = vpack.c.b16 %v1964, %v1963
        %v1994 = vpack.c.b16 %v1966, %v1965
        %v1995 = vpack.c.b16 %v1968, %v1967
        %v1996 = vpack.c.b16 %v1970, %v1969
        %v1997 = vpack.c.b16 %v1972, %v1971
        %v1998 = vpack.c.b16 %v1974, %v1973
        %2023 = vmatprep.subr.bf16.mxu0 0
        %2024 = vmatpush1.bf16.msra.mxu0 %v1975
        %2025 = vmatprep.subr.bf16.mxu0 0
        %2026 = vmatpush1.bf16.msra.mxu0 %v1976
        %2027 = vmatprep.subr.bf16.mxu0 0
        %2028 = vmatpush1.bf16.msra.mxu0 %v1977
        %2029 = vmatprep.subr.bf16.mxu0 0
        %2030 = vmatpush1.bf16.msra.mxu0 %v1978
        %2031 = vmatprep.subr.bf16.mxu0 0
        %2032 = vmatpush1.bf16.msra.mxu0 %v1979
        %2033 = vmatprep.subr.bf16.mxu0 0
        %2034 = vmatpush1.bf16.msra.mxu0 %v1980
        %2035 = vmatprep.subr.bf16.mxu0 0
        %2036 = vmatpush1.bf16.msra.mxu0 %v1981
        %2037 = vmatprep.subr.bf16.mxu0 0
        %2038 = vmatpush1.bf16.msra.mxu0 %v1982
        %2039 = vmatprep.subr.bf16.mxu0 0
        %2040 = vmatpush1.bf16.msra.mxu0 %v1983
        %2041 = vmatprep.subr.bf16.mxu0 0
        %2042 = vmatpush1.bf16.msra.mxu0 %v1984
        %2043 = vmatprep.subr.bf16.mxu0 0
        %2044 = vmatpush1.bf16.msra.mxu0 %v1985
        %2045 = vmatprep.subr.bf16.mxu0 0
        %2046 = vmatpush1.bf16.msra.mxu0 %v1986
        %2047 = vmatprep.subr.bf16.mxu0 0
        %2048 = vmatpush1.bf16.msra.mxu0 %v1987
        %2049 = vmatprep.subr.bf16.mxu0 0
        %2050 = vmatpush1.bf16.msra.mxu0 %v1988
        %2051 = vmatprep.subr.bf16.mxu0 0
        %2052 = vmatpush1.bf16.msra.mxu0 %v1989
        %2053 = vmatprep.subr.bf16.mxu0 0
        %2054 = vmatpush1.bf16.msra.mxu0 %v1990
        %2055 = vmatprep.mubr.bf16.mxu0 %v1221
        %2056 = vmatmul.mubr.bf16.gmra.mrb[0].mxu0 %v1220
        %v2057 = vpop.f32.mrb[0].mxu0
        %v2058 = vadd.f32 %v1753, %v2057
        %v2059 = vpop.f32.mrb[0].mxu0
        %v2060 = vpop.f32.mrb[0].mxu0
        %v2061 = vadd.f32 %v1756, %v2060
        %v2062 = vpop.f32.mrb[0].mxu0
        %2063 = vmatprep.mubr.bf16.mxu0 %v1224
        %2064 = vmatmul.mubr.bf16.gmra.mrb[0].mxu0 %v1223
        %v2065 = vpop.f32.mrb[0].mxu0
        %v2066 = vadd.f32 %v1761, %v2065
        %v2067 = vpop.f32.mrb[0].mxu0
        %v2068 = vpop.f32.mrb[0].mxu0
        %v2069 = vadd.f32 %v1764, %v2068
        %v2070 = vpop.f32.mrb[0].mxu0
        %2071 = vmatprep.mubr.bf16.mxu0 %v1227
        %2072 = vmatmul.mubr.bf16.gmra.mrb[0].mxu0 %v1226
        %v2073 = vpop.f32.mrb[0].mxu0
        %v2074 = vadd.f32 %v1769, %v2073
        %v2075 = vpop.f32.mrb[0].mxu0
        %v2076 = vpop.f32.mrb[0].mxu0
        %v2077 = vadd.f32 %v1772, %v2076
        %v2078 = vpop.f32.mrb[0].mxu0
        %2079 = vmatprep.mubr.bf16.mxu0 %v1230
        %2080 = vmatmul.mubr.bf16.gmra.mrb[0].mxu0 %v1229
        %v2081 = vpop.f32.mrb[0].mxu0
        %v2082 = vadd.f32 %v1777, %v2081
        %v2083 = vpop.f32.mrb[0].mxu0
        %v2084 = vpop.f32.mrb[0].mxu0
        %v2085 = vadd.f32 %v1780, %v2084
        %v2086 = vpop.f32.mrb[0].mxu0
        %2087 = vmatprep.mubr.bf16.mxu0 %v1233
        %2088 = vmatmul.mubr.bf16.gmra.mrb[0].mxu0 %v1232
        %v2089 = vpop.f32.mrb[0].mxu0
        %v2090 = vadd.f32 %v1785, %v2089
        %v2091 = vpop.f32.mrb[0].mxu0
        %v2092 = vpop.f32.mrb[0].mxu0
        %v2093 = vadd.f32 %v1788, %v2092
        %v2094 = vpop.f32.mrb[0].mxu0
        %2095 = vmatprep.mubr.bf16.mxu0 %v1236
        %2096 = vmatmul.mubr.bf16.gmra.mrb[0].mxu0 %v1235
        %v2097 = vpop.f32.mrb[0].mxu0
        %v2098 = vadd.f32 %v1793, %v2097
        %v2099 = vpop.f32.mrb[0].mxu0
        %v2100 = vpop.f32.mrb[0].mxu0
        %v2101 = vadd.f32 %v1796, %v2100
        %v2102 = vpop.f32.mrb[0].mxu0
        %2103 = vmatprep.mubr.bf16.mxu0 %v1239
        %2104 = vmatmul.mubr.bf16.gmra.mrb[0].mxu0 %v1238
        %v2105 = vpop.f32.mrb[0].mxu0
        %v2106 = vadd.f32 %v1801, %v2105
        %v2107 = vpop.f32.mrb[0].mxu0
        %v2108 = vpop.f32.mrb[0].mxu0
        %v2109 = vadd.f32 %v1804, %v2108
        %v2110 = vpop.f32.mrb[0].mxu0
        %2111 = vmatprep.mubr.bf16.mxu0 %v1242
        %2112 = vmatmul.mubr.bf16.gmra.mrb[0].mxu0 %v1241
        %v2113 = vpop.f32.mrb[0].mxu0
        %v2114 = vadd.f32 %v1809, %v2113
        %v2115 = vpop.f32.mrb[0].mxu0
        %v2116 = vpop.f32.mrb[0].mxu0
        %v2117 = vadd.f32 %v1812, %v2116
        %v2118 = vpop.f32.mrb[0].mxu0
        %2119 = vmatprep.mubr.bf16.mxu0 %v1245
        %2120 = vmatmul.mubr.bf16.gmra.mrb[0].mxu0 %v1244
        %v2121 = vpop.f32.mrb[0].mxu0
        %v2122 = vadd.f32 %v1817, %v2121
        %v2123 = vpop.f32.mrb[0].mxu0
        %v2124 = vpop.f32.mrb[0].mxu0
        %v2125 = vadd.f32 %v1820, %v2124
        %v2126 = vpop.f32.mrb[0].mxu0
        %2127 = vmatprep.mubr.bf16.mxu0 %v1248
        %2128 = vmatmul.mubr.bf16.gmra.mrb[0].mxu0 %v1247
        %v2129 = vpop.f32.mrb[0].mxu0
        %v2130 = vadd.f32 %v1825, %v2129
        %v2131 = vpop.f32.mrb[0].mxu0
        %v2132 = vpop.f32.mrb[0].mxu0
        %v2133 = vadd.f32 %v1828, %v2132
        %v2134 = vpop.f32.mrb[0].mxu0
        %2135 = vmatprep.mubr.bf16.mxu0 %v1251
        %2136 = vmatmul.mubr.bf16.gmra.mrb[0].mxu0 %v1250
        %v2137 = vpop.f32.mrb[0].mxu0
        %v2138 = vadd.f32 %v1833, %v2137
        %v2139 = vpop.f32.mrb[0].mxu0
        %v2140 = vpop.f32.mrb[0].mxu0
        %v2141 = vadd.f32 %v1836, %v2140
        %v2142 = vpop.f32.mrb[0].mxu0
        %2143 = vmatprep.mubr.bf16.mxu0 %v1254
        %2144 = vmatmul.mubr.bf16.gmra.mrb[0].mxu0 %v1253
        %v2145 = vpop.f32.mrb[0].mxu0
        %v2146 = vadd.f32 %v1841, %v2145
        %v2147 = vpop.f32.mrb[0].mxu0
        %v2148 = vpop.f32.mrb[0].mxu0
        %v2149 = vadd.f32 %v1844, %v2148
        %v2150 = vpop.f32.mrb[0].mxu0
        %2151 = vmatprep.mubr.bf16.mxu0 %v1257
        %2152 = vmatmul.mubr.bf16.gmra.mrb[0].mxu0 %v1256
        %v2153 = vpop.f32.mrb[0].mxu0
        %v2154 = vadd.f32 %v1849, %v2153
        %v2155 = vpop.f32.mrb[0].mxu0
        %v2156 = vpop.f32.mrb[0].mxu0
        %v2157 = vadd.f32 %v1852, %v2156
        %v2158 = vpop.f32.mrb[0].mxu0
        %2159 = vmatprep.mubr.bf16.mxu0 %v1260
        %2160 = vmatmul.mubr.bf16.gmra.mrb[0].mxu0 %v1259
        %v2161 = vpop.f32.mrb[0].mxu0
        %v2162 = vadd.f32 %v1857, %v2161
        %v2163 = vpop.f32.mrb[0].mxu0
        %v2164 = vpop.f32.mrb[0].mxu0
        %v2165 = vadd.f32 %v1860, %v2164
        %v2166 = vpop.f32.mrb[0].mxu0
        %2167 = vmatprep.mubr.bf16.mxu0 %v1263
        %2168 = vmatmul.mubr.bf16.gmra.mrb[0].mxu0 %v1262
        %v2169 = vpop.f32.mrb[0].mxu0
        %v2170 = vadd.f32 %v1865, %v2169
        %v2171 = vpop.f32.mrb[0].mxu0
        %v2172 = vpop.f32.mrb[0].mxu0
        %v2173 = vadd.f32 %v1868, %v2172
        %v2174 = vpop.f32.mrb[0].mxu0
        %2175 = vmatprep.mubr.bf16.mxu0 %v1266
        %2176 = vmatmul.mubr.bf16.gmra.mrb[0].mxu0 %v1265
        %v2177 = vpop.f32.mrb[0].mxu0
        %v2178 = vadd.f32 %v1873, %v2177
        %v2179 = vpop.f32.mrb[0].mxu0
        %v2180 = vpop.f32.mrb[0].mxu0
        %v2181 = vadd.f32 %v1876, %v2180
        %v2182 = vpop.f32.mrb[0].mxu0
        %2183 = vdwg.mxu0
        %2184 = vmatprep.subr.bf16.mxu0 0
        %2185 = vmatpush1.bf16.msra.mxu0 %v1991
        %2186 = vmatprep.subr.bf16.mxu0 0
        %2187 = vmatpush1.bf16.msra.mxu0 %v1992
        %2188 = vmatprep.subr.bf16.mxu0 0
        %2189 = vmatpush1.bf16.msra.mxu0 %v1993
        %2190 = vmatprep.subr.bf16.mxu0 0
        %2191 = vmatpush1.bf16.msra.mxu0 %v1994
        %2192 = vmatprep.subr.bf16.mxu0 0
        %2193 = vmatpush1.bf16.msra.mxu0 %v1995
        %2194 = vmatprep.subr.bf16.mxu0 0
        %2195 = vmatpush1.bf16.msra.mxu0 %v1996
        %2196 = vmatprep.subr.bf16.mxu0 0
        %2197 = vmatpush1.bf16.msra.mxu0 %v1997
        %2198 = vmatprep.subr.bf16.mxu0 0
        %2199 = vmatpush1.bf16.msra.mxu0 %v1998
        %2200 = vmatprep.subr.bf16.mxu0 0
        %2201 = vmatpush1.bf16.msra.mxu0 0
        %2202 = vmatprep.subr.bf16.mxu0 0
        %2203 = vmatpush1.bf16.msra.mxu0 0
        %2204 = vmatprep.subr.bf16.mxu0 0
        %2205 = vmatpush1.bf16.msra.mxu0 0
        %2206 = vmatprep.subr.bf16.mxu0 0
        %2207 = vmatpush1.bf16.msra.mxu0 0
        %2208 = vmatprep.subr.bf16.mxu0 0
        %2209 = vmatpush1.bf16.msra.mxu0 0
        %2210 = vmatprep.subr.bf16.mxu0 0
        %2211 = vmatpush1.bf16.msra.mxu0 0
        %2212 = vmatprep.subr.bf16.mxu0 0
        %2213 = vmatpush1.bf16.msra.mxu0 0
        %2214 = vmatprep.subr.bf16.mxu0 0
        %2215 = vmatpush1.bf16.msra.mxu0 0
        %2216 = vmatprep.mubr.bf16.mxu0 0
        %2217 = vmatmul.mubr.bf16.gmra.mrb[0].mxu0 %v1222
        %v2218 = vpop.f32.mrb[0].mxu0
        %v2219 = vadd.f32 %v2058, %v2218
        %v2220 = vpop.f32.mrb[0].mxu0
        %v2221 = vpop.f32.mrb[0].mxu0
        %v2222 = vadd.f32 %v2061, %v2221
        %v2223 = vpop.f32.mrb[0].mxu0
        %2224 = vmatprep.mubr.bf16.mxu0 0
        %2225 = vmatmul.mubr.bf16.gmra.mrb[0].mxu0 %v1225
        %v2226 = vpop.f32.mrb[0].mxu0
        %v2227 = vadd.f32 %v2066, %v2226
        %v2228 = vpop.f32.mrb[0].mxu0
        %v2229 = vpop.f32.mrb[0].mxu0
        %v2230 = vadd.f32 %v2069, %v2229
        %v2231 = vpop.f32.mrb[0].mxu0
        %2232 = vmatprep.mubr.bf16.mxu0 0
        %2233 = vmatmul.mubr.bf16.gmra.mrb[0].mxu0 %v1228
        %v2234 = vpop.f32.mrb[0].mxu0
        %v2235 = vadd.f32 %v2074, %v2234
        %v2236 = vpop.f32.mrb[0].mxu0
        %v2237 = vpop.f32.mrb[0].mxu0
        %v2238 = vadd.f32 %v2077, %v2237
        %v2239 = vpop.f32.mrb[0].mxu0
        %2240 = vmatprep.mubr.bf16.mxu0 0
        %2241 = vmatmul.mubr.bf16.gmra.mrb[0].mxu0 %v1231
        %v2242 = vpop.f32.mrb[0].mxu0
        %v2243 = vadd.f32 %v2082, %v2242
        %v2244 = vpop.f32.mrb[0].mxu0
        %v2245 = vpop.f32.mrb[0].mxu0
        %v2246 = vadd.f32 %v2085, %v2245
        %v2247 = vpop.f32.mrb[0].mxu0
        %2248 = vmatprep.mubr.bf16.mxu0 0
        %2249 = vmatmul.mubr.bf16.gmra.mrb[0].mxu0 %v1234
        %v2250 = vpop.f32.mrb[0].mxu0
        %v2251 = vadd.f32 %v2090, %v2250
        %v2252 = vpop.f32.mrb[0].mxu0
        %v2253 = vpop.f32.mrb[0].mxu0
        %v2254 = vadd.f32 %v2093, %v2253
        %v2255 = vpop.f32.mrb[0].mxu0
        %2256 = vmatprep.mubr.bf16.mxu0 0
        %2257 = vmatmul.mubr.bf16.gmra.mrb[0].mxu0 %v1237
        %v2258 = vpop.f32.mrb[0].mxu0
        %v2259 = vadd.f32 %v2098, %v2258
        %v2260 = vpop.f32.mrb[0].mxu0
        %v2261 = vpop.f32.mrb[0].mxu0
        %v2262 = vadd.f32 %v2101, %v2261
        %v2263 = vpop.f32.mrb[0].mxu0
        %2264 = vmatprep.mubr.bf16.mxu0 0
        %2265 = vmatmul.mubr.bf16.gmra.mrb[0].mxu0 %v1240
        %v2266 = vpop.f32.mrb[0].mxu0
        %v2267 = vadd.f32 %v2106, %v2266
        %v2268 = vpop.f32.mrb[0].mxu0
        %v2269 = vpop.f32.mrb[0].mxu0
        %v2270 = vadd.f32 %v2109, %v2269
        %v2271 = vpop.f32.mrb[0].mxu0
        %2272 = vmatprep.mubr.bf16.mxu0 0
        %2273 = vmatmul.mubr.bf16.gmra.mrb[0].mxu0 %v1243
        %v2274 = vpop.f32.mrb[0].mxu0
        %v2275 = vadd.f32 %v2114, %v2274
        %v2276 = vpop.f32.mrb[0].mxu0
        %v2277 = vpop.f32.mrb[0].mxu0
        %v2278 = vadd.f32 %v2117, %v2277
        %v2279 = vpop.f32.mrb[0].mxu0
        %2280 = vmatprep.mubr.bf16.mxu0 0
        %2281 = vmatmul.mubr.bf16.gmra.mrb[0].mxu0 %v1246
        %v2282 = vpop.f32.mrb[0].mxu0
        %v2283 = vadd.f32 %v2122, %v2282
        %v2284 = vpop.f32.mrb[0].mxu0
        %v2285 = vpop.f32.mrb[0].mxu0
        %v2286 = vadd.f32 %v2125, %v2285
        %v2287 = vpop.f32.mrb[0].mxu0
        %2288 = vmatprep.mubr.bf16.mxu0 0
        %2289 = vmatmul.mubr.bf16.gmra.mrb[0].mxu0 %v1249
        %v2290 = vpop.f32.mrb[0].mxu0
        %v2291 = vadd.f32 %v2130, %v2290
        %v2292 = vpop.f32.mrb[0].mxu0
        %v2293 = vpop.f32.mrb[0].mxu0
        %v2294 = vadd.f32 %v2133, %v2293
        %v2295 = vpop.f32.mrb[0].mxu0
        %2296 = vmatprep.mubr.bf16.mxu0 0
        %2297 = vmatmul.mubr.bf16.gmra.mrb[0].mxu0 %v1252
        %v2298 = vpop.f32.mrb[0].mxu0
        %v2299 = vadd.f32 %v2138, %v2298
        %v2300 = vpop.f32.mrb[0].mxu0
        %v2301 = vpop.f32.mrb[0].mxu0
        %v2302 = vadd.f32 %v2141, %v2301
        %v2303 = vpop.f32.mrb[0].mxu0
        %2304 = vmatprep.mubr.bf16.mxu0 0
        %2305 = vmatmul.mubr.bf16.gmra.mrb[0].mxu0 %v1255
        %v2306 = vpop.f32.mrb[0].mxu0
        %v2307 = vadd.f32 %v2146, %v2306
        %v2308 = vpop.f32.mrb[0].mxu0
        %v2309 = vpop.f32.mrb[0].mxu0
        %v2310 = vadd.f32 %v2149, %v2309
        %v2311 = vpop.f32.mrb[0].mxu0
        %2312 = vmatprep.mubr.bf16.mxu0 0
        %2313 = vmatmul.mubr.bf16.gmra.mrb[0].mxu0 %v1258
        %v2314 = vpop.f32.mrb[0].mxu0
        %v2315 = vadd.f32 %v2154, %v2314
        %v2316 = vpop.f32.mrb[0].mxu0
        %v2317 = vpop.f32.mrb[0].mxu0
        %v2318 = vadd.f32 %v2157, %v2317
        %v2319 = vpop.f32.mrb[0].mxu0
        %2320 = vmatprep.mubr.bf16.mxu0 0
        %2321 = vmatmul.mubr.bf16.gmra.mrb[0].mxu0 %v1261
        %v2322 = vpop.f32.mrb[0].mxu0
        %v2323 = vadd.f32 %v2162, %v2322
        %v2324 = vpop.f32.mrb[0].mxu0
        %v2325 = vpop.f32.mrb[0].mxu0
        %v2326 = vadd.f32 %v2165, %v2325
        %v2327 = vpop.f32.mrb[0].mxu0
        %2328 = vmatprep.mubr.bf16.mxu0 0
        %2329 = vmatmul.mubr.bf16.gmra.mrb[0].mxu0 %v1264
        %v2330 = vpop.f32.mrb[0].mxu0
        %v2331 = vadd.f32 %v2170, %v2330
        %v2332 = vpop.f32.mrb[0].mxu0
        %v2333 = vpop.f32.mrb[0].mxu0
        %v2334 = vadd.f32 %v2173, %v2333
        %v2335 = vpop.f32.mrb[0].mxu0
        %2336 = vmatprep.mubr.bf16.mxu0 0
        %2337 = vmatmul.mubr.bf16.gmra.mrb[0].mxu0 %v1267
        %v2338 = vpop.f32.mrb[0].mxu0
        %v2339 = vadd.f32 %v2178, %v2338
        %v2340 = vpop.f32.mrb[0].mxu0
        %v2341 = vpop.f32.mrb[0].mxu0
        %v2342 = vadd.f32 %v2181, %v2341
        %v2343 = vpop.f32.mrb[0].mxu0
        %2344 = vdwg.mxu0
        %s2345 = scalar_lea.vmem [#allocation2], 48
        %v2346 = vld [vmem:[%s2345] sm:$0xff]
        %v2347 = vld [vmem:[%s2345 + $0x8] sm:$0xff]
        %v2348 = vld [vmem:[%s2345 + $0x10] sm:$0xff]
        %v2349 = vld [vmem:[%s2345 + $0x18] sm:$0xff]
        %v2350 = vld [vmem:[%s2345 + $0x20] sm:$0xff]
        %v2351 = vld [vmem:[%s2345 + $0x28] sm:$0xff]
        %v2352 = vld [vmem:[%s2345 + $0x30] sm:$0xff]
        %v2353 = vld [vmem:[%s2345 + $0x38] sm:$0xff]
        %v2354 = vld [vmem:[%s2345 + $0x40] sm:$0xff]
        %v2355 = vld [vmem:[%s2345 + $0x48] sm:$0xff]
        %v2356 = vld [vmem:[%s2345 + $0x50] sm:$0xff]
        %v2357 = vld [vmem:[%s2345 + $0x58] sm:$0xff]
        %v2358 = vld [vmem:[%s2345 + $0x60] sm:$0xff]
        %v2359 = vld [vmem:[%s2345 + $0x68] sm:$0xff]
        %v2360 = vld [vmem:[%s2345 + $0x70] sm:$0xff]
        %v2361 = vld [vmem:[%s2345 + $0x78] sm:$0xff]
        %v2362 = vld [vmem:[%s2345 + $0x80] sm:$0xff]
        %v2363 = vld [vmem:[%s2345 + $0x88] sm:$0xff]
        %v2364 = vld [vmem:[%s2345 + $0x90] sm:$0xff]
        %v2365 = vld [vmem:[%s2345 + $0x98] sm:$0xff]
        %v2366 = vld [vmem:[%s2345 + $0xa0] sm:$0xff]
        %v2367 = vld [vmem:[%s2345 + $0xa8] sm:$0xff]
        %v2368 = vld [vmem:[%s2345 + $0xb0] sm:$0xff]
        %v2369 = vld [vmem:[%s2345 + $0xb8] sm:$0xff]
        %v2370 = vld [vmem:[%s2345 + $0xc0] sm:$0xff]
        %v2371 = vld [vmem:[%s2345 + $0xc8] sm:$0xff]
        %v2372 = vld [vmem:[%s2345 + $0xd0] sm:$0xff]
        %v2373 = vld [vmem:[%s2345 + $0xd8] sm:$0xff]
        %v2374 = vld [vmem:[%s2345 + $0xe0] sm:$0xff]
        %v2375 = vld [vmem:[%s2345 + $0xe8] sm:$0xff]
        %v2376 = vld [vmem:[%s2345 + $0xf0] sm:$0xff]
        %v2377 = vld [vmem:[%s2345 + $0xf8] sm:$0xff]
        %v2378 = vld [vmem:[%s2345 + $0x100] sm:$0xff]
        %v2379 = vld [vmem:[%s2345 + $0x108] sm:$0xff]
        %v2380 = vld [vmem:[%s2345 + $0x110] sm:$0xff]
        %v2381 = vld [vmem:[%s2345 + $0x118] sm:$0xff]
        %v2382 = vld [vmem:[%s2345 + $0x120] sm:$0xff]
        %v2383 = vld [vmem:[%s2345 + $0x128] sm:$0xff]
        %v2384 = vld [vmem:[%s2345 + $0x130] sm:$0xff]
        %v2385 = vld [vmem:[%s2345 + $0x138] sm:$0xff]
        %v2386 = vld [vmem:[%s2345 + $0x140] sm:$0xff]
        %v2387 = vld [vmem:[%s2345 + $0x148] sm:$0xff]
        %v2388 = vld [vmem:[%s2345 + $0x150] sm:$0xff]
        %v2389 = vld [vmem:[%s2345 + $0x158] sm:$0xff]
        %v2390 = vld [vmem:[%s2345 + $0x160] sm:$0xff]
        %v2391 = vld [vmem:[%s2345 + $0x168] sm:$0xff]
        %v2392 = vld [vmem:[%s2345 + $0x170] sm:$0xff]
        %v2393 = vld [vmem:[%s2345 + $0x178] sm:$0xff]
        %s2394 = scalar_lea.vmem [#allocation8], 384
        %v2395 = vld [vmem:[%s2394] sm:$0xf]
        %v2396 = vld [vmem:[%s2394 + $0x4] sm:$0xf]
        %v2397 = vld [vmem:[%s2394 + $0x8] sm:$0xf]
        %v2398 = vld [vmem:[%s2394 + $0xc] sm:$0xf]
        %v2399 = vld [vmem:[%s2394 + $0x10] sm:$0xf]
        %v2400 = vld [vmem:[%s2394 + $0x14] sm:$0xf]
        %v2401 = vld [vmem:[%s2394 + $0x18] sm:$0xf]
        %v2402 = vld [vmem:[%s2394 + $0x1c] sm:$0xf]
        %v2403 = vld [vmem:[%s2394 + $0x20] sm:$0xf]
        %v2404 = vld [vmem:[%s2394 + $0x24] sm:$0xf]
        %v2405 = vld [vmem:[%s2394 + $0x28] sm:$0xf]
        %v2406 = vld [vmem:[%s2394 + $0x2c] sm:$0xf]
        %v2407 = vld [vmem:[%s2394 + $0x30] sm:$0xf]
        %v2408 = vld [vmem:[%s2394 + $0x34] sm:$0xf]
        %v2409 = vld [vmem:[%s2394 + $0x38] sm:$0xf]
        %v2410 = vld [vmem:[%s2394 + $0x3c] sm:$0xf]
        %v2411 = vld [vmem:[%s2394 + $0x40] sm:$0xf]
        %v2412 = vld [vmem:[%s2394 + $0x44] sm:$0xf]
        %v2413 = vld [vmem:[%s2394 + $0x48] sm:$0xf]
        %v2414 = vld [vmem:[%s2394 + $0x4c] sm:$0xf]
        %v2415 = vld [vmem:[%s2394 + $0x50] sm:$0xf]
        %v2416 = vld [vmem:[%s2394 + $0x54] sm:$0xf]
        %v2417 = vld [vmem:[%s2394 + $0x58] sm:$0xf]
        %v2418 = vld [vmem:[%s2394 + $0x5c] sm:$0xf]
        %v2419 = vld [vmem:[%s2394 + $0x60] sm:$0xf]
        %v2420 = vld [vmem:[%s2394 + $0x64] sm:$0xf]
        %v2421 = vld [vmem:[%s2394 + $0x68] sm:$0xf]
        %v2422 = vld [vmem:[%s2394 + $0x6c] sm:$0xf]
        %v2423 = vld [vmem:[%s2394 + $0x70] sm:$0xf]
        %v2424 = vld [vmem:[%s2394 + $0x74] sm:$0xf]
        %v2425 = vld [vmem:[%s2394 + $0x78] sm:$0xf]
        %v2426 = vld [vmem:[%s2394 + $0x7c] sm:$0xf]
        %v2427 = vld [vmem:[%s2394 + $0x80] sm:$0xf]
        %v2428 = vld [vmem:[%s2394 + $0x84] sm:$0xf]
        %v2429 = vld [vmem:[%s2394 + $0x88] sm:$0xf]
        %v2430 = vld [vmem:[%s2394 + $0x8c] sm:$0xf]
        %v2431 = vld [vmem:[%s2394 + $0x90] sm:$0xf]
        %v2432 = vld [vmem:[%s2394 + $0x94] sm:$0xf]
        %v2433 = vld [vmem:[%s2394 + $0x98] sm:$0xf]
        %v2434 = vld [vmem:[%s2394 + $0x9c] sm:$0xf]
        %v2435 = vld [vmem:[%s2394 + $0xa0] sm:$0xf]
        %v2436 = vld [vmem:[%s2394 + $0xa4] sm:$0xf]
        %v2437 = vld [vmem:[%s2394 + $0xa8] sm:$0xf]
        %v2438 = vld [vmem:[%s2394 + $0xac] sm:$0xf]
        %v2439 = vld [vmem:[%s2394 + $0xb0] sm:$0xf]
        %v2440 = vld [vmem:[%s2394 + $0xb4] sm:$0xf]
        %v2441 = vld [vmem:[%s2394 + $0xb8] sm:$0xf]
        %v2442 = vld [vmem:[%s2394 + $0xbc] sm:$0xf]
        %v2491 = vunpack.c.l.b16 %v2395
        %v2492 = vunpack.c.l.b16 %v2396
        %v2493 = vunpack.c.l.b16 %v2397
        %v2494 = vunpack.c.l.b16 %v2398
        %v2495 = vunpack.c.l.b16 %v2399
        %v2496 = vunpack.c.l.b16 %v2400
        %v2497 = vunpack.c.l.b16 %v2401
        %v2498 = vunpack.c.l.b16 %v2402
        %v2499 = vunpack.c.l.b16 %v2403
        %v2500 = vunpack.c.l.b16 %v2404
        %v2501 = vunpack.c.l.b16 %v2405
        %v2502 = vunpack.c.l.b16 %v2406
        %v2503 = vunpack.c.l.b16 %v2407
        %v2504 = vunpack.c.l.b16 %v2408
        %v2505 = vunpack.c.l.b16 %v2409
        %v2506 = vunpack.c.l.b16 %v2410
        %v2507 = vunpack.c.l.b16 %v2411
        %v2508 = vunpack.c.l.b16 %v2412
        %v2509 = vunpack.c.l.b16 %v2413
        %v2510 = vunpack.c.l.b16 %v2414
        %v2511 = vunpack.c.l.b16 %v2415
        %v2512 = vunpack.c.l.b16 %v2416
        %v2513 = vunpack.c.l.b16 %v2417
        %v2514 = vunpack.c.l.b16 %v2418
        %v2515 = vunpack.c.l.b16 %v2419
        %v2516 = vunpack.c.l.b16 %v2420
        %v2517 = vunpack.c.l.b16 %v2421
        %v2518 = vunpack.c.l.b16 %v2422
        %v2519 = vunpack.c.l.b16 %v2423
        %v2520 = vunpack.c.l.b16 %v2424
        %v2521 = vunpack.c.l.b16 %v2425
        %v2522 = vunpack.c.l.b16 %v2426
        %v2523 = vunpack.c.l.b16 %v2427
        %v2524 = vunpack.c.l.b16 %v2428
        %v2525 = vunpack.c.l.b16 %v2429
        %v2526 = vunpack.c.l.b16 %v2430
        %v2527 = vunpack.c.l.b16 %v2431
        %v2528 = vunpack.c.l.b16 %v2432
        %v2529 = vunpack.c.l.b16 %v2433
        %v2530 = vunpack.c.l.b16 %v2434
        %v2531 = vunpack.c.l.b16 %v2435
        %v2532 = vunpack.c.l.b16 %v2436
        %v2533 = vunpack.c.l.b16 %v2437
        %v2534 = vunpack.c.l.b16 %v2438
        %v2535 = vunpack.c.l.b16 %v2439
        %v2536 = vunpack.c.l.b16 %v2440
        %v2537 = vunpack.c.l.b16 %v2441
        %v2538 = vunpack.c.l.b16 %v2442
        %v2539 = vpack.c.b16 %v2492, %v2491
        %v2540 = vpack.c.b16 %v2494, %v2493
        %v2541 = vpack.c.b16 %v2496, %v2495
        %v2542 = vpack.c.b16 %v2498, %v2497
        %v2543 = vpack.c.b16 %v2500, %v2499
        %v2544 = vpack.c.b16 %v2502, %v2501
        %v2545 = vpack.c.b16 %v2504, %v2503
        %v2546 = vpack.c.b16 %v2506, %v2505
        %v2547 = vpack.c.b16 %v2508, %v2507
        %v2548 = vpack.c.b16 %v2510, %v2509
        %v2549 = vpack.c.b16 %v2512, %v2511
        %v2550 = vpack.c.b16 %v2514, %v2513
        %v2551 = vpack.c.b16 %v2516, %v2515
        %v2552 = vpack.c.b16 %v2518, %v2517
        %v2553 = vpack.c.b16 %v2520, %v2519
        %v2554 = vpack.c.b16 %v2522, %v2521
        %v2555 = vpack.c.b16 %v2524, %v2523
        %v2556 = vpack.c.b16 %v2526, %v2525
        %v2557 = vpack.c.b16 %v2528, %v2527
        %v2558 = vpack.c.b16 %v2530, %v2529
        %v2559 = vpack.c.b16 %v2532, %v2531
        %v2560 = vpack.c.b16 %v2534, %v2533
        %v2561 = vpack.c.b16 %v2536, %v2535
        %v2562 = vpack.c.b16 %v2538, %v2537
        %2587 = vmatprep.subr.bf16.mxu0 0
        %2588 = vmatpush1.bf16.msra.mxu0 %v2539
        %2589 = vmatprep.subr.bf16.mxu0 0
        %2590 = vmatpush1.bf16.msra.mxu0 %v2540
        %2591 = vmatprep.subr.bf16.mxu0 0
        %2592 = vmatpush1.bf16.msra.mxu0 %v2541
        %2593 = vmatprep.subr.bf16.mxu0 0
        %2594 = vmatpush1.bf16.msra.mxu0 %v2542
        %2595 = vmatprep.subr.bf16.mxu0 0
        %2596 = vmatpush1.bf16.msra.mxu0 %v2543
        %2597 = vmatprep.subr.bf16.mxu0 0
        %2598 = vmatpush1.bf16.msra.mxu0 %v2544
        %2599 = vmatprep.subr.bf16.mxu0 0
        %2600 = vmatpush1.bf16.msra.mxu0 %v2545
        %2601 = vmatprep.subr.bf16.mxu0 0
        %2602 = vmatpush1.bf16.msra.mxu0 %v2546
        %2603 = vmatprep.subr.bf16.mxu0 0
        %2604 = vmatpush1.bf16.msra.mxu0 %v2547
        %2605 = vmatprep.subr.bf16.mxu0 0
        %2606 = vmatpush1.bf16.msra.mxu0 %v2548
        %2607 = vmatprep.subr.bf16.mxu0 0
        %2608 = vmatpush1.bf16.msra.mxu0 %v2549
        %2609 = vmatprep.subr.bf16.mxu0 0
        %2610 = vmatpush1.bf16.msra.mxu0 %v2550
        %2611 = vmatprep.subr.bf16.mxu0 0
        %2612 = vmatpush1.bf16.msra.mxu0 %v2551
        %2613 = vmatprep.subr.bf16.mxu0 0
        %2614 = vmatpush1.bf16.msra.mxu0 %v2552
        %2615 = vmatprep.subr.bf16.mxu0 0
        %2616 = vmatpush1.bf16.msra.mxu0 %v2553
        %2617 = vmatprep.subr.bf16.mxu0 0
        %2618 = vmatpush1.bf16.msra.mxu0 %v2554
        %2619 = vmatprep.mubr.bf16.mxu0 %v2347
        %2620 = vmatmul.mubr.bf16.gmra.mrb[0].mxu0 %v2346
        %v2621 = vpop.f32.mrb[0].mxu0
        %v2622 = vadd.f32 0.0, %v2621
        %v2623 = vpop.f32.mrb[0].mxu0
        %v2624 = vpop.f32.mrb[0].mxu0
        %v2625 = vadd.f32 0.0, %v2624
        %v2626 = vpop.f32.mrb[0].mxu0
        %2627 = vmatprep.mubr.bf16.mxu0 %v2350
        %2628 = vmatmul.mubr.bf16.gmra.mrb[0].mxu0 %v2349
        %v2629 = vpop.f32.mrb[0].mxu0
        %v2630 = vadd.f32 0.0, %v2629
        %v2631 = vpop.f32.mrb[0].mxu0
        %v2632 = vpop.f32.mrb[0].mxu0
        %v2633 = vadd.f32 0.0, %v2632
        %v2634 = vpop.f32.mrb[0].mxu0
        %2635 = vmatprep.mubr.bf16.mxu0 %v2353
        %2636 = vmatmul.mubr.bf16.gmra.mrb[0].mxu0 %v2352
        %v2637 = vpop.f32.mrb[0].mxu0
        %v2638 = vadd.f32 0.0, %v2637
        %v2639 = vpop.f32.mrb[0].mxu0
        %v2640 = vpop.f32.mrb[0].mxu0
        %v2641 = vadd.f32 0.0, %v2640
        %v2642 = vpop.f32.mrb[0].mxu0
        %2643 = vmatprep.mubr.bf16.mxu0 %v2356
        %2644 = vmatmul.mubr.bf16.gmra.mrb[0].mxu0 %v2355
        %v2645 = vpop.f32.mrb[0].mxu0
        %v2646 = vadd.f32 0.0, %v2645
        %v2647 = vpop.f32.mrb[0].mxu0
        %v2648 = vpop.f32.mrb[0].mxu0
        %v2649 = vadd.f32 0.0, %v2648
        %v2650 = vpop.f32.mrb[0].mxu0
        %2651 = vmatprep.mubr.bf16.mxu0 %v2359
        %2652 = vmatmul.mubr.bf16.gmra.mrb[0].mxu0 %v2358
        %v2653 = vpop.f32.mrb[0].mxu0
        %v2654 = vadd.f32 0.0, %v2653
        %v2655 = vpop.f32.mrb[0].mxu0
        %v2656 = vpop.f32.mrb[0].mxu0
        %v2657 = vadd.f32 0.0, %v2656
        %v2658 = vpop.f32.mrb[0].mxu0
        %2659 = vmatprep.mubr.bf16.mxu0 %v2362
        %2660 = vmatmul.mubr.bf16.gmra.mrb[0].mxu0 %v2361
        %v2661 = vpop.f32.mrb[0].mxu0
        %v2662 = vadd.f32 0.0, %v2661
        %v2663 = vpop.f32.mrb[0].mxu0
        %v2664 = vpop.f32.mrb[0].mxu0
        %v2665 = vadd.f32 0.0, %v2664
        %v2666 = vpop.f32.mrb[0].mxu0
        %2667 = vmatprep.mubr.bf16.mxu0 %v2365
        %2668 = vmatmul.mubr.bf16.gmra.mrb[0].mxu0 %v2364
        %v2669 = vpop.f32.mrb[0].mxu0
        %v2670 = vadd.f32 0.0, %v2669
        %v2671 = vpop.f32.mrb[0].mxu0
        %v2672 = vpop.f32.mrb[0].mxu0
        %v2673 = vadd.f32 0.0, %v2672
        %v2674 = vpop.f32.mrb[0].mxu0
        %2675 = vmatprep.mubr.bf16.mxu0 %v2368
        %2676 = vmatmul.mubr.bf16.gmra.mrb[0].mxu0 %v2367
        %v2677 = vpop.f32.mrb[0].mxu0
        %v2678 = vadd.f32 0.0, %v2677
        %v2679 = vpop.f32.mrb[0].mxu0
        %v2680 = vpop.f32.mrb[0].mxu0
        %v2681 = vadd.f32 0.0, %v2680
        %v2682 = vpop.f32.mrb[0].mxu0
        %2683 = vmatprep.mubr.bf16.mxu0 %v2371
        %2684 = vmatmul.mubr.bf16.gmra.mrb[0].mxu0 %v2370
        %v2685 = vpop.f32.mrb[0].mxu0
        %v2686 = vadd.f32 0.0, %v2685
        %v2687 = vpop.f32.mrb[0].mxu0
        %v2688 = vpop.f32.mrb[0].mxu0
        %v2689 = vadd.f32 0.0, %v2688
        %v2690 = vpop.f32.mrb[0].mxu0
        %2691 = vmatprep.mubr.bf16.mxu0 %v2374
        %2692 = vmatmul.mubr.bf16.gmra.mrb[0].mxu0 %v2373
        %v2693 = vpop.f32.mrb[0].mxu0
        %v2694 = vadd.f32 0.0, %v2693
        %v2695 = vpop.f32.mrb[0].mxu0
        %v2696 = vpop.f32.mrb[0].mxu0
        %v2697 = vadd.f32 0.0, %v2696
        %v2698 = vpop.f32.mrb[0].mxu0
        %2699 = vmatprep.mubr.bf16.mxu0 %v2377
        %2700 = vmatmul.mubr.bf16.gmra.mrb[0].mxu0 %v2376
        %v2701 = vpop.f32.mrb[0].mxu0
        %v2702 = vadd.f32 0.0, %v2701
        %v2703 = vpop.f32.mrb[0].mxu0
        %v2704 = vpop.f32.mrb[0].mxu0
        %v2705 = vadd.f32 0.0, %v2704
        %v2706 = vpop.f32.mrb[0].mxu0
        %2707 = vmatprep.mubr.bf16.mxu0 %v2380
        %2708 = vmatmul.mubr.bf16.gmra.mrb[0].mxu0 %v2379
        %v2709 = vpop.f32.mrb[0].mxu0
        %v2710 = vadd.f32 0.0, %v2709
        %v2711 = vpop.f32.mrb[0].mxu0
        %v2712 = vpop.f32.mrb[0].mxu0
        %v2713 = vadd.f32 0.0, %v2712
        %v2714 = vpop.f32.mrb[0].mxu0
        %2715 = vmatprep.mubr.bf16.mxu0 %v2383
        %2716 = vmatmul.mubr.bf16.gmra.mrb[0].mxu0 %v2382
        %v2717 = vpop.f32.mrb[0].mxu0
        %v2718 = vadd.f32 0.0, %v2717
        %v2719 = vpop.f32.mrb[0].mxu0
        %v2720 = vpop.f32.mrb[0].mxu0
        %v2721 = vadd.f32 0.0, %v2720
        %v2722 = vpop.f32.mrb[0].mxu0
        %2723 = vmatprep.mubr.bf16.mxu0 %v2386
        %2724 = vmatmul.mubr.bf16.gmra.mrb[0].mxu0 %v2385
        %v2725 = vpop.f32.mrb[0].mxu0
        %v2726 = vadd.f32 0.0, %v2725
        %v2727 = vpop.f32.mrb[0].mxu0
        %v2728 = vpop.f32.mrb[0].mxu0
        %v2729 = vadd.f32 0.0, %v2728
        %v2730 = vpop.f32.mrb[0].mxu0
        %2731 = vmatprep.mubr.bf16.mxu0 %v2389
        %2732 = vmatmul.mubr.bf16.gmra.mrb[0].mxu0 %v2388
        %v2733 = vpop.f32.mrb[0].mxu0
        %v2734 = vadd.f32 0.0, %v2733
        %v2735 = vpop.f32.mrb[0].mxu0
        %v2736 = vpop.f32.mrb[0].mxu0
        %v2737 = vadd.f32 0.0, %v2736
        %v2738 = vpop.f32.mrb[0].mxu0
        %2739 = vmatprep.mubr.bf16.mxu0 %v2392
        %2740 = vmatmul.mubr.bf16.gmra.mrb[0].mxu0 %v2391
        %v2741 = vpop.f32.mrb[0].mxu0
        %v2742 = vadd.f32 0.0, %v2741
        %v2743 = vpop.f32.mrb[0].mxu0
        %v2744 = vpop.f32.mrb[0].mxu0
        %v2745 = vadd.f32 0.0, %v2744
        %v2746 = vpop.f32.mrb[0].mxu0
        %2747 = vdwg.mxu0
        %2748 = vmatprep.subr.bf16.mxu0 0
        %2749 = vmatpush1.bf16.msra.mxu0 %v2555
        %2750 = vmatprep.subr.bf16.mxu0 0
        %2751 = vmatpush1.bf16.msra.mxu0 %v2556
        %2752 = vmatprep.subr.bf16.mxu0 0
        %2753 = vmatpush1.bf16.msra.mxu0 %v2557
        %2754 = vmatprep.subr.bf16.mxu0 0
        %2755 = vmatpush1.bf16.msra.mxu0 %v2558
        %2756 = vmatprep.subr.bf16.mxu0 0
        %2757 = vmatpush1.bf16.msra.mxu0 %v2559
        %2758 = vmatprep.subr.bf16.mxu0 0
        %2759 = vmatpush1.bf16.msra.mxu0 %v2560
        %2760 = vmatprep.subr.bf16.mxu0 0
        %2761 = vmatpush1.bf16.msra.mxu0 %v2561
        %2762 = vmatprep.subr.bf16.mxu0 0
        %2763 = vmatpush1.bf16.msra.mxu0 %v2562
        %2764 = vmatprep.subr.bf16.mxu0 0
        %2765 = vmatpush1.bf16.msra.mxu0 0
        %2766 = vmatprep.subr.bf16.mxu0 0
        %2767 = vmatpush1.bf16.msra.mxu0 0
        %2768 = vmatprep.subr.bf16.mxu0 0
        %2769 = vmatpush1.bf16.msra.mxu0 0
        %2770 = vmatprep.subr.bf16.mxu0 0
        %2771 = vmatpush1.bf16.msra.mxu0 0
        %2772 = vmatprep.subr.bf16.mxu0 0
        %2773 = vmatpush1.bf16.msra.mxu0 0
        %2774 = vmatprep.subr.bf16.mxu0 0
        %2775 = vmatpush1.bf16.msra.mxu0 0
        %2776 = vmatprep.subr.bf16.mxu0 0
        %2777 = vmatpush1.bf16.msra.mxu0 0
        %2778 = vmatprep.subr.bf16.mxu0 0
        %2779 = vmatpush1.bf16.msra.mxu0 0
        %2780 = vmatprep.mubr.bf16.mxu0 0
        %2781 = vmatmul.mubr.bf16.gmra.mrb[0].mxu0 %v2348
        %v2782 = vpop.f32.mrb[0].mxu0
        %v2783 = vadd.f32 %v2622, %v2782
        %v2784 = vpop.f32.mrb[0].mxu0
        %v2785 = vpop.f32.mrb[0].mxu0
        %v2786 = vadd.f32 %v2625, %v2785
        %v2787 = vpop.f32.mrb[0].mxu0
        %2788 = vmatprep.mubr.bf16.mxu0 0
        %2789 = vmatmul.mubr.bf16.gmra.mrb[0].mxu0 %v2351
        %v2790 = vpop.f32.mrb[0].mxu0
        %v2791 = vadd.f32 %v2630, %v2790
        %v2792 = vpop.f32.mrb[0].mxu0
        %v2793 = vpop.f32.mrb[0].mxu0
        %v2794 = vadd.f32 %v2633, %v2793
        %v2795 = vpop.f32.mrb[0].mxu0
        %2796 = vmatprep.mubr.bf16.mxu0 0
        %2797 = vmatmul.mubr.bf16.gmra.mrb[0].mxu0 %v2354
        %v2798 = vpop.f32.mrb[0].mxu0
        %v2799 = vadd.f32 %v2638, %v2798
        %v2800 = vpop.f32.mrb[0].mxu0
        %v2801 = vpop.f32.mrb[0].mxu0
        %v2802 = vadd.f32 %v2641, %v2801
        %v2803 = vpop.f32.mrb[0].mxu0
        %2804 = vmatprep.mubr.bf16.mxu0 0
        %2805 = vmatmul.mubr.bf16.gmra.mrb[0].mxu0 %v2357
        %v2806 = vpop.f32.mrb[0].mxu0
        %v2807 = vadd.f32 %v2646, %v2806
        %v2808 = vpop.f32.mrb[0].mxu0
        %v2809 = vpop.f32.mrb[0].mxu0
        %v2810 = vadd.f32 %v2649, %v2809
        %v2811 = vpop.f32.mrb[0].mxu0
        %2812 = vmatprep.mubr.bf16.mxu0 0
        %2813 = vmatmul.mubr.bf16.gmra.mrb[0].mxu0 %v2360
        %v2814 = vpop.f32.mrb[0].mxu0
        %v2815 = vadd.f32 %v2654, %v2814
        %v2816 = vpop.f32.mrb[0].mxu0
        %v2817 = vpop.f32.mrb[0].mxu0
        %v2818 = vadd.f32 %v2657, %v2817
        %v2819 = vpop.f32.mrb[0].mxu0
        %2820 = vmatprep.mubr.bf16.mxu0 0
        %2821 = vmatmul.mubr.bf16.gmra.mrb[0].mxu0 %v2363
        %v2822 = vpop.f32.mrb[0].mxu0
        %v2823 = vadd.f32 %v2662, %v2822
        %v2824 = vpop.f32.mrb[0].mxu0
        %v2825 = vpop.f32.mrb[0].mxu0
        %v2826 = vadd.f32 %v2665, %v2825
        %v2827 = vpop.f32.mrb[0].mxu0
        %2828 = vmatprep.mubr.bf16.mxu0 0
        %2829 = vmatmul.mubr.bf16.gmra.mrb[0].mxu0 %v2366
        %v2830 = vpop.f32.mrb[0].mxu0
        %v2831 = vadd.f32 %v2670, %v2830
        %v2832 = vpop.f32.mrb[0].mxu0
        %v2833 = vpop.f32.mrb[0].mxu0
        %v2834 = vadd.f32 %v2673, %v2833
        %v2835 = vpop.f32.mrb[0].mxu0
        %2836 = vmatprep.mubr.bf16.mxu0 0
        %2837 = vmatmul.mubr.bf16.gmra.mrb[0].mxu0 %v2369
        %v2838 = vpop.f32.mrb[0].mxu0
        %v2839 = vadd.f32 %v2678, %v2838
        %v2840 = vpop.f32.mrb[0].mxu0
        %v2841 = vpop.f32.mrb[0].mxu0
        %v2842 = vadd.f32 %v2681, %v2841
        %v2843 = vpop.f32.mrb[0].mxu0
        %2844 = vmatprep.mubr.bf16.mxu0 0
        %2845 = vmatmul.mubr.bf16.gmra.mrb[0].mxu0 %v2372
        %v2846 = vpop.f32.mrb[0].mxu0
        %v2847 = vadd.f32 %v2686, %v2846
        %v2848 = vpop.f32.mrb[0].mxu0
        %v2849 = vpop.f32.mrb[0].mxu0
        %v2850 = vadd.f32 %v2689, %v2849
        %v2851 = vpop.f32.mrb[0].mxu0
        %2852 = vmatprep.mubr.bf16.mxu0 0
        %2853 = vmatmul.mubr.bf16.gmra.mrb[0].mxu0 %v2375
        %v2854 = vpop.f32.mrb[0].mxu0
        %v2855 = vadd.f32 %v2694, %v2854
        %v2856 = vpop.f32.mrb[0].mxu0
        %v2857 = vpop.f32.mrb[0].mxu0
        %v2858 = vadd.f32 %v2697, %v2857
        %v2859 = vpop.f32.mrb[0].mxu0
        %2860 = vmatprep.mubr.bf16.mxu0 0
        %2861 = vmatmul.mubr.bf16.gmra.mrb[0].mxu0 %v2378
        %v2862 = vpop.f32.mrb[0].mxu0
        %v2863 = vadd.f32 %v2702, %v2862
        %v2864 = vpop.f32.mrb[0].mxu0
        %v2865 = vpop.f32.mrb[0].mxu0
        %v2866 = vadd.f32 %v2705, %v2865
        %v2867 = vpop.f32.mrb[0].mxu0
        %2868 = vmatprep.mubr.bf16.mxu0 0
        %2869 = vmatmul.mubr.bf16.gmra.mrb[0].mxu0 %v2381
        %v2870 = vpop.f32.mrb[0].mxu0
        %v2871 = vadd.f32 %v2710, %v2870
        %v2872 = vpop.f32.mrb[0].mxu0
        %v2873 = vpop.f32.mrb[0].mxu0
        %v2874 = vadd.f32 %v2713, %v2873
        %v2875 = vpop.f32.mrb[0].mxu0
        %2876 = vmatprep.mubr.bf16.mxu0 0
        %2877 = vmatmul.mubr.bf16.gmra.mrb[0].mxu0 %v2384
        %v2878 = vpop.f32.mrb[0].mxu0
        %v2879 = vadd.f32 %v2718, %v2878
        %v2880 = vpop.f32.mrb[0].mxu0
        %v2881 = vpop.f32.mrb[0].mxu0
        %v2882 = vadd.f32 %v2721, %v2881
        %v2883 = vpop.f32.mrb[0].mxu0
        %2884 = vmatprep.mubr.bf16.mxu0 0
        %2885 = vmatmul.mubr.bf16.gmra.mrb[0].mxu0 %v2387
        %v2886 = vpop.f32.mrb[0].mxu0
        %v2887 = vadd.f32 %v2726, %v2886
        %v2888 = vpop.f32.mrb[0].mxu0
        %v2889 = vpop.f32.mrb[0].mxu0
        %v2890 = vadd.f32 %v2729, %v2889
        %v2891 = vpop.f32.mrb[0].mxu0
        %2892 = vmatprep.mubr.bf16.mxu0 0
        %2893 = vmatmul.mubr.bf16.gmra.mrb[0].mxu0 %v2390
        %v2894 = vpop.f32.mrb[0].mxu0
        %v2895 = vadd.f32 %v2734, %v2894
        %v2896 = vpop.f32.mrb[0].mxu0
        %v2897 = vpop.f32.mrb[0].mxu0
        %v2898 = vadd.f32 %v2737, %v2897
        %v2899 = vpop.f32.mrb[0].mxu0
        %2900 = vmatprep.mubr.bf16.mxu0 0
        %2901 = vmatmul.mubr.bf16.gmra.mrb[0].mxu0 %v2393
        %v2902 = vpop.f32.mrb[0].mxu0
        %v2903 = vadd.f32 %v2742, %v2902
        %v2904 = vpop.f32.mrb[0].mxu0
        %v2905 = vpop.f32.mrb[0].mxu0
        %v2906 = vadd.f32 %v2745, %v2905
        %v2907 = vpop.f32.mrb[0].mxu0
        %2908 = vdwg.mxu0
        %v2909 = vadd.f32 %v2219, %v2783
        %v2910 = vadd.f32 %v2222, %v2786
        %v2911 = vadd.f32 %v2227, %v2791
        %v2912 = vadd.f32 %v2230, %v2794
        %v2913 = vadd.f32 %v2235, %v2799
        %v2914 = vadd.f32 %v2238, %v2802
        %v2915 = vadd.f32 %v2243, %v2807
        %v2916 = vadd.f32 %v2246, %v2810
        %v2917 = vadd.f32 %v2251, %v2815
        %v2918 = vadd.f32 %v2254, %v2818
        %v2919 = vadd.f32 %v2259, %v2823
        %v2920 = vadd.f32 %v2262, %v2826
        %v2921 = vadd.f32 %v2267, %v2831
        %v2922 = vadd.f32 %v2270, %v2834
        %v2923 = vadd.f32 %v2275, %v2839
        %v2924 = vadd.f32 %v2278, %v2842
        %v2925 = vadd.f32 %v2283, %v2847
        %v2926 = vadd.f32 %v2286, %v2850
        %v2927 = vadd.f32 %v2291, %v2855
        %v2928 = vadd.f32 %v2294, %v2858
        %v2929 = vadd.f32 %v2299, %v2863
        %v2930 = vadd.f32 %v2302, %v2866
        %v2931 = vadd.f32 %v2307, %v2871
        %v2932 = vadd.f32 %v2310, %v2874
        %v2933 = vadd.f32 %v2315, %v2879
        %v2934 = vadd.f32 %v2318, %v2882
        %v2935 = vadd.f32 %v2323, %v2887
        %v2936 = vadd.f32 %v2326, %v2890
        %v2937 = vadd.f32 %v2331, %v2895
        %v2938 = vadd.f32 %v2334, %v2898
        %v2939 = vadd.f32 %v2339, %v2903
        %v2940 = vadd.f32 %v2342, %v2906
        %v2941 = vld [vmem:[%s4] sm:$0x1]
        %v2942 = vlaneseq
        %v2943 = vshrl.u32 %v2942, 7
        %v2944 = vsub.s32 0, %v2943
        %v2945 = vrot.slane %v2941, %v2944
        %v2946 = vmul.f32 %v2909, %v2945
        %v2947 = vmul.f32 %v2910, %v2945
        %v2948 = vmul.f32 %v2911, %v2945
        %v2949 = vmul.f32 %v2912, %v2945
        %v2950 = vmul.f32 %v2913, %v2945
        %v2951 = vmul.f32 %v2914, %v2945
        %v2952 = vmul.f32 %v2915, %v2945
        %v2953 = vmul.f32 %v2916, %v2945
        %v2954 = vmul.f32 %v2917, %v2945
        %v2955 = vmul.f32 %v2918, %v2945
        %v2956 = vmul.f32 %v2919, %v2945
        %v2957 = vmul.f32 %v2920, %v2945
        %v2958 = vmul.f32 %v2921, %v2945
        %v2959 = vmul.f32 %v2922, %v2945
        %v2960 = vmul.f32 %v2923, %v2945
        %v2961 = vmul.f32 %v2924, %v2945
        %v2962 = vmul.f32 %v2925, %v2945
        %v2963 = vmul.f32 %v2926, %v2945
        %v2964 = vmul.f32 %v2927, %v2945
        %v2965 = vmul.f32 %v2928, %v2945
        %v2966 = vmul.f32 %v2929, %v2945
        %v2967 = vmul.f32 %v2930, %v2945
        %v2968 = vmul.f32 %v2931, %v2945
        %v2969 = vmul.f32 %v2932, %v2945
        %v2970 = vmul.f32 %v2933, %v2945
        %v2971 = vmul.f32 %v2934, %v2945
        %v2972 = vmul.f32 %v2935, %v2945
        %v2973 = vmul.f32 %v2936, %v2945
        %v2974 = vmul.f32 %v2937, %v2945
        %v2975 = vmul.f32 %v2938, %v2945
        %v2976 = vmul.f32 %v2939, %v2945
        %v2977 = vmul.f32 %v2940, %v2945
        %v2978 = vld [vmem:[%s4 + $0x1] sm:$0x1]
        %v2979 = vlaneseq
        %v2980 = vshrl.u32 %v2979, 7
        %v2981 = vsub.s32 0, %v2980
        %v2982 = vrot.slane %v2978, %v2981
        %v2983 = vadd.f32 %v2946, %v2982
        %v2984 = vadd.f32 %v2947, %v2982
        %v2985 = vadd.f32 %v2948, %v2982
        %v2986 = vadd.f32 %v2949, %v2982
        %v2987 = vadd.f32 %v2950, %v2982
        %v2988 = vadd.f32 %v2951, %v2982
        %v2989 = vadd.f32 %v2952, %v2982
        %v2990 = vadd.f32 %v2953, %v2982
        %v2991 = vadd.f32 %v2954, %v2982
        %v2992 = vadd.f32 %v2955, %v2982
        %v2993 = vadd.f32 %v2956, %v2982
        %v2994 = vadd.f32 %v2957, %v2982
        %v2995 = vadd.f32 %v2958, %v2982
        %v2996 = vadd.f32 %v2959, %v2982
        %v2997 = vadd.f32 %v2960, %v2982
        %v2998 = vadd.f32 %v2961, %v2982
        %v2999 = vadd.f32 %v2962, %v2982
        %v3000 = vadd.f32 %v2963, %v2982
        %v3001 = vadd.f32 %v2964, %v2982
        %v3002 = vadd.f32 %v2965, %v2982
        %v3003 = vadd.f32 %v2966, %v2982
        %v3004 = vadd.f32 %v2967, %v2982
        %v3005 = vadd.f32 %v2968, %v2982
        %v3006 = vadd.f32 %v2969, %v2982
        %v3007 = vadd.f32 %v2970, %v2982
        %v3008 = vadd.f32 %v2971, %v2982
        %v3009 = vadd.f32 %v2972, %v2982
        %v3010 = vadd.f32 %v2973, %v2982
        %v3011 = vadd.f32 %v2974, %v2982
        %v3012 = vadd.f32 %v2975, %v2982
        %v3013 = vadd.f32 %v2976, %v2982
        %v3014 = vadd.f32 %v2977, %v2982
        %v3015 = vmax.f32 %v2983, 0.0
        %v3016 = vmax.f32 %v2984, 0.0
        %v3017 = vmax.f32 %v2985, 0.0
        %v3018 = vmax.f32 %v2986, 0.0
        %v3019 = vmax.f32 %v2987, 0.0
        %v3020 = vmax.f32 %v2988, 0.0
        %v3021 = vmax.f32 %v2989, 0.0
        %v3022 = vmax.f32 %v2990, 0.0
        %v3023 = vmax.f32 %v2991, 0.0
        %v3024 = vmax.f32 %v2992, 0.0
        %v3025 = vmax.f32 %v2993, 0.0
        %v3026 = vmax.f32 %v2994, 0.0
        %v3027 = vmax.f32 %v2995, 0.0
        %v3028 = vmax.f32 %v2996, 0.0
        %v3029 = vmax.f32 %v2997, 0.0
        %v3030 = vmax.f32 %v2998, 0.0
        %v3031 = vmax.f32 %v2999, 0.0
        %v3032 = vmax.f32 %v3000, 0.0
        %v3033 = vmax.f32 %v3001, 0.0
        %v3034 = vmax.f32 %v3002, 0.0
        %v3035 = vmax.f32 %v3003, 0.0
        %v3036 = vmax.f32 %v3004, 0.0
        %v3037 = vmax.f32 %v3005, 0.0
        %v3038 = vmax.f32 %v3006, 0.0
        %v3039 = vmax.f32 %v3007, 0.0
        %v3040 = vmax.f32 %v3008, 0.0
        %v3041 = vmax.f32 %v3009, 0.0
        %v3042 = vmax.f32 %v3010, 0.0
        %v3043 = vmax.f32 %v3011, 0.0
        %v3044 = vmax.f32 %v3012, 0.0
        %v3045 = vmax.f32 %v3013, 0.0
        %v3046 = vmax.f32 %v3014, 0.0
        %v3047 = vpack.c.bf16 %v3016, %v3015
        %v3048 = vpack.c.bf16 %v3018, %v3017
        %v3049 = vpack.c.bf16 %v3020, %v3019
        %v3050 = vpack.c.bf16 %v3022, %v3021
        %v3051 = vpack.c.bf16 %v3024, %v3023
        %v3052 = vpack.c.bf16 %v3026, %v3025
        %v3053 = vpack.c.bf16 %v3028, %v3027
        %v3054 = vpack.c.bf16 %v3030, %v3029
        %v3055 = vpack.c.bf16 %v3032, %v3031
        %v3056 = vpack.c.bf16 %v3034, %v3033
        %v3057 = vpack.c.bf16 %v3036, %v3035
        %v3058 = vpack.c.bf16 %v3038, %v3037
        %v3059 = vpack.c.bf16 %v3040, %v3039
        %v3060 = vpack.c.bf16 %v3042, %v3041
        %v3061 = vpack.c.bf16 %v3044, %v3043
        %v3062 = vpack.c.bf16 %v3046, %v3045
        %v3063 = vld [vmem:[#allocation9] sm:$0xf]
        %v3064 = vld [vmem:[#allocation9 + $0x4] sm:$0xf]
        %v3065 = vld [vmem:[#allocation9 + $0x8] sm:$0xf]
        %v3066 = vld [vmem:[#allocation9 + $0xc] sm:$0xf]
        %v3067 = vld [vmem:[#allocation9 + $0x10] sm:$0xf]
        %v3068 = vld [vmem:[#allocation9 + $0x14] sm:$0xf]
        %v3069 = vld [vmem:[#allocation9 + $0x18] sm:$0xf]
        %v3070 = vld [vmem:[#allocation9 + $0x1c] sm:$0xf]
        %v3071 = vld [vmem:[#allocation9 + $0x20] sm:$0xf]
        %v3072 = vld [vmem:[#allocation9 + $0x24] sm:$0xf]
        %v3073 = vld [vmem:[#allocation9 + $0x28] sm:$0xf]
        %v3074 = vld [vmem:[#allocation9 + $0x2c] sm:$0xf]
        %v3075 = vld [vmem:[#allocation9 + $0x30] sm:$0xf]
        %v3076 = vld [vmem:[#allocation9 + $0x34] sm:$0xf]
        %v3077 = vld [vmem:[#allocation9 + $0x38] sm:$0xf]
        %v3078 = vld [vmem:[#allocation9 + $0x3c] sm:$0xf]
        %v3095 = vunpack.c.l.b16 %v3063
        %v3096 = vunpack.c.l.b16 %v3064
        %v3097 = vunpack.c.l.b16 %v3065
        %v3098 = vunpack.c.l.b16 %v3066
        %v3099 = vunpack.c.l.b16 %v3067
        %v3100 = vunpack.c.l.b16 %v3068
        %v3101 = vunpack.c.l.b16 %v3069
        %v3102 = vunpack.c.l.b16 %v3070
        %v3103 = vunpack.c.l.b16 %v3071
        %v3104 = vunpack.c.l.b16 %v3072
        %v3105 = vunpack.c.l.b16 %v3073
        %v3106 = vunpack.c.l.b16 %v3074
        %v3107 = vunpack.c.l.b16 %v3075
        %v3108 = vunpack.c.l.b16 %v3076
        %v3109 = vunpack.c.l.b16 %v3077
        %v3110 = vunpack.c.l.b16 %v3078
        %v3111 = vpack.c.b16 %v3096, %v3095
        %v3112 = vpack.c.b16 %v3098, %v3097
        %v3113 = vpack.c.b16 %v3100, %v3099
        %v3114 = vpack.c.b16 %v3102, %v3101
        %v3115 = vpack.c.b16 %v3104, %v3103
        %v3116 = vpack.c.b16 %v3106, %v3105
        %v3117 = vpack.c.b16 %v3108, %v3107
        %v3118 = vpack.c.b16 %v3110, %v3109
        %3127 = vmatprep.subr.bf16.mxu0 0
        %3128 = vmatpush1.bf16.msra.mxu0 %v3111
        %3129 = vmatprep.subr.bf16.mxu0 0
        %3130 = vmatpush1.bf16.msra.mxu0 %v3112
        %3131 = vmatprep.subr.bf16.mxu0 0
        %3132 = vmatpush1.bf16.msra.mxu0 %v3113
        %3133 = vmatprep.subr.bf16.mxu0 0
        %3134 = vmatpush1.bf16.msra.mxu0 %v3114
        %3135 = vmatprep.subr.bf16.mxu0 0
        %3136 = vmatpush1.bf16.msra.mxu0 %v3115
        %3137 = vmatprep.subr.bf16.mxu0 0
        %3138 = vmatpush1.bf16.msra.mxu0 %v3116
        %3139 = vmatprep.subr.bf16.mxu0 0
        %3140 = vmatpush1.bf16.msra.mxu0 %v3117
        %3141 = vmatprep.subr.bf16.mxu0 0
        %3142 = vmatpush1.bf16.msra.mxu0 %v3118
        %3143 = vmatprep.subr.bf16.mxu0 0
        %3144 = vmatpush1.bf16.msra.mxu0 0
        %3145 = vmatprep.subr.bf16.mxu0 0
        %3146 = vmatpush1.bf16.msra.mxu0 0
        %3147 = vmatprep.subr.bf16.mxu0 0
        %3148 = vmatpush1.bf16.msra.mxu0 0
        %3149 = vmatprep.subr.bf16.mxu0 0
        %3150 = vmatpush1.bf16.msra.mxu0 0
        %3151 = vmatprep.subr.bf16.mxu0 0
        %3152 = vmatpush1.bf16.msra.mxu0 0
        %3153 = vmatprep.subr.bf16.mxu0 0
        %3154 = vmatpush1.bf16.msra.mxu0 0
        %3155 = vmatprep.subr.bf16.mxu0 0
        %3156 = vmatpush1.bf16.msra.mxu0 0
        %3157 = vmatprep.subr.bf16.mxu0 0
        %3158 = vmatpush1.bf16.msra.mxu0 0
        %3159 = vmatprep.mubr.bf16.mxu0 0
        %3160 = vmatmul.mubr.bf16.gmra.mrb[0].mxu0 %v3047
        %v3161 = vpop.f32.mrb[0].mxu0
        %v3162 = vadd.f32 0.0, %v3161
        %v3163 = vpop.f32.mrb[0].mxu0
        %v3164 = vpop.f32.mrb[0].mxu0
        %v3165 = vadd.f32 0.0, %v3164
        %v3166 = vpop.f32.mrb[0].mxu0
        %3167 = vmatprep.mubr.bf16.mxu0 0
        %3168 = vmatmul.mubr.bf16.gmra.mrb[0].mxu0 %v3048
        %v3169 = vpop.f32.mrb[0].mxu0
        %v3170 = vadd.f32 0.0, %v3169
        %v3171 = vpop.f32.mrb[0].mxu0
        %v3172 = vpop.f32.mrb[0].mxu0
        %v3173 = vadd.f32 0.0, %v3172
        %v3174 = vpop.f32.mrb[0].mxu0
        %3175 = vmatprep.mubr.bf16.mxu0 0
        %3176 = vmatmul.mubr.bf16.gmra.mrb[0].mxu0 %v3049
        %v3177 = vpop.f32.mrb[0].mxu0
        %v3178 = vadd.f32 0.0, %v3177
        %v3179 = vpop.f32.mrb[0].mxu0
        %v3180 = vpop.f32.mrb[0].mxu0
        %v3181 = vadd.f32 0.0, %v3180
        %v3182 = vpop.f32.mrb[0].mxu0
        %3183 = vmatprep.mubr.bf16.mxu0 0
        %3184 = vmatmul.mubr.bf16.gmra.mrb[0].mxu0 %v3050
        %v3185 = vpop.f32.mrb[0].mxu0
        %v3186 = vadd.f32 0.0, %v3185
        %v3187 = vpop.f32.mrb[0].mxu0
        %v3188 = vpop.f32.mrb[0].mxu0
        %v3189 = vadd.f32 0.0, %v3188
        %v3190 = vpop.f32.mrb[0].mxu0
        %3191 = vmatprep.mubr.bf16.mxu0 0
        %3192 = vmatmul.mubr.bf16.gmra.mrb[0].mxu0 %v3051
        %v3193 = vpop.f32.mrb[0].mxu0
        %v3194 = vadd.f32 0.0, %v3193
        %v3195 = vpop.f32.mrb[0].mxu0
        %v3196 = vpop.f32.mrb[0].mxu0
        %v3197 = vadd.f32 0.0, %v3196
        %v3198 = vpop.f32.mrb[0].mxu0
        %3199 = vmatprep.mubr.bf16.mxu0 0
        %3200 = vmatmul.mubr.bf16.gmra.mrb[0].mxu0 %v3052
        %v3201 = vpop.f32.mrb[0].mxu0
        %v3202 = vadd.f32 0.0, %v3201
        %v3203 = vpop.f32.mrb[0].mxu0
        %v3204 = vpop.f32.mrb[0].mxu0
        %v3205 = vadd.f32 0.0, %v3204
        %v3206 = vpop.f32.mrb[0].mxu0
        %3207 = vmatprep.mubr.bf16.mxu0 0
        %3208 = vmatmul.mubr.bf16.gmra.mrb[0].mxu0 %v3053
        %v3209 = vpop.f32.mrb[0].mxu0
        %v3210 = vadd.f32 0.0, %v3209
        %v3211 = vpop.f32.mrb[0].mxu0
        %v3212 = vpop.f32.mrb[0].mxu0
        %v3213 = vadd.f32 0.0, %v3212
        %v3214 = vpop.f32.mrb[0].mxu0
        %3215 = vmatprep.mubr.bf16.mxu0 0
        %3216 = vmatmul.mubr.bf16.gmra.mrb[0].mxu0 %v3054
        %v3217 = vpop.f32.mrb[0].mxu0
        %v3218 = vadd.f32 0.0, %v3217
        %v3219 = vpop.f32.mrb[0].mxu0
        %v3220 = vpop.f32.mrb[0].mxu0
        %v3221 = vadd.f32 0.0, %v3220
        %v3222 = vpop.f32.mrb[0].mxu0
        %3223 = vmatprep.mubr.bf16.mxu0 0
        %3224 = vmatmul.mubr.bf16.gmra.mrb[0].mxu0 %v3055
        %v3225 = vpop.f32.mrb[0].mxu0
        %v3226 = vadd.f32 0.0, %v3225
        %v3227 = vpop.f32.mrb[0].mxu0
        %v3228 = vpop.f32.mrb[0].mxu0
        %v3229 = vadd.f32 0.0, %v3228
        %v3230 = vpop.f32.mrb[0].mxu0
        %3231 = vmatprep.mubr.bf16.mxu0 0
        %3232 = vmatmul.mubr.bf16.gmra.mrb[0].mxu0 %v3056
        %v3233 = vpop.f32.mrb[0].mxu0
        %v3234 = vadd.f32 0.0, %v3233
        %v3235 = vpop.f32.mrb[0].mxu0
        %v3236 = vpop.f32.mrb[0].mxu0
        %v3237 = vadd.f32 0.0, %v3236
        %v3238 = vpop.f32.mrb[0].mxu0
        %3239 = vmatprep.mubr.bf16.mxu0 0
        %3240 = vmatmul.mubr.bf16.gmra.mrb[0].mxu0 %v3057
        %v3241 = vpop.f32.mrb[0].mxu0
        %v3242 = vadd.f32 0.0, %v3241
        %v3243 = vpop.f32.mrb[0].mxu0
        %v3244 = vpop.f32.mrb[0].mxu0
        %v3245 = vadd.f32 0.0, %v3244
        %v3246 = vpop.f32.mrb[0].mxu0
        %3247 = vmatprep.mubr.bf16.mxu0 0
        %3248 = vmatmul.mubr.bf16.gmra.mrb[0].mxu0 %v3058
        %v3249 = vpop.f32.mrb[0].mxu0
        %v3250 = vadd.f32 0.0, %v3249
        %v3251 = vpop.f32.mrb[0].mxu0
        %v3252 = vpop.f32.mrb[0].mxu0
        %v3253 = vadd.f32 0.0, %v3252
        %v3254 = vpop.f32.mrb[0].mxu0
        %3255 = vmatprep.mubr.bf16.mxu0 0
        %3256 = vmatmul.mubr.bf16.gmra.mrb[0].mxu0 %v3059
        %v3257 = vpop.f32.mrb[0].mxu0
        %v3258 = vadd.f32 0.0, %v3257
        %v3259 = vpop.f32.mrb[0].mxu0
        %v3260 = vpop.f32.mrb[0].mxu0
        %v3261 = vadd.f32 0.0, %v3260
        %v3262 = vpop.f32.mrb[0].mxu0
        %3263 = vmatprep.mubr.bf16.mxu0 0
        %3264 = vmatmul.mubr.bf16.gmra.mrb[0].mxu0 %v3060
        %v3265 = vpop.f32.mrb[0].mxu0
        %v3266 = vadd.f32 0.0, %v3265
        %v3267 = vpop.f32.mrb[0].mxu0
        %v3268 = vpop.f32.mrb[0].mxu0
        %v3269 = vadd.f32 0.0, %v3268
        %v3270 = vpop.f32.mrb[0].mxu0
        %3271 = vmatprep.mubr.bf16.mxu0 0
        %3272 = vmatmul.mubr.bf16.gmra.mrb[0].mxu0 %v3061
        %v3273 = vpop.f32.mrb[0].mxu0
        %v3274 = vadd.f32 0.0, %v3273
        %v3275 = vpop.f32.mrb[0].mxu0
        %v3276 = vpop.f32.mrb[0].mxu0
        %v3277 = vadd.f32 0.0, %v3276
        %v3278 = vpop.f32.mrb[0].mxu0
        %3279 = vmatprep.mubr.bf16.mxu0 0
        %3280 = vmatmul.mubr.bf16.gmra.mrb[0].mxu0 %v3062
        %v3281 = vpop.f32.mrb[0].mxu0
        %v3282 = vadd.f32 0.0, %v3281
        %v3283 = vpop.f32.mrb[0].mxu0
        %v3284 = vpop.f32.mrb[0].mxu0
        %v3285 = vadd.f32 0.0, %v3284
        %v3286 = vpop.f32.mrb[0].mxu0
        %3287 = vdwg.mxu0
        %v3288 = vld [vmem:[%s6] sm:$0x1]
        %v3289 = vlaneseq
        %v3290 = vshrl.u32 %v3289, 7
        %v3291 = vsub.s32 0, %v3290
        %v3292 = vrot.slane %v3288, %v3291
        %v3293 = vmul.f32 %v3162, %v3292
        %v3294 = vmul.f32 %v3165, %v3292
        %v3295 = vmul.f32 %v3170, %v3292
        %v3296 = vmul.f32 %v3173, %v3292
        %v3297 = vmul.f32 %v3178, %v3292
        %v3298 = vmul.f32 %v3181, %v3292
        %v3299 = vmul.f32 %v3186, %v3292
        %v3300 = vmul.f32 %v3189, %v3292
        %v3301 = vmul.f32 %v3194, %v3292
        %v3302 = vmul.f32 %v3197, %v3292
        %v3303 = vmul.f32 %v3202, %v3292
        %v3304 = vmul.f32 %v3205, %v3292
        %v3305 = vmul.f32 %v3210, %v3292
        %v3306 = vmul.f32 %v3213, %v3292
        %v3307 = vmul.f32 %v3218, %v3292
        %v3308 = vmul.f32 %v3221, %v3292
        %v3309 = vmul.f32 %v3226, %v3292
        %v3310 = vmul.f32 %v3229, %v3292
        %v3311 = vmul.f32 %v3234, %v3292
        %v3312 = vmul.f32 %v3237, %v3292
        %v3313 = vmul.f32 %v3242, %v3292
        %v3314 = vmul.f32 %v3245, %v3292
        %v3315 = vmul.f32 %v3250, %v3292
        %v3316 = vmul.f32 %v3253, %v3292
        %v3317 = vmul.f32 %v3258, %v3292
        %v3318 = vmul.f32 %v3261, %v3292
        %v3319 = vmul.f32 %v3266, %v3292
        %v3320 = vmul.f32 %v3269, %v3292
        %v3321 = vmul.f32 %v3274, %v3292
        %v3322 = vmul.f32 %v3277, %v3292
        %v3323 = vmul.f32 %v3282, %v3292
        %v3324 = vmul.f32 %v3285, %v3292
        %v3325 = vld [vmem:[%s6 + $0x1] sm:$0x1]
        %v3326 = vlaneseq
        %v3327 = vshrl.u32 %v3326, 7
        %v3328 = vsub.s32 0, %v3327
        %v3329 = vrot.slane %v3325, %v3328
        %v3330 = vadd.f32 %v3293, %v3329
        %v3331 = vadd.f32 %v3294, %v3329
        %v3332 = vadd.f32 %v3295, %v3329
        %v3333 = vadd.f32 %v3296, %v3329
        %v3334 = vadd.f32 %v3297, %v3329
        %v3335 = vadd.f32 %v3298, %v3329
        %v3336 = vadd.f32 %v3299, %v3329
        %v3337 = vadd.f32 %v3300, %v3329
        %v3338 = vadd.f32 %v3301, %v3329
        %v3339 = vadd.f32 %v3302, %v3329
        %v3340 = vadd.f32 %v3303, %v3329
        %v3341 = vadd.f32 %v3304, %v3329
        %v3342 = vadd.f32 %v3305, %v3329
        %v3343 = vadd.f32 %v3306, %v3329
        %v3344 = vadd.f32 %v3307, %v3329
        %v3345 = vadd.f32 %v3308, %v3329
        %v3346 = vadd.f32 %v3309, %v3329
        %v3347 = vadd.f32 %v3310, %v3329
        %v3348 = vadd.f32 %v3311, %v3329
        %v3349 = vadd.f32 %v3312, %v3329
        %v3350 = vadd.f32 %v3313, %v3329
        %v3351 = vadd.f32 %v3314, %v3329
        %v3352 = vadd.f32 %v3315, %v3329
        %v3353 = vadd.f32 %v3316, %v3329
        %v3354 = vadd.f32 %v3317, %v3329
        %v3355 = vadd.f32 %v3318, %v3329
        %v3356 = vadd.f32 %v3319, %v3329
        %v3357 = vadd.f32 %v3320, %v3329
        %v3358 = vadd.f32 %v3321, %v3329
        %v3359 = vadd.f32 %v3322, %v3329
        %v3360 = vadd.f32 %v3323, %v3329
        %v3361 = vadd.f32 %v3324, %v3329
        %v3362 = vld [vmem:[%s298] sm:$0xf]
        %v3363 = vld [vmem:[%s298 + $0x4] sm:$0xf]
        %v3364 = vld [vmem:[%s298 + $0x8] sm:$0xf]
        %v3365 = vld [vmem:[%s298 + $0xc] sm:$0xf]
        %v3366 = vld [vmem:[%s298 + $0x10] sm:$0xf]
        %v3367 = vld [vmem:[%s298 + $0x14] sm:$0xf]
        %v3368 = vld [vmem:[%s298 + $0x18] sm:$0xf]
        %v3369 = vld [vmem:[%s298 + $0x1c] sm:$0xf]
        %v3370 = vld [vmem:[%s298 + $0x20] sm:$0xf]
        %v3371 = vld [vmem:[%s298 + $0x24] sm:$0xf]
        %v3372 = vld [vmem:[%s298 + $0x28] sm:$0xf]
        %v3373 = vld [vmem:[%s298 + $0x2c] sm:$0xf]
        %v3374 = vld [vmem:[%s298 + $0x30] sm:$0xf]
        %v3375 = vld [vmem:[%s298 + $0x34] sm:$0xf]
        %v3376 = vld [vmem:[%s298 + $0x38] sm:$0xf]
        %v3377 = vld [vmem:[%s298 + $0x3c] sm:$0xf]
        %v3378 = vld [vmem:[%s298 + $0x40] sm:$0xf]
        %v3379 = vld [vmem:[%s298 + $0x44] sm:$0xf]
        %v3380 = vld [vmem:[%s298 + $0x48] sm:$0xf]
        %v3381 = vld [vmem:[%s298 + $0x4c] sm:$0xf]
        %v3382 = vld [vmem:[%s298 + $0x50] sm:$0xf]
        %v3383 = vld [vmem:[%s298 + $0x54] sm:$0xf]
        %v3384 = vld [vmem:[%s298 + $0x58] sm:$0xf]
        %v3385 = vld [vmem:[%s298 + $0x5c] sm:$0xf]
        %v3386 = vld [vmem:[%s298 + $0x60] sm:$0xf]
        %v3387 = vld [vmem:[%s298 + $0x64] sm:$0xf]
        %v3388 = vld [vmem:[%s298 + $0x68] sm:$0xf]
        %v3389 = vld [vmem:[%s298 + $0x6c] sm:$0xf]
        %v3390 = vld [vmem:[%s298 + $0x70] sm:$0xf]
        %v3391 = vld [vmem:[%s298 + $0x74] sm:$0xf]
        %v3392 = vld [vmem:[%s298 + $0x78] sm:$0xf]
        %v3393 = vld [vmem:[%s298 + $0x7c] sm:$0xf]
        %v3394 = vunpack.c.l.bf16 %v3362
        %v3395 = vunpack.c.l.bf16 %v3363
        %v3396 = vunpack.c.l.bf16 %v3364
        %v3397 = vunpack.c.l.bf16 %v3365
        %v3398 = vunpack.c.l.bf16 %v3366
        %v3399 = vunpack.c.l.bf16 %v3367
        %v3400 = vunpack.c.l.bf16 %v3368
        %v3401 = vunpack.c.l.bf16 %v3369
        %v3402 = vunpack.c.l.bf16 %v3370
        %v3403 = vunpack.c.l.bf16 %v3371
        %v3404 = vunpack.c.l.bf16 %v3372
        %v3405 = vunpack.c.l.bf16 %v3373
        %v3406 = vunpack.c.l.bf16 %v3374
        %v3407 = vunpack.c.l.bf16 %v3375
        %v3408 = vunpack.c.l.bf16 %v3376
        %v3409 = vunpack.c.l.bf16 %v3377
        %v3410 = vunpack.c.l.bf16 %v3378
        %v3411 = vunpack.c.l.bf16 %v3379
        %v3412 = vunpack.c.l.bf16 %v3380
        %v3413 = vunpack.c.l.bf16 %v3381
        %v3414 = vunpack.c.l.bf16 %v3382
        %v3415 = vunpack.c.l.bf16 %v3383
        %v3416 = vunpack.c.l.bf16 %v3384
        %v3417 = vunpack.c.l.bf16 %v3385
        %v3418 = vunpack.c.l.bf16 %v3386
        %v3419 = vunpack.c.l.bf16 %v3387
        %v3420 = vunpack.c.l.bf16 %v3388
        %v3421 = vunpack.c.l.bf16 %v3389
        %v3422 = vunpack.c.l.bf16 %v3390
        %v3423 = vunpack.c.l.bf16 %v3391
        %v3424 = vunpack.c.l.bf16 %v3392
        %v3425 = vunpack.c.l.bf16 %v3393
        %v3426 = vadd.f32 %v3330, %v3394
        %v3427 = vadd.f32 %v3331, %v3395
        %v3428 = vadd.f32 %v3332, %v3396
        %v3429 = vadd.f32 %v3333, %v3397
        %v3430 = vadd.f32 %v3334, %v3398
        %v3431 = vadd.f32 %v3335, %v3399
        %v3432 = vadd.f32 %v3336, %v3400
        %v3433 = vadd.f32 %v3337, %v3401
        %v3434 = vadd.f32 %v3338, %v3402
        %v3435 = vadd.f32 %v3339, %v3403
        %v3436 = vadd.f32 %v3340, %v3404
        %v3437 = vadd.f32 %v3341, %v3405
        %v3438 = vadd.f32 %v3342, %v3406
        %v3439 = vadd.f32 %v3343, %v3407
        %v3440 = vadd.f32 %v3344, %v3408
        %v3441 = vadd.f32 %v3345, %v3409
        %v3442 = vadd.f32 %v3346, %v3410
        %v3443 = vadd.f32 %v3347, %v3411
        %v3444 = vadd.f32 %v3348, %v3412
        %v3445 = vadd.f32 %v3349, %v3413
        %v3446 = vadd.f32 %v3350, %v3414
        %v3447 = vadd.f32 %v3351, %v3415
        %v3448 = vadd.f32 %v3352, %v3416
        %v3449 = vadd.f32 %v3353, %v3417
        %v3450 = vadd.f32 %v3354, %v3418
        %v3451 = vadd.f32 %v3355, %v3419
        %v3452 = vadd.f32 %v3356, %v3420
        %v3453 = vadd.f32 %v3357, %v3421
        %v3454 = vadd.f32 %v3358, %v3422
        %v3455 = vadd.f32 %v3359, %v3423
        %v3456 = vadd.f32 %v3360, %v3424
        %v3457 = vadd.f32 %v3361, %v3425
        %v3458 = vmax.f32 %v3426, 0.0
        %v3459 = vmax.f32 %v3427, 0.0
        %v3460 = vmax.f32 %v3428, 0.0
        %v3461 = vmax.f32 %v3429, 0.0
        %v3462 = vmax.f32 %v3430, 0.0
        %v3463 = vmax.f32 %v3431, 0.0
        %v3464 = vmax.f32 %v3432, 0.0
        %v3465 = vmax.f32 %v3433, 0.0
        %v3466 = vmax.f32 %v3434, 0.0
        %v3467 = vmax.f32 %v3435, 0.0
        %v3468 = vmax.f32 %v3436, 0.0
        %v3469 = vmax.f32 %v3437, 0.0
        %v3470 = vmax.f32 %v3438, 0.0
        %v3471 = vmax.f32 %v3439, 0.0
        %v3472 = vmax.f32 %v3440, 0.0
        %v3473 = vmax.f32 %v3441, 0.0
        %v3474 = vmax.f32 %v3442, 0.0
        %v3475 = vmax.f32 %v3443, 0.0
        %v3476 = vmax.f32 %v3444, 0.0
        %v3477 = vmax.f32 %v3445, 0.0
        %v3478 = vmax.f32 %v3446, 0.0
        %v3479 = vmax.f32 %v3447, 0.0
        %v3480 = vmax.f32 %v3448, 0.0
        %v3481 = vmax.f32 %v3449, 0.0
        %v3482 = vmax.f32 %v3450, 0.0
        %v3483 = vmax.f32 %v3451, 0.0
        %v3484 = vmax.f32 %v3452, 0.0
        %v3485 = vmax.f32 %v3453, 0.0
        %v3486 = vmax.f32 %v3454, 0.0
        %v3487 = vmax.f32 %v3455, 0.0
        %v3488 = vmax.f32 %v3456, 0.0
        %v3489 = vmax.f32 %v3457, 0.0
        %v3490 = vpack.c.bf16 %v3459, %v3458
        %v3491 = vpack.c.bf16 %v3461, %v3460
        %v3492 = vpack.c.bf16 %v3463, %v3462
        %v3493 = vpack.c.bf16 %v3465, %v3464
        %v3494 = vpack.c.bf16 %v3467, %v3466
        %v3495 = vpack.c.bf16 %v3469, %v3468
        %v3496 = vpack.c.bf16 %v3471, %v3470
        %v3497 = vpack.c.bf16 %v3473, %v3472
        %v3498 = vpack.c.bf16 %v3475, %v3474
        %v3499 = vpack.c.bf16 %v3477, %v3476
        %v3500 = vpack.c.bf16 %v3479, %v3478
        %v3501 = vpack.c.bf16 %v3481, %v3480
        %v3502 = vpack.c.bf16 %v3483, %v3482
        %v3503 = vpack.c.bf16 %v3485, %v3484
        %v3504 = vpack.c.bf16 %v3487, %v3486
        %v3505 = vpack.c.bf16 %v3489, %v3488
        %v3522 = vunpack.c.l.b16 %v3490
        %v3523 = vunpack.c.h.b16 %v3490
        %v3524 = vunpack.c.l.b16 %v3491
        %v3525 = vunpack.c.h.b16 %v3491
        %v3526 = vunpack.c.l.b16 %v3492
        %v3527 = vunpack.c.h.b16 %v3492
        %v3528 = vunpack.c.l.b16 %v3493
        %v3529 = vunpack.c.h.b16 %v3493
        %v3530 = vunpack.c.l.b16 %v3494
        %v3531 = vunpack.c.h.b16 %v3494
        %v3532 = vunpack.c.l.b16 %v3495
        %v3533 = vunpack.c.h.b16 %v3495
        %v3534 = vunpack.c.l.b16 %v3496
        %v3535 = vunpack.c.h.b16 %v3496
        %v3536 = vunpack.c.l.b16 %v3497
        %v3537 = vunpack.c.h.b16 %v3497
        %v3538 = vunpack.c.l.b16 %v3498
        %v3539 = vunpack.c.h.b16 %v3498
        %v3540 = vunpack.c.l.b16 %v3499
        %v3541 = vunpack.c.h.b16 %v3499
        %v3542 = vunpack.c.l.b16 %v3500
        %v3543 = vunpack.c.h.b16 %v3500
        %v3544 = vunpack.c.l.b16 %v3501
        %v3545 = vunpack.c.h.b16 %v3501
        %v3546 = vunpack.c.l.b16 %v3502
        %v3547 = vunpack.c.h.b16 %v3502
        %v3548 = vunpack.c.l.b16 %v3503
        %v3549 = vunpack.c.h.b16 %v3503
        %v3550 = vunpack.c.l.b16 %v3504
        %v3551 = vunpack.c.h.b16 %v3504
        %v3552 = vunpack.c.l.b16 %v3505
        %v3553 = vunpack.c.h.b16 %v3505
        %v3554 = vpack.c.b16 %v3522, %v3522
        %v3555 = vpack.c.b16 %v3523, %v3523
        %v3556 = vpack.c.b16 %v3524, %v3524
        %v3557 = vpack.c.b16 %v3525, %v3525
        %v3558 = vpack.c.b16 %v3526, %v3526
        %v3559 = vpack.c.b16 %v3527, %v3527
        %v3560 = vpack.c.b16 %v3528, %v3528
        %v3561 = vpack.c.b16 %v3529, %v3529
        %v3562 = vpack.c.b16 %v3530, %v3530
        %v3563 = vpack.c.b16 %v3531, %v3531
        %v3564 = vpack.c.b16 %v3532, %v3532
        %v3565 = vpack.c.b16 %v3533, %v3533
        %v3566 = vpack.c.b16 %v3534, %v3534
        %v3567 = vpack.c.b16 %v3535, %v3535
        %v3568 = vpack.c.b16 %v3536, %v3536
        %v3569 = vpack.c.b16 %v3537, %v3537
        %v3570 = vpack.c.b16 %v3538, %v3538
        %v3571 = vpack.c.b16 %v3539, %v3539
        %v3572 = vpack.c.b16 %v3540, %v3540
        %v3573 = vpack.c.b16 %v3541, %v3541
        %v3574 = vpack.c.b16 %v3542, %v3542
        %v3575 = vpack.c.b16 %v3543, %v3543
        %v3576 = vpack.c.b16 %v3544, %v3544
        %v3577 = vpack.c.b16 %v3545, %v3545
        %v3578 = vpack.c.b16 %v3546, %v3546
        %v3579 = vpack.c.b16 %v3547, %v3547
        %v3580 = vpack.c.b16 %v3548, %v3548
        %v3581 = vpack.c.b16 %v3549, %v3549
        %v3582 = vpack.c.b16 %v3550, %v3550
        %v3583 = vpack.c.b16 %v3551, %v3551
        %v3584 = vpack.c.b16 %v3552, %v3552
        %v3585 = vpack.c.b16 %v3553, %v3553
        %3618 = vst [vmem:[%s340] sm:$0xf] %v3554
        %3619 = vst [vmem:[%s340 + $0x4] sm:$0xf] %v3555
        %3620 = vst [vmem:[%s340 + $0x8] sm:$0xf] %v3556
        %3621 = vst [vmem:[%s340 + $0xc] sm:$0xf] %v3557
        %3622 = vst [vmem:[%s340 + $0x10] sm:$0xf] %v3558
        %3623 = vst [vmem:[%s340 + $0x14] sm:$0xf] %v3559
        %3624 = vst [vmem:[%s340 + $0x18] sm:$0xf] %v3560
        %3625 = vst [vmem:[%s340 + $0x1c] sm:$0xf] %v3561
        %3626 = vst [vmem:[%s340 + $0x20] sm:$0xf] %v3562
        %3627 = vst [vmem:[%s340 + $0x24] sm:$0xf] %v3563
        %3628 = vst [vmem:[%s340 + $0x28] sm:$0xf] %v3564
        %3629 = vst [vmem:[%s340 + $0x2c] sm:$0xf] %v3565
        %3630 = vst [vmem:[%s340 + $0x30] sm:$0xf] %v3566
        %3631 = vst [vmem:[%s340 + $0x34] sm:$0xf] %v3567
        %3632 = vst [vmem:[%s340 + $0x38] sm:$0xf] %v3568
        %3633 = vst [vmem:[%s340 + $0x3c] sm:$0xf] %v3569
        %3634 = vst [vmem:[%s340 + $0x40] sm:$0xf] %v3570
        %3635 = vst [vmem:[%s340 + $0x44] sm:$0xf] %v3571
        %3636 = vst [vmem:[%s340 + $0x48] sm:$0xf] %v3572
        %3637 = vst [vmem:[%s340 + $0x4c] sm:$0xf] %v3573
        %3638 = vst [vmem:[%s340 + $0x50] sm:$0xf] %v3574
        %3639 = vst [vmem:[%s340 + $0x54] sm:$0xf] %v3575
        %3640 = vst [vmem:[%s340 + $0x58] sm:$0xf] %v3576
        %3641 = vst [vmem:[%s340 + $0x5c] sm:$0xf] %v3577
        %3642 = vst [vmem:[%s340 + $0x60] sm:$0xf] %v3578
        %3643 = vst [vmem:[%s340 + $0x64] sm:$0xf] %v3579
        %3644 = vst [vmem:[%s340 + $0x68] sm:$0xf] %v3580
        %3645 = vst [vmem:[%s340 + $0x6c] sm:$0xf] %v3581
        %3646 = vst [vmem:[%s340 + $0x70] sm:$0xf] %v3582
        %3647 = vst [vmem:[%s340 + $0x74] sm:$0xf] %v3583
        %3648 = vst [vmem:[%s340 + $0x78] sm:$0xf] %v3584
        %3649 = vst [vmem:[%s340 + $0x7c] sm:$0xf] %v3585
        %s3650 = sand.u32 %s186, 1
        %s3651 = scalar_lea.sflag [#allocation5], %s3650
        %s3652 = sand.u32 %s186, 1
        %s3653 = smul.addr %s3652, 128
        %s3654 = scalar_lea.vmem [#allocation11], %s3653
        // Predicated region
        $region65: #{tpu_custom_call.1} parent=47 // pred_check
          %p3655 = pneg %p196
        $region66: #{tpu_custom_call.1} parent=47 // pred_check_branch
          %3657 = sbr.rel (%p3655) target = $region68
        $region67: #{tpu_custom_call.1} parent=47 // pred_region
          %s3659 = ssub.s32 2048, 2048
          %3660 = vsyncadd %s3651, %s3659
          %s3661 = smul.addr %s26, 32
          %s3662 = smul.addr %s3661, 64
          %s3663 = scalar_lea.hbm %s7, %s3662
          %s3664 = sshll.u32 %s3654, 4
          %s3665 = int_to_ptr.vmem [resolvable:$true] %s3664
          %3670 = dma.vmem_to_hbm [thread:$0]  %s3665, 2048, %s3663, %s3651, 64, 64, 4
        $region68: #{tpu_custom_call.1} parent=47 // pred_fallthru
          _
      $region48: #{tpu_custom_call.1} parent=5 // pred_fallthru
        _
      %p3671 = scmp.le.s32.totalorder 2, %s21
      // Predicated region
      $region69: #{tpu_custom_call.1} parent=5 // pred_check
        %p3672 = pneg %p3671
      $region70: #{tpu_custom_call.1} parent=5 // pred_check_branch
        %3674 = sbr.rel (%p3672) target = $region72
      $region71: #{tpu_custom_call.1} parent=5 // pred_region
        %s3675 = ssub.s32 %s21, 2
        // Predicated region
        $region73: #{tpu_custom_call.1} parent=71 // pred_check
          %p3676 = pneg %p202
        $region74: #{tpu_custom_call.1} parent=71 // pred_check_branch
          %3678 = sbr.rel (%p3676) target = $region76
        $region75: #{tpu_custom_call.1} parent=71 // pred_region
          %s3679 = sand.u32 %s187, 1
          %s3680 = scalar_lea.sflag [#allocation5], %s3679
          %s3681 = sand.u32 %s187, 1
          %s3682 = smul.addr %s3681, 128
          %s3683 = scalar_lea.vmem [#allocation11], %s3682
          %3684 = dma.done %s3680, 2048
        $region76: #{tpu_custom_call.1} parent=71 // pred_fallthru
          _
      $region72: #{tpu_custom_call.1} parent=5 // pred_fallthru
        _
    $region6: #{tpu_custom_call.1} parent=1 // loop_footer
      %s25 = sadd.s32 1, %s21
    $region7: #{tpu_custom_call.1} parent=1 // loop_footer_branch
      %20 = sbr.rel target = $region3
    $region8: #{tpu_custom_call.1} parent=1 // loop_exit
      _
    %3685 = vsyncpa [#allocation4], 1
    %s3686 = scalar_lea.sflag [#allocation4], 1
    %3687 = vsyncpa %s3686, 1
    %3688 = vsyncpa [#allocation7], 1
    %3689 = vsyncpa [#allocation10], 1
    %3690 = vsyncpa [#allocation5], 1
    %s3691 = scalar_lea.sflag [#allocation5], 1
    %3692 = vsyncpa %s3691, 1

</llo_original>
